<compile_context>
chip_gen: v5e
topology: v5e:2x2
jax: 0.10.0
libtpu: 0.0.40
codegen_flags: <defaults>
</compile_context>

<pallas_src>
import functools
import math

import jax
import jax.numpy as jnp
from jax.experimental import pallas as pl
from jax.experimental.pallas import tpu as pltpu


def _u_embedding_kernel(
    x_ref,                                            # [input_size, TN]
    wu1_ref, bu1_ref, wu2_ref, bu2_ref, wu3_ref, bu3_ref,
    wm1a_ref, wm1b_ref, bm1_ref, wm2_ref, bm2_ref, wm3_ref, bm3_ref,
    out_ref,                                          # [output_size + 2, TN]
    *, u_size, output_size,
):
    xt = x_ref[...]                                   # [input_size, TN]

    # ---- model_u: Linear -> ReLU -> Linear -> ReLU -> Linear (transposed) ----
    h = jnp.maximum(
        jnp.dot(wu1_ref[...], xt, preferred_element_type=jnp.float32)
        + bu1_ref[...], 0.0)                          # [h2, TN]
    h = jnp.maximum(
        jnp.dot(wu2_ref[...], h, preferred_element_type=jnp.float32)
        + bu2_ref[...], 0.0)                          # [h2, TN]
    o = (jnp.dot(wu3_ref[...], h, preferred_element_type=jnp.float32)
         + bu3_ref[...])                              # [u_size + 1, TN]

    inputs = jnp.maximum(o[:u_size, :], 0.0)          # [u_size, TN] (sublane slice)
    u_logits = o[u_size:u_size + 1, :]                # [1, TN]
    # forward of round(sigmoid(u_logits / temp)) for temp > 0 (see header)
    u = (u_logits > 0.0).astype(jnp.float32)          # [1, TN]

    # ---- model: Linear(cat([x, inputs])) -> ReLU -> Linear -> ReLU -> Linear ----
    # cat([x, inputs]) handled by the weight split wm1a / wm1b.
    g = jnp.maximum(
        jnp.dot(wm1a_ref[...], xt, preferred_element_type=jnp.float32)
        + jnp.dot(wm1b_ref[...], inputs, preferred_element_type=jnp.float32)
        + bm1_ref[...], 0.0)                          # [hidden, TN]
    g = jnp.maximum(
        jnp.dot(wm2_ref[...], g, preferred_element_type=jnp.float32)
        + bm2_ref[...], 0.0)                          # [hidden, TN]
    y = (jnp.dot(wm3_ref[...], g, preferred_element_type=jnp.float32)
         + bm3_ref[...])                              # [output_size, TN]

    # single lane-dense output slab; static sublane slices.
    out_ref[:output_size, :] = y * u
    out_ref[output_size:output_size + 1, :] = u
    out_ref[output_size + 1:output_size + 2, :] = u_logits


def u_embedding_forward(x, params, *, temp=1.0, tile_n=2048):
    """x: [N, input_size] float32. Returns (x_out [N, out], u [N, 1], u_logits [N, 1])."""
    assert temp > 0.0, "forward threshold assumes temp > 0"
    n, input_size = x.shape
    (wu1, bu1, wu2, bu2, wu3, bu3,
     wm1a, wm1b, bm1, wm2, bm2, wm3, bm3) = params
    u_size = wu3.shape[0] - 1
    output_size = wm3.shape[0]
    n_out_rows = output_size + 2

    # lane dimension must be a multiple of 128
    tile_n = max(128, ((int(tile_n) + 127) // 128) * 128)
    n_pad = ((n + tile_n - 1) // tile_n) * tile_n

    # particle dim on lanes; pad lanes to a multiple of tile_n (rows dropped later)
    x_t = x.T
    if n_pad != n:
        x_t = jnp.pad(x_t, ((0, 0), (0, n_pad - n)))

    def full_spec(arr):
        # whole (small) parameter array; constant index_map keeps it VMEM-resident.
        return pl.BlockSpec(arr.shape, lambda i: (0, 0))

    grid = (n_pad // tile_n,)
    kernel = functools.partial(
        _u_embedding_kernel, u_size=u_size, output_size=output_size)

    flops = 2 * n_pad * int(
        wu1.size + wu2.size + wu3.size + wm1a.size + wm1b.size + wm2.size + wm3.size)
    bytes_accessed = 4 * (n_pad * input_size + n_pad * n_out_rows
                          + sum(int(p.size) for p in params))
    cost = pl.CostEstimate(flops=flops, transcendentals=0,
                           bytes_accessed=bytes_accessed)

    out = pl.pallas_call(
        kernel,
        out_shape=jax.ShapeDtypeStruct((n_out_rows, n_pad), jnp.float32),
        grid_spec=pltpu.PrefetchScalarGridSpec(
            num_scalar_prefetch=0,
            grid=grid,
            in_specs=[pl.BlockSpec((input_size, tile_n), lambda i: (0, i))]
                     + [full_spec(p) for p in params],
            out_specs=pl.BlockSpec((n_out_rows, tile_n), lambda i: (0, i)),
        ),
        compiler_params=pltpu.CompilerParams(
            dimension_semantics=("parallel",)),
        cost_estimate=cost,
    )(x_t, *params)

    out_x = out[:output_size, :n].T
    u = out[output_size:output_size + 1, :n].T
    u_logits = out[output_size + 1:output_size + 2, :n].T
    return out_x, u, u_logits


def init_params(key, input_size, u_size, hidden_size, output_size):
    """Xavier-normal weights (PyTorch [out, in] layout), zero biases as [out, 1]."""
    def xavier(k, fan_out, fan_in):
        std = math.sqrt(2.0 / (fan_in + fan_out))
        return std * jax.random.normal(k, (fan_out, fan_in), dtype=jnp.float32)

    h2 = hidden_size // 2
    ks = jax.random.split(key, 6)
    # model_u
    wu1 = xavier(ks[0], h2, input_size); bu1 = jnp.zeros((h2, 1), jnp.float32)
    wu2 = xavier(ks[1], h2, h2);         bu2 = jnp.zeros((h2, 1), jnp.float32)
    wu3 = xavier(ks[2], u_size + 1, h2); bu3 = jnp.zeros((u_size + 1, 1), jnp.float32)
    # model (first layer weight split into x-part and inputs-part of the concat)
    wm1 = xavier(ks[3], hidden_size, input_size + u_size)
    wm1a, wm1b = wm1[:, :input_size], wm1[:, input_size:]
    bm1 = jnp.zeros((hidden_size, 1), jnp.float32)
    wm2 = xavier(ks[4], hidden_size, hidden_size)
    bm2 = jnp.zeros((hidden_size, 1), jnp.float32)
    wm3 = xavier(ks[5], output_size, hidden_size)
    bm3 = jnp.zeros((output_size, 1), jnp.float32)
    return (wu1, bu1, wu2, bu2, wu3, bu3, wm1a, wm1b, bm1, wm2, bm2, wm3, bm3)


def reference_forward(x, params, *, temp=1.0):
    (wu1, bu1, wu2, bu2, wu3, bu3,
     wm1a, wm1b, bm1, wm2, bm2, wm3, bm3) = params
    u_size = wu3.shape[0] - 1
    h = jax.nn.relu(x @ wu1.T + bu1.T)
    h = jax.nn.relu(h @ wu2.T + bu2.T)
    o = h @ wu3.T + bu3.T
    inputs = jax.nn.relu(o[:, :u_size])
    u_logits = o[:, u_size:]
    u = jnp.round(jax.nn.sigmoid(u_logits / temp))
    g = jax.nn.relu(x @ wm1a.T + inputs @ wm1b.T + bm1.T)
    g = jax.nn.relu(g @ wm2.T + bm2.T)
    y = (g @ wm3.T + bm3.T) * u
    return y, u, u_logits


if __name__ == "__main__":
    # x is [n_particles, input_size]; tile_n=2048 -> grid of 2 parallel steps
    # (both v7x TensorCores; minimal per-step overhead on v5e/v6e).
    N, INPUT_SIZE, U_SIZE, HIDDEN, OUTPUT_SIZE = 4096, 16, 8, 32, 16

    key = jax.random.PRNGKey(0)
    kx, kp = jax.random.split(key)
    x = jax.random.normal(kx, (N, INPUT_SIZE), dtype=jnp.float32)
    params = init_params(kp, INPUT_SIZE, U_SIZE, HIDDEN, OUTPUT_SIZE)

    out_x, u, u_logits = u_embedding_forward(x, params, temp=1.0, tile_n=2048)
    jax.block_until_ready((out_x, u, u_logits))

    # sanity check against a pure-JAX reference
    ref_x, ref_u, ref_ul = reference_forward(x, params, temp=1.0)
    assert jnp.allclose(out_x, ref_x, atol=1e-5, rtol=1e-5)
    assert jnp.allclose(u, ref_u, atol=1e-6)
    assert jnp.allclose(u_logits, ref_ul, atol=1e-5, rtol=1e-5)

    print("KERNEL_OK")
</pallas_src>

<mosaic_0001>
module attributes {stable_mosaic.version = 11 : i64} {
  func.func @_u_embedding_kernel(%arg0: i32, %arg1: memref<16x2048xf32, #tpu.memory_space<vmem>>, %arg2: memref<16x16xf32, #tpu.memory_space<vmem>>, %arg3: memref<16x1xf32, #tpu.memory_space<vmem>>, %arg4: memref<16x16xf32, #tpu.memory_space<vmem>>, %arg5: memref<16x1xf32, #tpu.memory_space<vmem>>, %arg6: memref<9x16xf32, #tpu.memory_space<vmem>>, %arg7: memref<9x1xf32, #tpu.memory_space<vmem>>, %arg8: memref<32x16xf32, #tpu.memory_space<vmem>>, %arg9: memref<32x8xf32, #tpu.memory_space<vmem>>, %arg10: memref<32x1xf32, #tpu.memory_space<vmem>>, %arg11: memref<32x32xf32, #tpu.memory_space<vmem>>, %arg12: memref<32x1xf32, #tpu.memory_space<vmem>>, %arg13: memref<16x32xf32, #tpu.memory_space<vmem>>, %arg14: memref<16x1xf32, #tpu.memory_space<vmem>>, %arg15: memref<18x2048xf32, #tpu.memory_space<vmem>>) attributes {dimension_semantics = [#tpu.dimension_semantics<parallel>], iteration_bounds = array<i64: 2>, scalar_prefetch = 0 : i64, scratch_operands = 0 : i64, tpu.core_type = #tpu.core_type<tc>, window_params = [{transform_indices = @transform_0, window_bounds = array<i64: 16, 2048>}, {pipeline_mode = #tpu.pipeline_mode<synchronous>, transform_indices = @transform_1, window_bounds = array<i64: 16, 16>}, {pipeline_mode = #tpu.pipeline_mode<synchronous>, transform_indices = @transform_2, window_bounds = array<i64: 16, 1>}, {pipeline_mode = #tpu.pipeline_mode<synchronous>, transform_indices = @transform_3, window_bounds = array<i64: 16, 16>}, {pipeline_mode = #tpu.pipeline_mode<synchronous>, transform_indices = @transform_4, window_bounds = array<i64: 16, 1>}, {pipeline_mode = #tpu.pipeline_mode<synchronous>, transform_indices = @transform_5, window_bounds = array<i64: 9, 16>}, {pipeline_mode = #tpu.pipeline_mode<synchronous>, transform_indices = @transform_6, window_bounds = array<i64: 9, 1>}, {pipeline_mode = #tpu.pipeline_mode<synchronous>, transform_indices = @transform_7, window_bounds = array<i64: 32, 16>}, {pipeline_mode = #tpu.pipeline_mode<synchronous>, transform_indices = @transform_8, window_bounds = array<i64: 32, 8>}, {pipeline_mode = #tpu.pipeline_mode<synchronous>, transform_indices = @transform_9, window_bounds = array<i64: 32, 1>}, {pipeline_mode = #tpu.pipeline_mode<synchronous>, transform_indices = @transform_10, window_bounds = array<i64: 32, 32>}, {pipeline_mode = #tpu.pipeline_mode<synchronous>, transform_indices = @transform_11, window_bounds = array<i64: 32, 1>}, {pipeline_mode = #tpu.pipeline_mode<synchronous>, transform_indices = @transform_12, window_bounds = array<i64: 16, 32>}, {pipeline_mode = #tpu.pipeline_mode<synchronous>, transform_indices = @transform_13, window_bounds = array<i64: 16, 1>}, {transform_indices = @transform_14, window_bounds = array<i64: 18, 2048>}]} {
    %c0 = arith.constant 0 : index
    %c0_0 = arith.constant 0 : index
    %0 = vector.load %arg1[%c0, %c0_0] : memref<16x2048xf32, #tpu.memory_space<vmem>>, vector<16x2048xf32>
    %c0_1 = arith.constant 0 : index
    %c0_2 = arith.constant 0 : index
    %1 = vector.load %arg2[%c0_1, %c0_2] : memref<16x16xf32, #tpu.memory_space<vmem>>, vector<16x16xf32>
    %cst = arith.constant dense<0.000000e+00> : vector<16x2048xf32>
    %2 = tpu.matmul %1, %0, %cst {dimension_numbers = #tpu.dot_dimension_numbers<[1], [0], [0], [1], [0, 0, 1, 1], [], []>} : vector<16x16xf32>, vector<16x2048xf32>, vector<16x2048xf32> -> vector<16x2048xf32>
    %c0_3 = arith.constant 0 : index
    %c0_4 = arith.constant 0 : index
    %3 = vector.load %arg3[%c0_3, %c0_4] : memref<16x1xf32, #tpu.memory_space<vmem>>, vector<16x1xf32>
    %4 = vector.broadcast %3 : vector<16x1xf32> to vector<16x2048xf32>
    %5 = arith.addf %2, %4 : vector<16x2048xf32>
    %cst_5 = arith.constant 0.000000e+00 : f32
    %6 = vector.broadcast %cst_5 : f32 to vector<16x2048xf32>
    %7 = arith.maximumf %5, %6 : vector<16x2048xf32>
    %c0_6 = arith.constant 0 : index
    %c0_7 = arith.constant 0 : index
    %8 = vector.load %arg4[%c0_6, %c0_7] : memref<16x16xf32, #tpu.memory_space<vmem>>, vector<16x16xf32>
    %cst_8 = arith.constant dense<0.000000e+00> : vector<16x2048xf32>
    %9 = tpu.matmul %8, %7, %cst_8 {dimension_numbers = #tpu.dot_dimension_numbers<[1], [0], [0], [1], [0, 0, 1, 1], [], []>} : vector<16x16xf32>, vector<16x2048xf32>, vector<16x2048xf32> -> vector<16x2048xf32>
    %c0_9 = arith.constant 0 : index
    %c0_10 = arith.constant 0 : index
    %10 = vector.load %arg5[%c0_9, %c0_10] : memref<16x1xf32, #tpu.memory_space<vmem>>, vector<16x1xf32>
    %11 = vector.broadcast %10 : vector<16x1xf32> to vector<16x2048xf32>
    %12 = arith.addf %9, %11 : vector<16x2048xf32>
    %cst_11 = arith.constant 0.000000e+00 : f32
    %13 = vector.broadcast %cst_11 : f32 to vector<16x2048xf32>
    %14 = arith.maximumf %12, %13 : vector<16x2048xf32>
    %c0_12 = arith.constant 0 : index
    %c0_13 = arith.constant 0 : index
    %15 = vector.load %arg6[%c0_12, %c0_13] : memref<9x16xf32, #tpu.memory_space<vmem>>, vector<9x16xf32>
    %cst_14 = arith.constant dense<0.000000e+00> : vector<9x2048xf32>
    %16 = tpu.matmul %15, %14, %cst_14 {dimension_numbers = #tpu.dot_dimension_numbers<[1], [0], [0], [1], [0, 0, 1, 1], [], []>} : vector<9x16xf32>, vector<16x2048xf32>, vector<9x2048xf32> -> vector<9x2048xf32>
    %c0_15 = arith.constant 0 : index
    %c0_16 = arith.constant 0 : index
    %17 = vector.load %arg7[%c0_15, %c0_16] : memref<9x1xf32, #tpu.memory_space<vmem>>, vector<9x1xf32>
    %18 = vector.broadcast %17 : vector<9x1xf32> to vector<9x2048xf32>
    %19 = arith.addf %16, %18 : vector<9x2048xf32>
    %20 = vector.extract_strided_slice %19 {offsets = [0, 0], sizes = [8, 2048], strides = [1, 1]} : vector<9x2048xf32> to vector<8x2048xf32>
    %cst_17 = arith.constant 0.000000e+00 : f32
    %21 = vector.broadcast %cst_17 : f32 to vector<8x2048xf32>
    %22 = arith.maximumf %20, %21 : vector<8x2048xf32>
    %23 = vector.extract_strided_slice %19 {offsets = [8, 0], sizes = [1, 2048], strides = [1, 1]} : vector<9x2048xf32> to vector<1x2048xf32>
    %cst_18 = arith.constant 0.000000e+00 : f32
    %24 = vector.broadcast %cst_18 : f32 to vector<1x2048xf32>
    %25 = arith.cmpf ogt, %23, %24 : vector<1x2048xf32>
    %26 = arith.extui %25 : vector<1x2048xi1> to vector<1x2048xi32>
    %27 = arith.sitofp %26 : vector<1x2048xi32> to vector<1x2048xf32>
    %c0_19 = arith.constant 0 : index
    %c0_20 = arith.constant 0 : index
    %28 = vector.load %arg8[%c0_19, %c0_20] : memref<32x16xf32, #tpu.memory_space<vmem>>, vector<32x16xf32>
    %cst_21 = arith.constant dense<0.000000e+00> : vector<32x2048xf32>
    %29 = tpu.matmul %28, %0, %cst_21 {dimension_numbers = #tpu.dot_dimension_numbers<[1], [0], [0], [1], [0, 0, 1, 1], [], []>} : vector<32x16xf32>, vector<16x2048xf32>, vector<32x2048xf32> -> vector<32x2048xf32>
    %c0_22 = arith.constant 0 : index
    %c0_23 = arith.constant 0 : index
    %30 = vector.load %arg9[%c0_22, %c0_23] : memref<32x8xf32, #tpu.memory_space<vmem>>, vector<32x8xf32>
    %cst_24 = arith.constant dense<0.000000e+00> : vector<32x2048xf32>
    %31 = tpu.matmul %30, %22, %cst_24 {dimension_numbers = #tpu.dot_dimension_numbers<[1], [0], [0], [1], [0, 0, 1, 1], [], []>} : vector<32x8xf32>, vector<8x2048xf32>, vector<32x2048xf32> -> vector<32x2048xf32>
    %32 = arith.addf %29, %31 : vector<32x2048xf32>
    %c0_25 = arith.constant 0 : index
    %c0_26 = arith.constant 0 : index
    %33 = vector.load %arg10[%c0_25, %c0_26] : memref<32x1xf32, #tpu.memory_space<vmem>>, vector<32x1xf32>
    %34 = vector.broadcast %33 : vector<32x1xf32> to vector<32x2048xf32>
    %35 = arith.addf %32, %34 : vector<32x2048xf32>
    %cst_27 = arith.constant 0.000000e+00 : f32
    %36 = vector.broadcast %cst_27 : f32 to vector<32x2048xf32>
    %37 = arith.maximumf %35, %36 : vector<32x2048xf32>
    %c0_28 = arith.constant 0 : index
    %c0_29 = arith.constant 0 : index
    %38 = vector.load %arg11[%c0_28, %c0_29] : memref<32x32xf32, #tpu.memory_space<vmem>>, vector<32x32xf32>
    %cst_30 = arith.constant dense<0.000000e+00> : vector<32x2048xf32>
    %39 = tpu.matmul %38, %37, %cst_30 {dimension_numbers = #tpu.dot_dimension_numbers<[1], [0], [0], [1], [0, 0, 1, 1], [], []>} : vector<32x32xf32>, vector<32x2048xf32>, vector<32x2048xf32> -> vector<32x2048xf32>
    %c0_31 = arith.constant 0 : index
    %c0_32 = arith.constant 0 : index
    %40 = vector.load %arg12[%c0_31, %c0_32] : memref<32x1xf32, #tpu.memory_space<vmem>>, vector<32x1xf32>
    %41 = vector.broadcast %40 : vector<32x1xf32> to vector<32x2048xf32>
    %42 = arith.addf %39, %41 : vector<32x2048xf32>
    %cst_33 = arith.constant 0.000000e+00 : f32
    %43 = vector.broadcast %cst_33 : f32 to vector<32x2048xf32>
    %44 = arith.maximumf %42, %43 : vector<32x2048xf32>
    %c0_34 = arith.constant 0 : index
    %c0_35 = arith.constant 0 : index
    %45 = vector.load %arg13[%c0_34, %c0_35] : memref<16x32xf32, #tpu.memory_space<vmem>>, vector<16x32xf32>
    %cst_36 = arith.constant dense<0.000000e+00> : vector<16x2048xf32>
    %46 = tpu.matmul %45, %44, %cst_36 {dimension_numbers = #tpu.dot_dimension_numbers<[1], [0], [0], [1], [0, 0, 1, 1], [], []>} : vector<16x32xf32>, vector<32x2048xf32>, vector<16x2048xf32> -> vector<16x2048xf32>
    %c0_37 = arith.constant 0 : index
    %c0_38 = arith.constant 0 : index
    %47 = vector.load %arg14[%c0_37, %c0_38] : memref<16x1xf32, #tpu.memory_space<vmem>>, vector<16x1xf32>
    %48 = vector.broadcast %47 : vector<16x1xf32> to vector<16x2048xf32>
    %49 = arith.addf %46, %48 : vector<16x2048xf32>
    %50 = vector.broadcast %27 : vector<1x2048xf32> to vector<16x2048xf32>
    %51 = arith.mulf %49, %50 : vector<16x2048xf32>
    %c0_39 = arith.constant 0 : index
    %c0_40 = arith.constant 0 : index
    %52 = vector.load %arg15[%c0_39, %c0_40] : memref<18x2048xf32, #tpu.memory_space<vmem>>, vector<16x2048xf32>
    tpu.vector_store %arg15[%c0_39, %c0_40], %51 {strides = array<i32>} : memref<18x2048xf32, #tpu.memory_space<vmem>>, vector<16x2048xf32>,
    %c16 = arith.constant 16 : index
    %c0_41 = arith.constant 0 : index
    %53 = vector.load %arg15[%c16, %c0_41] : memref<18x2048xf32, #tpu.memory_space<vmem>>, vector<1x2048xf32>
    tpu.vector_store %arg15[%c16, %c0_41], %27 {strides = array<i32>} : memref<18x2048xf32, #tpu.memory_space<vmem>>, vector<1x2048xf32>,
    %c17 = arith.constant 17 : index
    %c0_42 = arith.constant 0 : index
    %54 = vector.load %arg15[%c17, %c0_42] : memref<18x2048xf32, #tpu.memory_space<vmem>>, vector<1x2048xf32>
    tpu.vector_store %arg15[%c17, %c0_42], %23 {strides = array<i32>} : memref<18x2048xf32, #tpu.memory_space<vmem>>, vector<1x2048xf32>,
    return
  }
  func.func @transform_0(%arg0: i32) -> (i32, i32) {
    %c0_i32 = arith.constant 0 : i32
    %c0_i32_0 = arith.constant 0 : i32
    return %c0_i32, %arg0 : i32, i32
  }
  func.func @transform_1(%arg0: i32) -> (i32, i32) {
    %c0_i32 = arith.constant 0 : i32
    %c0_i32_0 = arith.constant 0 : i32
    %c0_i32_1 = arith.constant 0 : i32
    return %c0_i32, %c0_i32_0 : i32, i32
  }
  func.func @transform_2(%arg0: i32) -> (i32, i32) {
    %c0_i32 = arith.constant 0 : i32
    %c0_i32_0 = arith.constant 0 : i32
    %c0_i32_1 = arith.constant 0 : i32
    return %c0_i32, %c0_i32_0 : i32, i32
  }
  func.func @transform_3(%arg0: i32) -> (i32, i32) {
    %c0_i32 = arith.constant 0 : i32
    %c0_i32_0 = arith.constant 0 : i32
    %c0_i32_1 = arith.constant 0 : i32
    return %c0_i32, %c0_i32_0 : i32, i32
  }
  func.func @transform_4(%arg0: i32) -> (i32, i32) {
    %c0_i32 = arith.constant 0 : i32
    %c0_i32_0 = arith.constant 0 : i32
    %c0_i32_1 = arith.constant 0 : i32
    return %c0_i32, %c0_i32_0 : i32, i32
  }
  func.func @transform_5(%arg0: i32) -> (i32, i32) {
    %c0_i32 = arith.constant 0 : i32
    %c0_i32_0 = arith.constant 0 : i32
    %c0_i32_1 = arith.constant 0 : i32
    return %c0_i32, %c0_i32_0 : i32, i32
  }
  func.func @transform_6(%arg0: i32) -> (i32, i32) {
    %c0_i32 = arith.constant 0 : i32
    %c0_i32_0 = arith.constant 0 : i32
    %c0_i32_1 = arith.constant 0 : i32
    return %c0_i32, %c0_i32_0 : i32, i32
  }
  func.func @transform_7(%arg0: i32) -> (i32, i32) {
    %c0_i32 = arith.constant 0 : i32
    %c0_i32_0 = arith.constant 0 : i32
    %c0_i32_1 = arith.constant 0 : i32
    return %c0_i32, %c0_i32_0 : i32, i32
  }
  func.func @transform_8(%arg0: i32) -> (i32, i32) {
    %c0_i32 = arith.constant 0 : i32
    %c0_i32_0 = arith.constant 0 : i32
    %c0_i32_1 = arith.constant 0 : i32
    return %c0_i32, %c0_i32_0 : i32, i32
  }
  func.func @transform_9(%arg0: i32) -> (i32, i32) {
    %c0_i32 = arith.constant 0 : i32
    %c0_i32_0 = arith.constant 0 : i32
    %c0_i32_1 = arith.constant 0 : i32
    return %c0_i32, %c0_i32_0 : i32, i32
  }
  func.func @transform_10(%arg0: i32) -> (i32, i32) {
    %c0_i32 = arith.constant 0 : i32
    %c0_i32_0 = arith.constant 0 : i32
    %c0_i32_1 = arith.constant 0 : i32
    return %c0_i32, %c0_i32_0 : i32, i32
  }
  func.func @transform_11(%arg0: i32) -> (i32, i32) {
    %c0_i32 = arith.constant 0 : i32
    %c0_i32_0 = arith.constant 0 : i32
    %c0_i32_1 = arith.constant 0 : i32
    return %c0_i32, %c0_i32_0 : i32, i32
  }
  func.func @transform_12(%arg0: i32) -> (i32, i32) {
    %c0_i32 = arith.constant 0 : i32
    %c0_i32_0 = arith.constant 0 : i32
    %c0_i32_1 = arith.constant 0 : i32
    return %c0_i32, %c0_i32_0 : i32, i32
  }
  func.func @transform_13(%arg0: i32) -> (i32, i32) {
    %c0_i32 = arith.constant 0 : i32
    %c0_i32_0 = arith.constant 0 : i32
    %c0_i32_1 = arith.constant 0 : i32
    return %c0_i32, %c0_i32_0 : i32, i32
  }
  func.func @transform_14(%arg0: i32) -> (i32, i32) {
    %c0_i32 = arith.constant 0 : i32
    %c0_i32_0 = arith.constant 0 : i32
    return %c0_i32, %arg0 : i32, i32
  }
}

</mosaic_0001>

<llo_original>
// kernel: tpu_custom_call.1
$region0: #{tpu_custom_call.1}
  #allocation0 [shape = 'u32[]', space=smem, size = 0x4, offset = 0x4, fixed_abs, tag = 'smem constant byte address 0x4 - core index']
  #allocation1 [shape = 'u32[72,128]{1,0:T(1,128)}', space=vmem, size = 0x9000, scoped, tag = 'internal scratch']
  %s0 = inlined_call_operand.hbm [shape: f32[16,4096], index: 0, kind: input, shape index: {}]
  %s1 = inlined_call_operand.vmem [shape: f32[16,16], index: 1, kind: input, shape index: {}]
  %s2 = inlined_call_operand.vmem [shape: f32[16,1], index: 2, kind: input, shape index: {}]
  %s3 = inlined_call_operand.vmem [shape: f32[16,16], index: 3, kind: input, shape index: {}]
  %s4 = inlined_call_operand.vmem [shape: f32[16,1], index: 4, kind: input, shape index: {}]
  %s5 = inlined_call_operand.vmem [shape: f32[9,16], index: 5, kind: input, shape index: {}]
  %s6 = inlined_call_operand.vmem [shape: f32[9,1], index: 6, kind: input, shape index: {}]
  %s7 = inlined_call_operand.vmem [shape: f32[32,16], index: 7, kind: input, shape index: {}]
  %s8 = inlined_call_operand.vmem [shape: f32[32,8], index: 8, kind: input, shape index: {}]
  %s9 = inlined_call_operand.vmem [shape: f32[32,1], index: 9, kind: input, shape index: {}]
  %s10 = inlined_call_operand.vmem [shape: f32[32,32], index: 10, kind: input, shape index: {}]
  %s11 = inlined_call_operand.vmem [shape: f32[32,1], index: 11, kind: input, shape index: {}]
  %s12 = inlined_call_operand.vmem [shape: f32[16,32], index: 12, kind: input, shape index: {}]
  %s13 = inlined_call_operand.vmem [shape: f32[16,1], index: 13, kind: input, shape index: {}]
  %s14 = inlined_call_operand.hbm [shape: f32[18,4096], index: 14, kind: output, shape index: {}]
  %s15 = sld [smem:[#allocation0]]
  $region93: #{tpu_custom_call.1} parent=0
    _
  %s17 = ssub.s32 1, %s15
  %s18 = scalar_select 0, %s17, %s15
  $region1: #{tpu_custom_call.1} parent=0
    #allocation2 [shape = 'u8[262144]{0}', space=vmem, size = 0x40000, scoped, tag = 'input window, operand 0']
    #allocation3 [shape = 's32[2]{0}', space=sflag, size = 0x8, scoped, tag = 'scoped memory for tpu_custom_call.1']
    #allocation4 [shape = 's32[2]{0}', space=sflag, size = 0x8, scoped, tag = 'scoped memory for tpu_custom_call.1']
    #allocation5 [shape = 'u8[393216]{0}', space=vmem, size = 0x60000, scoped, tag = 'output window, operand 0']
    %19 = vsyncpa [#allocation3], 0
    %s20 = scalar_lea.sflag [#allocation3], 1
    %21 = vsyncpa %s20, 0
    %22 = vsyncpa [#allocation4], 0
    %s23 = scalar_lea.sflag [#allocation4], 1
    %24 = vsyncpa %s23, 0
    loop: start=0, step=1, limit=4
    $region2: #{tpu_custom_call.1} parent=1 // loop_pre_header
      _
    $region3: #{tpu_custom_call.1} parent=1 // loop_header
      %s26 = sphi 0, %s30
      %p27 = scmp.ge.s32.totalorder %s26, 4
      %s36 = sphi 0, %s38
      %s39 = sphi 0, %s36
      %s40 = sphi 0, %s39
      %s56 = sphi 0, %s40
      %s60 = sphi 0, %s60
      %s62 = sphi 0, %s60
      %s63 = sphi 0, %s62
      %s77 = sphi 0, %s63
      %s81 = sphi 0, %s81
      %s83 = sphi 0, %s81
      %s84 = sphi 0, %s83
      %s98 = sphi 0, %s84
      %s102 = sphi 0, %s102
      %s104 = sphi 0, %s102
      %s105 = sphi 0, %s104
      %s119 = sphi 0, %s105
      %s123 = sphi 0, %s123
      %s125 = sphi 0, %s123
      %s126 = sphi 0, %s125
      %s140 = sphi 0, %s126
      %s144 = sphi 0, %s144
      %s146 = sphi 0, %s144
      %s147 = sphi 0, %s146
      %s161 = sphi 0, %s147
      %s165 = sphi 0, %s165
      %s167 = sphi 0, %s165
      %s168 = sphi 0, %s167
      %s182 = sphi 0, %s168
      %s186 = sphi 0, %s186
      %s188 = sphi 0, %s186
      %s189 = sphi 0, %s188
      %s203 = sphi 0, %s189
      %s207 = sphi 0, %s207
      %s209 = sphi 0, %s207
      %s210 = sphi 0, %s209
      %s224 = sphi 0, %s210
      %s228 = sphi 0, %s228
      %s230 = sphi 0, %s228
      %s231 = sphi 0, %s230
      %s245 = sphi 0, %s231
      %s249 = sphi 0, %s249
      %s251 = sphi 0, %s249
      %s252 = sphi 0, %s251
      %s266 = sphi 0, %s252
      %s270 = sphi 0, %s270
      %s272 = sphi 0, %s270
      %s273 = sphi 0, %s272
      %s287 = sphi 0, %s273
      %s291 = sphi 0, %s291
      %s293 = sphi 0, %s291
      %s294 = sphi 0, %s293
      %s308 = sphi 0, %s294
      %s312 = sphi 0, %s312
      %s314 = sphi 0, %s312
      %s315 = sphi 0, %s314
      %s329 = sphi 0, %s315
      %s335 = sphi 0, %s337
      %s338 = sphi 0, %s335
      %s339 = sphi 0, %s338
      %s355 = sphi 0, %s339
    $region4: #{tpu_custom_call.1} parent=1 // loop_header_branch
      %29 = sbr.rel (%p27) target = $region8
    $region5: #{tpu_custom_call.1} parent=1 // loop_body
      %s31 = ssub.s32 %s26, 1
      %s32 = ssub.s32 %s26, 2
      %s33 = sadd.s32 %s26, 1
      %s34 = ssub.s32 %s26, %s33
      %p35 = scmp.eq.s32.totalorder %s34, 0
      %s37 = sadd.s32 %s36, 1
      %s38 = scalar_select %p35, %s36, %s37
      %p41 = pneg %p35
      %p42 = scmp.eq.s32.totalorder %s26, 1
      %p43 = por %p41, %p42
      %p44 = scmp.ne.s32.totalorder %s36, %s39
      %p45 = scmp.eq.s32.totalorder %s26, 0
      %p46 = por %p44, %p45
      %p47 = scmp.ne.s32.totalorder %s36, %s39
      %p48 = scmp.eq.s32.totalorder %s31, 1
      %p49 = por %p47, %p48
      %p50 = scmp.ne.s32.totalorder %s39, %s40
      %p51 = scmp.eq.s32.totalorder %s31, 0
      %p52 = por %p50, %p51
      %p53 = scmp.ne.s32.totalorder %s39, %s40
      %p54 = scmp.eq.s32.totalorder %s32, 1
      %p55 = por %p53, %p54
      %p57 = scmp.ne.s32.totalorder %s40, %s56
      %p58 = scmp.eq.s32.totalorder %s32, 0
      %p59 = por %p57, %p58
      %s61 = sadd.s32 %s60, 1
      %p64 = scmp.eq.s32.totalorder %s26, 1
      %p65 = scmp.ne.s32.totalorder %s60, %s62
      %p66 = scmp.eq.s32.totalorder %s26, 0
      %p67 = por %p65, %p66
      %p68 = scmp.ne.s32.totalorder %s60, %s62
      %p69 = scmp.eq.s32.totalorder %s31, 1
      %p70 = por %p68, %p69
      %p71 = scmp.ne.s32.totalorder %s62, %s63
      %p72 = scmp.eq.s32.totalorder %s31, 0
      %p73 = por %p71, %p72
      %p74 = scmp.ne.s32.totalorder %s62, %s63
      %p75 = scmp.eq.s32.totalorder %s32, 1
      %p76 = por %p74, %p75
      %p78 = scmp.ne.s32.totalorder %s63, %s77
      %p79 = scmp.eq.s32.totalorder %s32, 0
      %p80 = por %p78, %p79
      %s82 = sadd.s32 %s81, 1
      %p85 = scmp.eq.s32.totalorder %s26, 1
      %p86 = scmp.ne.s32.totalorder %s81, %s83
      %p87 = scmp.eq.s32.totalorder %s26, 0
      %p88 = por %p86, %p87
      %p89 = scmp.ne.s32.totalorder %s81, %s83
      %p90 = scmp.eq.s32.totalorder %s31, 1
      %p91 = por %p89, %p90
      %p92 = scmp.ne.s32.totalorder %s83, %s84
      %p93 = scmp.eq.s32.totalorder %s31, 0
      %p94 = por %p92, %p93
      %p95 = scmp.ne.s32.totalorder %s83, %s84
      %p96 = scmp.eq.s32.totalorder %s32, 1
      %p97 = por %p95, %p96
      %p99 = scmp.ne.s32.totalorder %s84, %s98
      %p100 = scmp.eq.s32.totalorder %s32, 0
      %p101 = por %p99, %p100
      %s103 = sadd.s32 %s102, 1
      %p106 = scmp.eq.s32.totalorder %s26, 1
      %p107 = scmp.ne.s32.totalorder %s102, %s104
      %p108 = scmp.eq.s32.totalorder %s26, 0
      %p109 = por %p107, %p108
      %p110 = scmp.ne.s32.totalorder %s102, %s104
      %p111 = scmp.eq.s32.totalorder %s31, 1
      %p112 = por %p110, %p111
      %p113 = scmp.ne.s32.totalorder %s104, %s105
      %p114 = scmp.eq.s32.totalorder %s31, 0
      %p115 = por %p113, %p114
      %p116 = scmp.ne.s32.totalorder %s104, %s105
      %p117 = scmp.eq.s32.totalorder %s32, 1
      %p118 = por %p116, %p117
      %p120 = scmp.ne.s32.totalorder %s105, %s119
      %p121 = scmp.eq.s32.totalorder %s32, 0
      %p122 = por %p120, %p121
      %s124 = sadd.s32 %s123, 1
      %p127 = scmp.eq.s32.totalorder %s26, 1
      %p128 = scmp.ne.s32.totalorder %s123, %s125
      %p129 = scmp.eq.s32.totalorder %s26, 0
      %p130 = por %p128, %p129
      %p131 = scmp.ne.s32.totalorder %s123, %s125
      %p132 = scmp.eq.s32.totalorder %s31, 1
      %p133 = por %p131, %p132
      %p134 = scmp.ne.s32.totalorder %s125, %s126
      %p135 = scmp.eq.s32.totalorder %s31, 0
      %p136 = por %p134, %p135
      %p137 = scmp.ne.s32.totalorder %s125, %s126
      %p138 = scmp.eq.s32.totalorder %s32, 1
      %p139 = por %p137, %p138
      %p141 = scmp.ne.s32.totalorder %s126, %s140
      %p142 = scmp.eq.s32.totalorder %s32, 0
      %p143 = por %p141, %p142
      %s145 = sadd.s32 %s144, 1
      %p148 = scmp.eq.s32.totalorder %s26, 1
      %p149 = scmp.ne.s32.totalorder %s144, %s146
      %p150 = scmp.eq.s32.totalorder %s26, 0
      %p151 = por %p149, %p150
      %p152 = scmp.ne.s32.totalorder %s144, %s146
      %p153 = scmp.eq.s32.totalorder %s31, 1
      %p154 = por %p152, %p153
      %p155 = scmp.ne.s32.totalorder %s146, %s147
      %p156 = scmp.eq.s32.totalorder %s31, 0
      %p157 = por %p155, %p156
      %p158 = scmp.ne.s32.totalorder %s146, %s147
      %p159 = scmp.eq.s32.totalorder %s32, 1
      %p160 = por %p158, %p159
      %p162 = scmp.ne.s32.totalorder %s147, %s161
      %p163 = scmp.eq.s32.totalorder %s32, 0
      %p164 = por %p162, %p163
      %s166 = sadd.s32 %s165, 1
      %p169 = scmp.eq.s32.totalorder %s26, 1
      %p170 = scmp.ne.s32.totalorder %s165, %s167
      %p171 = scmp.eq.s32.totalorder %s26, 0
      %p172 = por %p170, %p171
      %p173 = scmp.ne.s32.totalorder %s165, %s167
      %p174 = scmp.eq.s32.totalorder %s31, 1
      %p175 = por %p173, %p174
      %p176 = scmp.ne.s32.totalorder %s167, %s168
      %p177 = scmp.eq.s32.totalorder %s31, 0
      %p178 = por %p176, %p177
      %p179 = scmp.ne.s32.totalorder %s167, %s168
      %p180 = scmp.eq.s32.totalorder %s32, 1
      %p181 = por %p179, %p180
      %p183 = scmp.ne.s32.totalorder %s168, %s182
      %p184 = scmp.eq.s32.totalorder %s32, 0
      %p185 = por %p183, %p184
      %s187 = sadd.s32 %s186, 1
      %p190 = scmp.eq.s32.totalorder %s26, 1
      %p191 = scmp.ne.s32.totalorder %s186, %s188
      %p192 = scmp.eq.s32.totalorder %s26, 0
      %p193 = por %p191, %p192
      %p194 = scmp.ne.s32.totalorder %s186, %s188
      %p195 = scmp.eq.s32.totalorder %s31, 1
      %p196 = por %p194, %p195
      %p197 = scmp.ne.s32.totalorder %s188, %s189
      %p198 = scmp.eq.s32.totalorder %s31, 0
      %p199 = por %p197, %p198
      %p200 = scmp.ne.s32.totalorder %s188, %s189
      %p201 = scmp.eq.s32.totalorder %s32, 1
      %p202 = por %p200, %p201
      %p204 = scmp.ne.s32.totalorder %s189, %s203
      %p205 = scmp.eq.s32.totalorder %s32, 0
      %p206 = por %p204, %p205
      %s208 = sadd.s32 %s207, 1
      %p211 = scmp.eq.s32.totalorder %s26, 1
      %p212 = scmp.ne.s32.totalorder %s207, %s209
      %p213 = scmp.eq.s32.totalorder %s26, 0
      %p214 = por %p212, %p213
      %p215 = scmp.ne.s32.totalorder %s207, %s209
      %p216 = scmp.eq.s32.totalorder %s31, 1
      %p217 = por %p215, %p216
      %p218 = scmp.ne.s32.totalorder %s209, %s210
      %p219 = scmp.eq.s32.totalorder %s31, 0
      %p220 = por %p218, %p219
      %p221 = scmp.ne.s32.totalorder %s209, %s210
      %p222 = scmp.eq.s32.totalorder %s32, 1
      %p223 = por %p221, %p222
      %p225 = scmp.ne.s32.totalorder %s210, %s224
      %p226 = scmp.eq.s32.totalorder %s32, 0
      %p227 = por %p225, %p226
      %s229 = sadd.s32 %s228, 1
      %p232 = scmp.eq.s32.totalorder %s26, 1
      %p233 = scmp.ne.s32.totalorder %s228, %s230
      %p234 = scmp.eq.s32.totalorder %s26, 0
      %p235 = por %p233, %p234
      %p236 = scmp.ne.s32.totalorder %s228, %s230
      %p237 = scmp.eq.s32.totalorder %s31, 1
      %p238 = por %p236, %p237
      %p239 = scmp.ne.s32.totalorder %s230, %s231
      %p240 = scmp.eq.s32.totalorder %s31, 0
      %p241 = por %p239, %p240
      %p242 = scmp.ne.s32.totalorder %s230, %s231
      %p243 = scmp.eq.s32.totalorder %s32, 1
      %p244 = por %p242, %p243
      %p246 = scmp.ne.s32.totalorder %s231, %s245
      %p247 = scmp.eq.s32.totalorder %s32, 0
      %p248 = por %p246, %p247
      %s250 = sadd.s32 %s249, 1
      %p253 = scmp.eq.s32.totalorder %s26, 1
      %p254 = scmp.ne.s32.totalorder %s249, %s251
      %p255 = scmp.eq.s32.totalorder %s26, 0
      %p256 = por %p254, %p255
      %p257 = scmp.ne.s32.totalorder %s249, %s251
      %p258 = scmp.eq.s32.totalorder %s31, 1
      %p259 = por %p257, %p258
      %p260 = scmp.ne.s32.totalorder %s251, %s252
      %p261 = scmp.eq.s32.totalorder %s31, 0
      %p262 = por %p260, %p261
      %p263 = scmp.ne.s32.totalorder %s251, %s252
      %p264 = scmp.eq.s32.totalorder %s32, 1
      %p265 = por %p263, %p264
      %p267 = scmp.ne.s32.totalorder %s252, %s266
      %p268 = scmp.eq.s32.totalorder %s32, 0
      %p269 = por %p267, %p268
      %s271 = sadd.s32 %s270, 1
      %p274 = scmp.eq.s32.totalorder %s26, 1
      %p275 = scmp.ne.s32.totalorder %s270, %s272
      %p276 = scmp.eq.s32.totalorder %s26, 0
      %p277 = por %p275, %p276
      %p278 = scmp.ne.s32.totalorder %s270, %s272
      %p279 = scmp.eq.s32.totalorder %s31, 1
      %p280 = por %p278, %p279
      %p281 = scmp.ne.s32.totalorder %s272, %s273
      %p282 = scmp.eq.s32.totalorder %s31, 0
      %p283 = por %p281, %p282
      %p284 = scmp.ne.s32.totalorder %s272, %s273
      %p285 = scmp.eq.s32.totalorder %s32, 1
      %p286 = por %p284, %p285
      %p288 = scmp.ne.s32.totalorder %s273, %s287
      %p289 = scmp.eq.s32.totalorder %s32, 0
      %p290 = por %p288, %p289
      %s292 = sadd.s32 %s291, 1
      %p295 = scmp.eq.s32.totalorder %s26, 1
      %p296 = scmp.ne.s32.totalorder %s291, %s293
      %p297 = scmp.eq.s32.totalorder %s26, 0
      %p298 = por %p296, %p297
      %p299 = scmp.ne.s32.totalorder %s291, %s293
      %p300 = scmp.eq.s32.totalorder %s31, 1
      %p301 = por %p299, %p300
      %p302 = scmp.ne.s32.totalorder %s293, %s294
      %p303 = scmp.eq.s32.totalorder %s31, 0
      %p304 = por %p302, %p303
      %p305 = scmp.ne.s32.totalorder %s293, %s294
      %p306 = scmp.eq.s32.totalorder %s32, 1
      %p307 = por %p305, %p306
      %p309 = scmp.ne.s32.totalorder %s294, %s308
      %p310 = scmp.eq.s32.totalorder %s32, 0
      %p311 = por %p309, %p310
      %s313 = sadd.s32 %s312, 1
      %p316 = scmp.eq.s32.totalorder %s26, 1
      %p317 = scmp.ne.s32.totalorder %s312, %s314
      %p318 = scmp.eq.s32.totalorder %s26, 0
      %p319 = por %p317, %p318
      %p320 = scmp.ne.s32.totalorder %s312, %s314
      %p321 = scmp.eq.s32.totalorder %s31, 1
      %p322 = por %p320, %p321
      %p323 = scmp.ne.s32.totalorder %s314, %s315
      %p324 = scmp.eq.s32.totalorder %s31, 0
      %p325 = por %p323, %p324
      %p326 = scmp.ne.s32.totalorder %s314, %s315
      %p327 = scmp.eq.s32.totalorder %s32, 1
      %p328 = por %p326, %p327
      %p330 = scmp.ne.s32.totalorder %s315, %s329
      %p331 = scmp.eq.s32.totalorder %s32, 0
      %p332 = por %p330, %p331
      %s333 = ssub.s32 %s26, %s33
      %p334 = scmp.eq.s32.totalorder %s333, 0
      %s336 = sadd.s32 %s335, 1
      %s337 = scalar_select %p334, %s335, %s336
      %p340 = pneg %p334
      %p341 = scmp.eq.s32.totalorder %s26, 1
      %p342 = por %p340, %p341
      %p343 = scmp.ne.s32.totalorder %s335, %s338
      %p344 = scmp.eq.s32.totalorder %s26, 0
      %p345 = por %p343, %p344
      %p346 = scmp.ne.s32.totalorder %s335, %s338
      %p347 = scmp.eq.s32.totalorder %s31, 1
      %p348 = por %p346, %p347
      %p349 = scmp.ne.s32.totalorder %s338, %s339
      %p350 = scmp.eq.s32.totalorder %s31, 0
      %p351 = por %p349, %p350
      %p352 = scmp.ne.s32.totalorder %s338, %s339
      %p353 = scmp.eq.s32.totalorder %s32, 1
      %p354 = por %p352, %p353
      %p356 = scmp.ne.s32.totalorder %s339, %s355
      %p357 = scmp.eq.s32.totalorder %s32, 0
      %p358 = por %p356, %p357
      %p359 = scmp.le.s32.totalorder 1, %s26
      %p360 = scmp.lt.s32.totalorder %s26, 3
      %p361 = pnand %p359, %p360
      %p362 = pneg %p361
      // Predicated region
      $region9: #{tpu_custom_call.1} parent=5 // pred_check
        _
      $region10: #{tpu_custom_call.1} parent=5 // pred_check_branch
        %364 = sbr.rel (%p361) target = $region12
      $region11: #{tpu_custom_call.1} parent=5 // pred_region
        %s365 = ssub.s32 %s26, 1
        // Predicated region
        $region13: #{tpu_custom_call.1} parent=11 // pred_check
          %p366 = pneg %p73
        $region14: #{tpu_custom_call.1} parent=11 // pred_check_branch
          %368 = sbr.rel (%p366) target = $region16
        $region15: #{tpu_custom_call.1} parent=11 // pred_region
          _
        $region16: #{tpu_custom_call.1} parent=11 // pred_fallthru
          _
        // Predicated region
        $region17: #{tpu_custom_call.1} parent=11 // pred_check
          %p369 = pneg %p94
        $region18: #{tpu_custom_call.1} parent=11 // pred_check_branch
          %371 = sbr.rel (%p369) target = $region20
        $region19: #{tpu_custom_call.1} parent=11 // pred_region
          _
        $region20: #{tpu_custom_call.1} parent=11 // pred_fallthru
          _
        // Predicated region
        $region21: #{tpu_custom_call.1} parent=11 // pred_check
          %p372 = pneg %p115
        $region22: #{tpu_custom_call.1} parent=11 // pred_check_branch
          %374 = sbr.rel (%p372) target = $region24
        $region23: #{tpu_custom_call.1} parent=11 // pred_region
          _
        $region24: #{tpu_custom_call.1} parent=11 // pred_fallthru
          _
        // Predicated region
        $region25: #{tpu_custom_call.1} parent=11 // pred_check
          %p375 = pneg %p136
        $region26: #{tpu_custom_call.1} parent=11 // pred_check_branch
          %377 = sbr.rel (%p375) target = $region28
        $region27: #{tpu_custom_call.1} parent=11 // pred_region
          _
        $region28: #{tpu_custom_call.1} parent=11 // pred_fallthru
          _
        // Predicated region
        $region29: #{tpu_custom_call.1} parent=11 // pred_check
          %p378 = pneg %p157
        $region30: #{tpu_custom_call.1} parent=11 // pred_check_branch
          %380 = sbr.rel (%p378) target = $region32
        $region31: #{tpu_custom_call.1} parent=11 // pred_region
          _
        $region32: #{tpu_custom_call.1} parent=11 // pred_fallthru
          _
        // Predicated region
        $region33: #{tpu_custom_call.1} parent=11 // pred_check
          %p381 = pneg %p178
        $region34: #{tpu_custom_call.1} parent=11 // pred_check_branch
          %383 = sbr.rel (%p381) target = $region36
        $region35: #{tpu_custom_call.1} parent=11 // pred_region
          _
        $region36: #{tpu_custom_call.1} parent=11 // pred_fallthru
          _
        // Predicated region
        $region37: #{tpu_custom_call.1} parent=11 // pred_check
          %p384 = pneg %p199
        $region38: #{tpu_custom_call.1} parent=11 // pred_check_branch
          %386 = sbr.rel (%p384) target = $region40
        $region39: #{tpu_custom_call.1} parent=11 // pred_region
          _
        $region40: #{tpu_custom_call.1} parent=11 // pred_fallthru
          _
        // Predicated region
        $region41: #{tpu_custom_call.1} parent=11 // pred_check
          %p387 = pneg %p220
        $region42: #{tpu_custom_call.1} parent=11 // pred_check_branch
          %389 = sbr.rel (%p387) target = $region44
        $region43: #{tpu_custom_call.1} parent=11 // pred_region
          _
        $region44: #{tpu_custom_call.1} parent=11 // pred_fallthru
          _
        // Predicated region
        $region45: #{tpu_custom_call.1} parent=11 // pred_check
          %p390 = pneg %p241
        $region46: #{tpu_custom_call.1} parent=11 // pred_check_branch
          %392 = sbr.rel (%p390) target = $region48
        $region47: #{tpu_custom_call.1} parent=11 // pred_region
          _
        $region48: #{tpu_custom_call.1} parent=11 // pred_fallthru
          _
        // Predicated region
        $region49: #{tpu_custom_call.1} parent=11 // pred_check
          %p393 = pneg %p262
        $region50: #{tpu_custom_call.1} parent=11 // pred_check_branch
          %395 = sbr.rel (%p393) target = $region52
        $region51: #{tpu_custom_call.1} parent=11 // pred_region
          _
        $region52: #{tpu_custom_call.1} parent=11 // pred_fallthru
          _
        // Predicated region
        $region53: #{tpu_custom_call.1} parent=11 // pred_check
          %p396 = pneg %p283
        $region54: #{tpu_custom_call.1} parent=11 // pred_check_branch
          %398 = sbr.rel (%p396) target = $region56
        $region55: #{tpu_custom_call.1} parent=11 // pred_region
          _
        $region56: #{tpu_custom_call.1} parent=11 // pred_fallthru
          _
        // Predicated region
        $region57: #{tpu_custom_call.1} parent=11 // pred_check
          %p399 = pneg %p304
        $region58: #{tpu_custom_call.1} parent=11 // pred_check_branch
          %401 = sbr.rel (%p399) target = $region60
        $region59: #{tpu_custom_call.1} parent=11 // pred_region
          _
        $region60: #{tpu_custom_call.1} parent=11 // pred_fallthru
          _
        // Predicated region
        $region61: #{tpu_custom_call.1} parent=11 // pred_check
          %p402 = pneg %p325
        $region62: #{tpu_custom_call.1} parent=11 // pred_check_branch
          %404 = sbr.rel (%p402) target = $region64
        $region63: #{tpu_custom_call.1} parent=11 // pred_region
          _
        $region64: #{tpu_custom_call.1} parent=11 // pred_fallthru
          _
      $region12: #{tpu_custom_call.1} parent=5 // pred_fallthru
        _
      %p405 = scmp.lt.s32.totalorder %s26, 2
      // Predicated region
      $region65: #{tpu_custom_call.1} parent=5 // pred_check
        %p406 = pneg %p405
      $region66: #{tpu_custom_call.1} parent=5 // pred_check_branch
        %408 = sbr.rel (%p406) target = $region68
      $region67: #{tpu_custom_call.1} parent=5 // pred_region
        // Predicated region
        $region69: #{tpu_custom_call.1} parent=67 // pred_check
          %p409 = pneg %p46
        $region70: #{tpu_custom_call.1} parent=67 // pred_check_branch
          %411 = sbr.rel (%p409) target = $region72
        $region71: #{tpu_custom_call.1} parent=67 // pred_region
          %s412 = sand.u32 %s36, 1
          %s413 = scalar_lea.sflag [#allocation3], %s412
          %s414 = sand.u32 %s36, 1
          %s415 = smul.addr %s414, 256
          %s416 = scalar_lea.vmem [#allocation2], %s415
          %s417 = smul.u32 16, %s26
          %419 = vsyncadd %s413, 0
          %s420 = smul.addr %s417, 8
          %s421 = scalar_lea.hbm %s0, %s420
          %s422 = sshll.u32 %s421, 4
          %s423 = int_to_ptr.hbm [resolvable:$true] %s422
          %s424 = sshll.u32 %s416, 4
          %s425 = int_to_ptr.vmem [resolvable:$true] %s424
          %430 = dma.hbm_to_vmem [thread:$0]  %s423, 4096, %s425, %s413, 4096, 2048, 128
        $region72: #{tpu_custom_call.1} parent=67 // pred_fallthru
          _
      $region68: #{tpu_custom_call.1} parent=5 // pred_fallthru
        _
      %p431 = scmp.le.s32.totalorder 1, %s26
      %p432 = scmp.lt.s32.totalorder %s26, 3
      %p433 = pnand %p431, %p432
      %p434 = pneg %p433
      // Predicated region
      $region73: #{tpu_custom_call.1} parent=5 // pred_check
        _
      $region74: #{tpu_custom_call.1} parent=5 // pred_check_branch
        %436 = sbr.rel (%p433) target = $region76
      $region75: #{tpu_custom_call.1} parent=5 // pred_region
        %s437 = ssub.s32 %s26, 1
        %s438 = sand.u32 %s39, 1
        %s439 = scalar_lea.sflag [#allocation3], %s438
        %s440 = sand.u32 %s39, 1
        %s441 = smul.addr %s440, 256
        %s442 = scalar_lea.vmem [#allocation2], %s441
        // Predicated region
        $region77: #{tpu_custom_call.1} parent=75 // pred_check
          %p443 = pneg %p52
        $region78: #{tpu_custom_call.1} parent=75 // pred_check_branch
          %445 = sbr.rel (%p443) target = $region80
        $region79: #{tpu_custom_call.1} parent=75 // pred_region
          %447 = dma.done %s439, 4096
        $region80: #{tpu_custom_call.1} parent=75 // pred_fallthru
          _
        %s448 = sand.u32 %s39, 1
        %s449 = scalar_lea.sflag [#allocation3], %s448
        %s450 = sand.u32 %s39, 1
        %s451 = smul.addr %s450, 256
        %s452 = scalar_lea.vmem [#allocation2], %s451
        %p453 = pneg %p52
        %p454 = pneg %p49
        %p455 = pneg %p73
        %p456 = pneg %p70
        %p457 = pneg %p94
        %p458 = pneg %p91
        %p459 = pneg %p115
        %p460 = pneg %p112
        %p461 = pneg %p136
        %p462 = pneg %p133
        %p463 = pneg %p157
        %p464 = pneg %p154
        %p465 = pneg %p178
        %p466 = pneg %p175
        %p467 = pneg %p199
        %p468 = pneg %p196
        %p469 = pneg %p220
        %p470 = pneg %p217
        %p471 = pneg %p241
        %p472 = pneg %p238
        %p473 = pneg %p262
        %p474 = pneg %p259
        %p475 = pneg %p283
        %p476 = pneg %p280
        %p477 = pneg %p304
        %p478 = pneg %p301
        %p479 = pneg %p325
        %p480 = pneg %p322
        %p481 = pneg %p351
        %p482 = pneg %p348
        %s483 = sand.u32 %s338, 1
        %s484 = scalar_lea.sflag [#allocation4], %s483
        %s485 = sand.u32 %s338, 1
        %s486 = smul.addr %s485, 384
        %s487 = scalar_lea.vmem [#allocation5], %s486
        %s488 = smul.u32 16, %s31
        %s489 = smul.u32 16, %s31
        %v490 = vld [vmem:[%s442] sm:$0xff]
        %v491 = vld [vmem:[%s442 + $0x8] sm:$0xff]
        %v492 = vld [vmem:[%s442 + $0x10] sm:$0xff]
        %v493 = vld [vmem:[%s442 + $0x18] sm:$0xff]
        %v494 = vld [vmem:[%s442 + $0x20] sm:$0xff]
        %v495 = vld [vmem:[%s442 + $0x28] sm:$0xff]
        %v496 = vld [vmem:[%s442 + $0x30] sm:$0xff]
        %v497 = vld [vmem:[%s442 + $0x38] sm:$0xff]
        %v498 = vld [vmem:[%s442 + $0x40] sm:$0xff]
        %v499 = vld [vmem:[%s442 + $0x48] sm:$0xff]
        %v500 = vld [vmem:[%s442 + $0x50] sm:$0xff]
        %v501 = vld [vmem:[%s442 + $0x58] sm:$0xff]
        %v502 = vld [vmem:[%s442 + $0x60] sm:$0xff]
        %v503 = vld [vmem:[%s442 + $0x68] sm:$0xff]
        %v504 = vld [vmem:[%s442 + $0x70] sm:$0xff]
        %v505 = vld [vmem:[%s442 + $0x78] sm:$0xff]
        %v506 = vld [vmem:[%s442 + $0x80] sm:$0xff]
        %v507 = vld [vmem:[%s442 + $0x88] sm:$0xff]
        %v508 = vld [vmem:[%s442 + $0x90] sm:$0xff]
        %v509 = vld [vmem:[%s442 + $0x98] sm:$0xff]
        %v510 = vld [vmem:[%s442 + $0xa0] sm:$0xff]
        %v511 = vld [vmem:[%s442 + $0xa8] sm:$0xff]
        %v512 = vld [vmem:[%s442 + $0xb0] sm:$0xff]
        %v513 = vld [vmem:[%s442 + $0xb8] sm:$0xff]
        %v514 = vld [vmem:[%s442 + $0xc0] sm:$0xff]
        %v515 = vld [vmem:[%s442 + $0xc8] sm:$0xff]
        %v516 = vld [vmem:[%s442 + $0xd0] sm:$0xff]
        %v517 = vld [vmem:[%s442 + $0xd8] sm:$0xff]
        %v518 = vld [vmem:[%s442 + $0xe0] sm:$0xff]
        %v519 = vld [vmem:[%s442 + $0xe8] sm:$0xff]
        %v520 = vld [vmem:[%s442 + $0xf0] sm:$0xff]
        %v521 = vld [vmem:[%s442 + $0xf8] sm:$0xff]
        %v522 = vld [vmem:[%s1] sm:$0xff]
        %v523 = vld [vmem:[%s1 + $0x8] sm:$0xff]
        %v524 = vld [vmem:[%s2] sm:$0xff]
        %v525 = vld [vmem:[%s2 + $0x8] sm:$0xff]
        %527 = vset.pattern.permute.xlu0 0
        %528 = vperm.xlu0 %527, %v524
        %v529 = vpop.permute.xlu0 %528
        %532 = vset.pattern.permute.xlu0 0
        %533 = vperm.xlu0 %532, %v525
        %v534 = vpop.permute.xlu0 %533
        %vm536 = vcmask 130048
        %v538 = vsel %vm536, %v522, 0
        %v541 = vsel %vm536, %v523, 0
        %543 = vmatpush.msra.mxu0 0.0
        %544 = vmatpush.msra.mxu0 0.0
        %545 = vmatpush.msra.mxu0 0.0
        %546 = vmatpush.msra.mxu0 0.0
        %547 = vmatpush.msra.mxu0 0.0
        %548 = vmatpush.msra.mxu0 0.0
        %549 = vmatpush.msra.mxu0 0.0
        %550 = vmatpush.msra.mxu0 0.0
        %551 = vmatpush.msra.mxu0 0.0
        %552 = vmatpush.msra.mxu0 0.0
        %553 = vmatpush.msra.mxu0 0.0
        %554 = vmatpush.msra.mxu0 0.0
        %555 = vmatpush.msra.mxu0 0.0
        %556 = vmatpush.msra.mxu0 0.0
        %557 = vmatpush.msra.mxu0 %v506
        %558 = vmatpush.msra.mxu0 %v490
        %559 = vmatmul.f32.gmra.mxu0 %v538
        %v560 = vpop.f32.mrf.mxu0
        %v561 = vadd.f32 %v529, %v560
        %562 = vmatmul.f32.gmra.mxu0 %v541
        %v563 = vpop.f32.mrf.mxu0
        %v564 = vadd.f32 %v534, %v563
        %565 = vdwg.mxu0
        %566 = vmatpush.msra.mxu0 0.0
        %567 = vmatpush.msra.mxu0 0.0
        %568 = vmatpush.msra.mxu0 0.0
        %569 = vmatpush.msra.mxu0 0.0
        %570 = vmatpush.msra.mxu0 0.0
        %571 = vmatpush.msra.mxu0 0.0
        %572 = vmatpush.msra.mxu0 0.0
        %573 = vmatpush.msra.mxu0 0.0
        %574 = vmatpush.msra.mxu0 0.0
        %575 = vmatpush.msra.mxu0 0.0
        %576 = vmatpush.msra.mxu0 0.0
        %577 = vmatpush.msra.mxu0 0.0
        %578 = vmatpush.msra.mxu0 0.0
        %579 = vmatpush.msra.mxu0 0.0
        %580 = vmatpush.msra.mxu0 %v507
        %581 = vmatpush.msra.mxu0 %v491
        %582 = vmatmul.f32.gmra.mxu0 %v538
        %v583 = vpop.f32.mrf.mxu0
        %v584 = vadd.f32 %v529, %v583
        %585 = vmatmul.f32.gmra.mxu0 %v541
        %v586 = vpop.f32.mrf.mxu0
        %v587 = vadd.f32 %v534, %v586
        %588 = vdwg.mxu0
        %589 = vmatpush.msra.mxu0 0.0
        %590 = vmatpush.msra.mxu0 0.0
        %591 = vmatpush.msra.mxu0 0.0
        %592 = vmatpush.msra.mxu0 0.0
        %593 = vmatpush.msra.mxu0 0.0
        %594 = vmatpush.msra.mxu0 0.0
        %595 = vmatpush.msra.mxu0 0.0
        %596 = vmatpush.msra.mxu0 0.0
        %597 = vmatpush.msra.mxu0 0.0
        %598 = vmatpush.msra.mxu0 0.0
        %599 = vmatpush.msra.mxu0 0.0
        %600 = vmatpush.msra.mxu0 0.0
        %601 = vmatpush.msra.mxu0 0.0
        %602 = vmatpush.msra.mxu0 0.0
        %603 = vmatpush.msra.mxu0 %v508
        %604 = vmatpush.msra.mxu0 %v492
        %605 = vmatmul.f32.gmra.mxu0 %v538
        %v606 = vpop.f32.mrf.mxu0
        %v607 = vadd.f32 %v529, %v606
        %608 = vmatmul.f32.gmra.mxu0 %v541
        %v609 = vpop.f32.mrf.mxu0
        %v610 = vadd.f32 %v534, %v609
        %611 = vdwg.mxu0
        %612 = vmatpush.msra.mxu0 0.0
        %613 = vmatpush.msra.mxu0 0.0
        %614 = vmatpush.msra.mxu0 0.0
        %615 = vmatpush.msra.mxu0 0.0
        %616 = vmatpush.msra.mxu0 0.0
        %617 = vmatpush.msra.mxu0 0.0
        %618 = vmatpush.msra.mxu0 0.0
        %619 = vmatpush.msra.mxu0 0.0
        %620 = vmatpush.msra.mxu0 0.0
        %621 = vmatpush.msra.mxu0 0.0
        %622 = vmatpush.msra.mxu0 0.0
        %623 = vmatpush.msra.mxu0 0.0
        %624 = vmatpush.msra.mxu0 0.0
        %625 = vmatpush.msra.mxu0 0.0
        %626 = vmatpush.msra.mxu0 %v509
        %627 = vmatpush.msra.mxu0 %v493
        %628 = vmatmul.f32.gmra.mxu0 %v538
        %v629 = vpop.f32.mrf.mxu0
        %v630 = vadd.f32 %v529, %v629
        %631 = vmatmul.f32.gmra.mxu0 %v541
        %v632 = vpop.f32.mrf.mxu0
        %v633 = vadd.f32 %v534, %v632
        %634 = vdwg.mxu0
        %635 = vmatpush.msra.mxu0 0.0
        %636 = vmatpush.msra.mxu0 0.0
        %637 = vmatpush.msra.mxu0 0.0
        %638 = vmatpush.msra.mxu0 0.0
        %639 = vmatpush.msra.mxu0 0.0
        %640 = vmatpush.msra.mxu0 0.0
        %641 = vmatpush.msra.mxu0 0.0
        %642 = vmatpush.msra.mxu0 0.0
        %643 = vmatpush.msra.mxu0 0.0
        %644 = vmatpush.msra.mxu0 0.0
        %645 = vmatpush.msra.mxu0 0.0
        %646 = vmatpush.msra.mxu0 0.0
        %647 = vmatpush.msra.mxu0 0.0
        %648 = vmatpush.msra.mxu0 0.0
        %649 = vmatpush.msra.mxu0 %v510
        %650 = vmatpush.msra.mxu0 %v494
        %651 = vmatmul.f32.gmra.mxu0 %v538
        %v652 = vpop.f32.mrf.mxu0
        %v653 = vadd.f32 %v529, %v652
        %654 = vmatmul.f32.gmra.mxu0 %v541
        %v655 = vpop.f32.mrf.mxu0
        %v656 = vadd.f32 %v534, %v655
        %657 = vdwg.mxu0
        %658 = vmatpush.msra.mxu0 0.0
        %659 = vmatpush.msra.mxu0 0.0
        %660 = vmatpush.msra.mxu0 0.0
        %661 = vmatpush.msra.mxu0 0.0
        %662 = vmatpush.msra.mxu0 0.0
        %663 = vmatpush.msra.mxu0 0.0
        %664 = vmatpush.msra.mxu0 0.0
        %665 = vmatpush.msra.mxu0 0.0
        %666 = vmatpush.msra.mxu0 0.0
        %667 = vmatpush.msra.mxu0 0.0
        %668 = vmatpush.msra.mxu0 0.0
        %669 = vmatpush.msra.mxu0 0.0
        %670 = vmatpush.msra.mxu0 0.0
        %671 = vmatpush.msra.mxu0 0.0
        %672 = vmatpush.msra.mxu0 %v511
        %673 = vmatpush.msra.mxu0 %v495
        %674 = vmatmul.f32.gmra.mxu0 %v538
        %v675 = vpop.f32.mrf.mxu0
        %v676 = vadd.f32 %v529, %v675
        %677 = vmatmul.f32.gmra.mxu0 %v541
        %v678 = vpop.f32.mrf.mxu0
        %v679 = vadd.f32 %v534, %v678
        %680 = vdwg.mxu0
        %681 = vmatpush.msra.mxu0 0.0
        %682 = vmatpush.msra.mxu0 0.0
        %683 = vmatpush.msra.mxu0 0.0
        %684 = vmatpush.msra.mxu0 0.0
        %685 = vmatpush.msra.mxu0 0.0
        %686 = vmatpush.msra.mxu0 0.0
        %687 = vmatpush.msra.mxu0 0.0
        %688 = vmatpush.msra.mxu0 0.0
        %689 = vmatpush.msra.mxu0 0.0
        %690 = vmatpush.msra.mxu0 0.0
        %691 = vmatpush.msra.mxu0 0.0
        %692 = vmatpush.msra.mxu0 0.0
        %693 = vmatpush.msra.mxu0 0.0
        %694 = vmatpush.msra.mxu0 0.0
        %695 = vmatpush.msra.mxu0 %v512
        %696 = vmatpush.msra.mxu0 %v496
        %697 = vmatmul.f32.gmra.mxu0 %v538
        %v698 = vpop.f32.mrf.mxu0
        %v699 = vadd.f32 %v529, %v698
        %700 = vmatmul.f32.gmra.mxu0 %v541
        %v701 = vpop.f32.mrf.mxu0
        %v702 = vadd.f32 %v534, %v701
        %703 = vdwg.mxu0
        %704 = vmatpush.msra.mxu0 0.0
        %705 = vmatpush.msra.mxu0 0.0
        %706 = vmatpush.msra.mxu0 0.0
        %707 = vmatpush.msra.mxu0 0.0
        %708 = vmatpush.msra.mxu0 0.0
        %709 = vmatpush.msra.mxu0 0.0
        %710 = vmatpush.msra.mxu0 0.0
        %711 = vmatpush.msra.mxu0 0.0
        %712 = vmatpush.msra.mxu0 0.0
        %713 = vmatpush.msra.mxu0 0.0
        %714 = vmatpush.msra.mxu0 0.0
        %715 = vmatpush.msra.mxu0 0.0
        %716 = vmatpush.msra.mxu0 0.0
        %717 = vmatpush.msra.mxu0 0.0
        %718 = vmatpush.msra.mxu0 %v513
        %719 = vmatpush.msra.mxu0 %v497
        %720 = vmatmul.f32.gmra.mxu0 %v538
        %v721 = vpop.f32.mrf.mxu0
        %v722 = vadd.f32 %v529, %v721
        %723 = vmatmul.f32.gmra.mxu0 %v541
        %v724 = vpop.f32.mrf.mxu0
        %v725 = vadd.f32 %v534, %v724
        %726 = vdwg.mxu0
        %727 = vmatpush.msra.mxu0 0.0
        %728 = vmatpush.msra.mxu0 0.0
        %729 = vmatpush.msra.mxu0 0.0
        %730 = vmatpush.msra.mxu0 0.0
        %731 = vmatpush.msra.mxu0 0.0
        %732 = vmatpush.msra.mxu0 0.0
        %733 = vmatpush.msra.mxu0 0.0
        %734 = vmatpush.msra.mxu0 0.0
        %735 = vmatpush.msra.mxu0 0.0
        %736 = vmatpush.msra.mxu0 0.0
        %737 = vmatpush.msra.mxu0 0.0
        %738 = vmatpush.msra.mxu0 0.0
        %739 = vmatpush.msra.mxu0 0.0
        %740 = vmatpush.msra.mxu0 0.0
        %741 = vmatpush.msra.mxu0 %v514
        %742 = vmatpush.msra.mxu0 %v498
        %743 = vmatmul.f32.gmra.mxu0 %v538
        %v744 = vpop.f32.mrf.mxu0
        %v745 = vadd.f32 %v529, %v744
        %746 = vmatmul.f32.gmra.mxu0 %v541
        %v747 = vpop.f32.mrf.mxu0
        %v748 = vadd.f32 %v534, %v747
        %749 = vdwg.mxu0
        %750 = vmatpush.msra.mxu0 0.0
        %751 = vmatpush.msra.mxu0 0.0
        %752 = vmatpush.msra.mxu0 0.0
        %753 = vmatpush.msra.mxu0 0.0
        %754 = vmatpush.msra.mxu0 0.0
        %755 = vmatpush.msra.mxu0 0.0
        %756 = vmatpush.msra.mxu0 0.0
        %757 = vmatpush.msra.mxu0 0.0
        %758 = vmatpush.msra.mxu0 0.0
        %759 = vmatpush.msra.mxu0 0.0
        %760 = vmatpush.msra.mxu0 0.0
        %761 = vmatpush.msra.mxu0 0.0
        %762 = vmatpush.msra.mxu0 0.0
        %763 = vmatpush.msra.mxu0 0.0
        %764 = vmatpush.msra.mxu0 %v515
        %765 = vmatpush.msra.mxu0 %v499
        %766 = vmatmul.f32.gmra.mxu0 %v538
        %v767 = vpop.f32.mrf.mxu0
        %v768 = vadd.f32 %v529, %v767
        %769 = vmatmul.f32.gmra.mxu0 %v541
        %v770 = vpop.f32.mrf.mxu0
        %v771 = vadd.f32 %v534, %v770
        %772 = vdwg.mxu0
        %773 = vmatpush.msra.mxu0 0.0
        %774 = vmatpush.msra.mxu0 0.0
        %775 = vmatpush.msra.mxu0 0.0
        %776 = vmatpush.msra.mxu0 0.0
        %777 = vmatpush.msra.mxu0 0.0
        %778 = vmatpush.msra.mxu0 0.0
        %779 = vmatpush.msra.mxu0 0.0
        %780 = vmatpush.msra.mxu0 0.0
        %781 = vmatpush.msra.mxu0 0.0
        %782 = vmatpush.msra.mxu0 0.0
        %783 = vmatpush.msra.mxu0 0.0
        %784 = vmatpush.msra.mxu0 0.0
        %785 = vmatpush.msra.mxu0 0.0
        %786 = vmatpush.msra.mxu0 0.0
        %787 = vmatpush.msra.mxu0 %v516
        %788 = vmatpush.msra.mxu0 %v500
        %789 = vmatmul.f32.gmra.mxu0 %v538
        %v790 = vpop.f32.mrf.mxu0
        %v791 = vadd.f32 %v529, %v790
        %792 = vmatmul.f32.gmra.mxu0 %v541
        %v793 = vpop.f32.mrf.mxu0
        %v794 = vadd.f32 %v534, %v793
        %795 = vdwg.mxu0
        %796 = vmatpush.msra.mxu0 0.0
        %797 = vmatpush.msra.mxu0 0.0
        %798 = vmatpush.msra.mxu0 0.0
        %799 = vmatpush.msra.mxu0 0.0
        %800 = vmatpush.msra.mxu0 0.0
        %801 = vmatpush.msra.mxu0 0.0
        %802 = vmatpush.msra.mxu0 0.0
        %803 = vmatpush.msra.mxu0 0.0
        %804 = vmatpush.msra.mxu0 0.0
        %805 = vmatpush.msra.mxu0 0.0
        %806 = vmatpush.msra.mxu0 0.0
        %807 = vmatpush.msra.mxu0 0.0
        %808 = vmatpush.msra.mxu0 0.0
        %809 = vmatpush.msra.mxu0 0.0
        %810 = vmatpush.msra.mxu0 %v517
        %811 = vmatpush.msra.mxu0 %v501
        %812 = vmatmul.f32.gmra.mxu0 %v538
        %v813 = vpop.f32.mrf.mxu0
        %v814 = vadd.f32 %v529, %v813
        %815 = vmatmul.f32.gmra.mxu0 %v541
        %v816 = vpop.f32.mrf.mxu0
        %v817 = vadd.f32 %v534, %v816
        %818 = vdwg.mxu0
        %819 = vmatpush.msra.mxu0 0.0
        %820 = vmatpush.msra.mxu0 0.0
        %821 = vmatpush.msra.mxu0 0.0
        %822 = vmatpush.msra.mxu0 0.0
        %823 = vmatpush.msra.mxu0 0.0
        %824 = vmatpush.msra.mxu0 0.0
        %825 = vmatpush.msra.mxu0 0.0
        %826 = vmatpush.msra.mxu0 0.0
        %827 = vmatpush.msra.mxu0 0.0
        %828 = vmatpush.msra.mxu0 0.0
        %829 = vmatpush.msra.mxu0 0.0
        %830 = vmatpush.msra.mxu0 0.0
        %831 = vmatpush.msra.mxu0 0.0
        %832 = vmatpush.msra.mxu0 0.0
        %833 = vmatpush.msra.mxu0 %v518
        %834 = vmatpush.msra.mxu0 %v502
        %835 = vmatmul.f32.gmra.mxu0 %v538
        %v836 = vpop.f32.mrf.mxu0
        %v837 = vadd.f32 %v529, %v836
        %838 = vmatmul.f32.gmra.mxu0 %v541
        %v839 = vpop.f32.mrf.mxu0
        %v840 = vadd.f32 %v534, %v839
        %841 = vdwg.mxu0
        %842 = vmatpush.msra.mxu0 0.0
        %843 = vmatpush.msra.mxu0 0.0
        %844 = vmatpush.msra.mxu0 0.0
        %845 = vmatpush.msra.mxu0 0.0
        %846 = vmatpush.msra.mxu0 0.0
        %847 = vmatpush.msra.mxu0 0.0
        %848 = vmatpush.msra.mxu0 0.0
        %849 = vmatpush.msra.mxu0 0.0
        %850 = vmatpush.msra.mxu0 0.0
        %851 = vmatpush.msra.mxu0 0.0
        %852 = vmatpush.msra.mxu0 0.0
        %853 = vmatpush.msra.mxu0 0.0
        %854 = vmatpush.msra.mxu0 0.0
        %855 = vmatpush.msra.mxu0 0.0
        %856 = vmatpush.msra.mxu0 %v519
        %857 = vmatpush.msra.mxu0 %v503
        %858 = vmatmul.f32.gmra.mxu0 %v538
        %v859 = vpop.f32.mrf.mxu0
        %v860 = vadd.f32 %v529, %v859
        %861 = vmatmul.f32.gmra.mxu0 %v541
        %v862 = vpop.f32.mrf.mxu0
        %v863 = vadd.f32 %v534, %v862
        %864 = vdwg.mxu0
        %865 = vmatpush.msra.mxu0 0.0
        %866 = vmatpush.msra.mxu0 0.0
        %867 = vmatpush.msra.mxu0 0.0
        %868 = vmatpush.msra.mxu0 0.0
        %869 = vmatpush.msra.mxu0 0.0
        %870 = vmatpush.msra.mxu0 0.0
        %871 = vmatpush.msra.mxu0 0.0
        %872 = vmatpush.msra.mxu0 0.0
        %873 = vmatpush.msra.mxu0 0.0
        %874 = vmatpush.msra.mxu0 0.0
        %875 = vmatpush.msra.mxu0 0.0
        %876 = vmatpush.msra.mxu0 0.0
        %877 = vmatpush.msra.mxu0 0.0
        %878 = vmatpush.msra.mxu0 0.0
        %879 = vmatpush.msra.mxu0 %v520
        %880 = vmatpush.msra.mxu0 %v504
        %881 = vmatmul.f32.gmra.mxu0 %v538
        %v882 = vpop.f32.mrf.mxu0
        %v883 = vadd.f32 %v529, %v882
        %884 = vmatmul.f32.gmra.mxu0 %v541
        %v885 = vpop.f32.mrf.mxu0
        %v886 = vadd.f32 %v534, %v885
        %887 = vdwg.mxu0
        %888 = vmatpush.msra.mxu0 0.0
        %889 = vmatpush.msra.mxu0 0.0
        %890 = vmatpush.msra.mxu0 0.0
        %891 = vmatpush.msra.mxu0 0.0
        %892 = vmatpush.msra.mxu0 0.0
        %893 = vmatpush.msra.mxu0 0.0
        %894 = vmatpush.msra.mxu0 0.0
        %895 = vmatpush.msra.mxu0 0.0
        %896 = vmatpush.msra.mxu0 0.0
        %897 = vmatpush.msra.mxu0 0.0
        %898 = vmatpush.msra.mxu0 0.0
        %899 = vmatpush.msra.mxu0 0.0
        %900 = vmatpush.msra.mxu0 0.0
        %901 = vmatpush.msra.mxu0 0.0
        %902 = vmatpush.msra.mxu0 %v521
        %903 = vmatpush.msra.mxu0 %v505
        %904 = vmatmul.f32.gmra.mxu0 %v538
        %v905 = vpop.f32.mrf.mxu0
        %v906 = vadd.f32 %v529, %v905
        %907 = vmatmul.f32.gmra.mxu0 %v541
        %v908 = vpop.f32.mrf.mxu0
        %v909 = vadd.f32 %v534, %v908
        %910 = vdwg.mxu0
        %v911 = vmax.f32 %v561, 0.0
        %v912 = vmax.f32 %v584, 0.0
        %v913 = vmax.f32 %v607, 0.0
        %v914 = vmax.f32 %v630, 0.0
        %v915 = vmax.f32 %v653, 0.0
        %v916 = vmax.f32 %v676, 0.0
        %v917 = vmax.f32 %v699, 0.0
        %v918 = vmax.f32 %v722, 0.0
        %v919 = vmax.f32 %v745, 0.0
        %v920 = vmax.f32 %v768, 0.0
        %v921 = vmax.f32 %v791, 0.0
        %v922 = vmax.f32 %v814, 0.0
        %v923 = vmax.f32 %v837, 0.0
        %v924 = vmax.f32 %v860, 0.0
        %v925 = vmax.f32 %v883, 0.0
        %v926 = vmax.f32 %v906, 0.0
        %v927 = vmax.f32 %v564, 0.0
        %v928 = vmax.f32 %v587, 0.0
        %v929 = vmax.f32 %v610, 0.0
        %v930 = vmax.f32 %v633, 0.0
        %v931 = vmax.f32 %v656, 0.0
        %v932 = vmax.f32 %v679, 0.0
        %v933 = vmax.f32 %v702, 0.0
        %v934 = vmax.f32 %v725, 0.0
        %v935 = vmax.f32 %v748, 0.0
        %v936 = vmax.f32 %v771, 0.0
        %v937 = vmax.f32 %v794, 0.0
        %v938 = vmax.f32 %v817, 0.0
        %v939 = vmax.f32 %v840, 0.0
        %v940 = vmax.f32 %v863, 0.0
        %v941 = vmax.f32 %v886, 0.0
        %v942 = vmax.f32 %v909, 0.0
        %v943 = vld [vmem:[%s3] sm:$0xff]
        %v944 = vld [vmem:[%s3 + $0x8] sm:$0xff]
        %v945 = vld [vmem:[%s4] sm:$0xff]
        %v946 = vld [vmem:[%s4 + $0x8] sm:$0xff]
        %948 = vset.pattern.permute.xlu0 0
        %949 = vperm.xlu0 %948, %v945
        %v950 = vpop.permute.xlu0 %949
        %953 = vset.pattern.permute.xlu0 0
        %954 = vperm.xlu0 %953, %v946
        %v955 = vpop.permute.xlu0 %954
        %v958 = vsel %vm536, %v943, 0
        %v961 = vsel %vm536, %v944, 0
        %963 = vmatpush.msra.mxu0 0.0
        %964 = vmatpush.msra.mxu0 0.0
        %965 = vmatpush.msra.mxu0 0.0
        %966 = vmatpush.msra.mxu0 0.0
        %967 = vmatpush.msra.mxu0 0.0
        %968 = vmatpush.msra.mxu0 0.0
        %969 = vmatpush.msra.mxu0 0.0
        %970 = vmatpush.msra.mxu0 0.0
        %971 = vmatpush.msra.mxu0 0.0
        %972 = vmatpush.msra.mxu0 0.0
        %973 = vmatpush.msra.mxu0 0.0
        %974 = vmatpush.msra.mxu0 0.0
        %975 = vmatpush.msra.mxu0 0.0
        %976 = vmatpush.msra.mxu0 0.0
        %977 = vmatpush.msra.mxu0 %v927
        %978 = vmatpush.msra.mxu0 %v911
        %979 = vmatmul.f32.gmra.mxu0 %v958
        %v980 = vpop.f32.mrf.mxu0
        %v981 = vadd.f32 %v950, %v980
        %982 = vmatmul.f32.gmra.mxu0 %v961
        %v983 = vpop.f32.mrf.mxu0
        %v984 = vadd.f32 %v955, %v983
        %985 = vdwg.mxu0
        %986 = vmatpush.msra.mxu0 0.0
        %987 = vmatpush.msra.mxu0 0.0
        %988 = vmatpush.msra.mxu0 0.0
        %989 = vmatpush.msra.mxu0 0.0
        %990 = vmatpush.msra.mxu0 0.0
        %991 = vmatpush.msra.mxu0 0.0
        %992 = vmatpush.msra.mxu0 0.0
        %993 = vmatpush.msra.mxu0 0.0
        %994 = vmatpush.msra.mxu0 0.0
        %995 = vmatpush.msra.mxu0 0.0
        %996 = vmatpush.msra.mxu0 0.0
        %997 = vmatpush.msra.mxu0 0.0
        %998 = vmatpush.msra.mxu0 0.0
        %999 = vmatpush.msra.mxu0 0.0
        %1000 = vmatpush.msra.mxu0 %v928
        %1001 = vmatpush.msra.mxu0 %v912
        %1002 = vmatmul.f32.gmra.mxu0 %v958
        %v1003 = vpop.f32.mrf.mxu0
        %v1004 = vadd.f32 %v950, %v1003
        %1005 = vmatmul.f32.gmra.mxu0 %v961
        %v1006 = vpop.f32.mrf.mxu0
        %v1007 = vadd.f32 %v955, %v1006
        %1008 = vdwg.mxu0
        %1009 = vmatpush.msra.mxu0 0.0
        %1010 = vmatpush.msra.mxu0 0.0
        %1011 = vmatpush.msra.mxu0 0.0
        %1012 = vmatpush.msra.mxu0 0.0
        %1013 = vmatpush.msra.mxu0 0.0
        %1014 = vmatpush.msra.mxu0 0.0
        %1015 = vmatpush.msra.mxu0 0.0
        %1016 = vmatpush.msra.mxu0 0.0
        %1017 = vmatpush.msra.mxu0 0.0
        %1018 = vmatpush.msra.mxu0 0.0
        %1019 = vmatpush.msra.mxu0 0.0
        %1020 = vmatpush.msra.mxu0 0.0
        %1021 = vmatpush.msra.mxu0 0.0
        %1022 = vmatpush.msra.mxu0 0.0
        %1023 = vmatpush.msra.mxu0 %v929
        %1024 = vmatpush.msra.mxu0 %v913
        %1025 = vmatmul.f32.gmra.mxu0 %v958
        %v1026 = vpop.f32.mrf.mxu0
        %v1027 = vadd.f32 %v950, %v1026
        %1028 = vmatmul.f32.gmra.mxu0 %v961
        %v1029 = vpop.f32.mrf.mxu0
        %v1030 = vadd.f32 %v955, %v1029
        %1031 = vdwg.mxu0
        %1032 = vmatpush.msra.mxu0 0.0
        %1033 = vmatpush.msra.mxu0 0.0
        %1034 = vmatpush.msra.mxu0 0.0
        %1035 = vmatpush.msra.mxu0 0.0
        %1036 = vmatpush.msra.mxu0 0.0
        %1037 = vmatpush.msra.mxu0 0.0
        %1038 = vmatpush.msra.mxu0 0.0
        %1039 = vmatpush.msra.mxu0 0.0
        %1040 = vmatpush.msra.mxu0 0.0
        %1041 = vmatpush.msra.mxu0 0.0
        %1042 = vmatpush.msra.mxu0 0.0
        %1043 = vmatpush.msra.mxu0 0.0
        %1044 = vmatpush.msra.mxu0 0.0
        %1045 = vmatpush.msra.mxu0 0.0
        %1046 = vmatpush.msra.mxu0 %v930
        %1047 = vmatpush.msra.mxu0 %v914
        %1048 = vmatmul.f32.gmra.mxu0 %v958
        %v1049 = vpop.f32.mrf.mxu0
        %v1050 = vadd.f32 %v950, %v1049
        %1051 = vmatmul.f32.gmra.mxu0 %v961
        %v1052 = vpop.f32.mrf.mxu0
        %v1053 = vadd.f32 %v955, %v1052
        %1054 = vdwg.mxu0
        %1055 = vmatpush.msra.mxu0 0.0
        %1056 = vmatpush.msra.mxu0 0.0
        %1057 = vmatpush.msra.mxu0 0.0
        %1058 = vmatpush.msra.mxu0 0.0
        %1059 = vmatpush.msra.mxu0 0.0
        %1060 = vmatpush.msra.mxu0 0.0
        %1061 = vmatpush.msra.mxu0 0.0
        %1062 = vmatpush.msra.mxu0 0.0
        %1063 = vmatpush.msra.mxu0 0.0
        %1064 = vmatpush.msra.mxu0 0.0
        %1065 = vmatpush.msra.mxu0 0.0
        %1066 = vmatpush.msra.mxu0 0.0
        %1067 = vmatpush.msra.mxu0 0.0
        %1068 = vmatpush.msra.mxu0 0.0
        %1069 = vmatpush.msra.mxu0 %v931
        %1070 = vmatpush.msra.mxu0 %v915
        %1071 = vmatmul.f32.gmra.mxu0 %v958
        %v1072 = vpop.f32.mrf.mxu0
        %v1073 = vadd.f32 %v950, %v1072
        %1074 = vmatmul.f32.gmra.mxu0 %v961
        %v1075 = vpop.f32.mrf.mxu0
        %v1076 = vadd.f32 %v955, %v1075
        %1077 = vdwg.mxu0
        %1078 = vmatpush.msra.mxu0 0.0
        %1079 = vmatpush.msra.mxu0 0.0
        %1080 = vmatpush.msra.mxu0 0.0
        %1081 = vmatpush.msra.mxu0 0.0
        %1082 = vmatpush.msra.mxu0 0.0
        %1083 = vmatpush.msra.mxu0 0.0
        %1084 = vmatpush.msra.mxu0 0.0
        %1085 = vmatpush.msra.mxu0 0.0
        %1086 = vmatpush.msra.mxu0 0.0
        %1087 = vmatpush.msra.mxu0 0.0
        %1088 = vmatpush.msra.mxu0 0.0
        %1089 = vmatpush.msra.mxu0 0.0
        %1090 = vmatpush.msra.mxu0 0.0
        %1091 = vmatpush.msra.mxu0 0.0
        %1092 = vmatpush.msra.mxu0 %v932
        %1093 = vmatpush.msra.mxu0 %v916
        %1094 = vmatmul.f32.gmra.mxu0 %v958
        %v1095 = vpop.f32.mrf.mxu0
        %v1096 = vadd.f32 %v950, %v1095
        %1097 = vmatmul.f32.gmra.mxu0 %v961
        %v1098 = vpop.f32.mrf.mxu0
        %v1099 = vadd.f32 %v955, %v1098
        %1100 = vdwg.mxu0
        %1101 = vmatpush.msra.mxu0 0.0
        %1102 = vmatpush.msra.mxu0 0.0
        %1103 = vmatpush.msra.mxu0 0.0
        %1104 = vmatpush.msra.mxu0 0.0
        %1105 = vmatpush.msra.mxu0 0.0
        %1106 = vmatpush.msra.mxu0 0.0
        %1107 = vmatpush.msra.mxu0 0.0
        %1108 = vmatpush.msra.mxu0 0.0
        %1109 = vmatpush.msra.mxu0 0.0
        %1110 = vmatpush.msra.mxu0 0.0
        %1111 = vmatpush.msra.mxu0 0.0
        %1112 = vmatpush.msra.mxu0 0.0
        %1113 = vmatpush.msra.mxu0 0.0
        %1114 = vmatpush.msra.mxu0 0.0
        %1115 = vmatpush.msra.mxu0 %v933
        %1116 = vmatpush.msra.mxu0 %v917
        %1117 = vmatmul.f32.gmra.mxu0 %v958
        %v1118 = vpop.f32.mrf.mxu0
        %v1119 = vadd.f32 %v950, %v1118
        %1120 = vmatmul.f32.gmra.mxu0 %v961
        %v1121 = vpop.f32.mrf.mxu0
        %v1122 = vadd.f32 %v955, %v1121
        %1123 = vdwg.mxu0
        %1124 = vmatpush.msra.mxu0 0.0
        %1125 = vmatpush.msra.mxu0 0.0
        %1126 = vmatpush.msra.mxu0 0.0
        %1127 = vmatpush.msra.mxu0 0.0
        %1128 = vmatpush.msra.mxu0 0.0
        %1129 = vmatpush.msra.mxu0 0.0
        %1130 = vmatpush.msra.mxu0 0.0
        %1131 = vmatpush.msra.mxu0 0.0
        %1132 = vmatpush.msra.mxu0 0.0
        %1133 = vmatpush.msra.mxu0 0.0
        %1134 = vmatpush.msra.mxu0 0.0
        %1135 = vmatpush.msra.mxu0 0.0
        %1136 = vmatpush.msra.mxu0 0.0
        %1137 = vmatpush.msra.mxu0 0.0
        %1138 = vmatpush.msra.mxu0 %v934
        %1139 = vmatpush.msra.mxu0 %v918
        %1140 = vmatmul.f32.gmra.mxu0 %v958
        %v1141 = vpop.f32.mrf.mxu0
        %v1142 = vadd.f32 %v950, %v1141
        %1143 = vmatmul.f32.gmra.mxu0 %v961
        %v1144 = vpop.f32.mrf.mxu0
        %v1145 = vadd.f32 %v955, %v1144
        %1146 = vdwg.mxu0
        %1147 = vmatpush.msra.mxu0 0.0
        %1148 = vmatpush.msra.mxu0 0.0
        %1149 = vmatpush.msra.mxu0 0.0
        %1150 = vmatpush.msra.mxu0 0.0
        %1151 = vmatpush.msra.mxu0 0.0
        %1152 = vmatpush.msra.mxu0 0.0
        %1153 = vmatpush.msra.mxu0 0.0
        %1154 = vmatpush.msra.mxu0 0.0
        %1155 = vmatpush.msra.mxu0 0.0
        %1156 = vmatpush.msra.mxu0 0.0
        %1157 = vmatpush.msra.mxu0 0.0
        %1158 = vmatpush.msra.mxu0 0.0
        %1159 = vmatpush.msra.mxu0 0.0
        %1160 = vmatpush.msra.mxu0 0.0
        %1161 = vmatpush.msra.mxu0 %v935
        %1162 = vmatpush.msra.mxu0 %v919
        %1163 = vmatmul.f32.gmra.mxu0 %v958
        %v1164 = vpop.f32.mrf.mxu0
        %v1165 = vadd.f32 %v950, %v1164
        %1166 = vmatmul.f32.gmra.mxu0 %v961
        %v1167 = vpop.f32.mrf.mxu0
        %v1168 = vadd.f32 %v955, %v1167
        %1169 = vdwg.mxu0
        %1170 = vmatpush.msra.mxu0 0.0
        %1171 = vmatpush.msra.mxu0 0.0
        %1172 = vmatpush.msra.mxu0 0.0
        %1173 = vmatpush.msra.mxu0 0.0
        %1174 = vmatpush.msra.mxu0 0.0
        %1175 = vmatpush.msra.mxu0 0.0
        %1176 = vmatpush.msra.mxu0 0.0
        %1177 = vmatpush.msra.mxu0 0.0
        %1178 = vmatpush.msra.mxu0 0.0
        %1179 = vmatpush.msra.mxu0 0.0
        %1180 = vmatpush.msra.mxu0 0.0
        %1181 = vmatpush.msra.mxu0 0.0
        %1182 = vmatpush.msra.mxu0 0.0
        %1183 = vmatpush.msra.mxu0 0.0
        %1184 = vmatpush.msra.mxu0 %v936
        %1185 = vmatpush.msra.mxu0 %v920
        %1186 = vmatmul.f32.gmra.mxu0 %v958
        %v1187 = vpop.f32.mrf.mxu0
        %v1188 = vadd.f32 %v950, %v1187
        %1189 = vmatmul.f32.gmra.mxu0 %v961
        %v1190 = vpop.f32.mrf.mxu0
        %v1191 = vadd.f32 %v955, %v1190
        %1192 = vdwg.mxu0
        %1193 = vmatpush.msra.mxu0 0.0
        %1194 = vmatpush.msra.mxu0 0.0
        %1195 = vmatpush.msra.mxu0 0.0
        %1196 = vmatpush.msra.mxu0 0.0
        %1197 = vmatpush.msra.mxu0 0.0
        %1198 = vmatpush.msra.mxu0 0.0
        %1199 = vmatpush.msra.mxu0 0.0
        %1200 = vmatpush.msra.mxu0 0.0
        %1201 = vmatpush.msra.mxu0 0.0
        %1202 = vmatpush.msra.mxu0 0.0
        %1203 = vmatpush.msra.mxu0 0.0
        %1204 = vmatpush.msra.mxu0 0.0
        %1205 = vmatpush.msra.mxu0 0.0
        %1206 = vmatpush.msra.mxu0 0.0
        %1207 = vmatpush.msra.mxu0 %v937
        %1208 = vmatpush.msra.mxu0 %v921
        %1209 = vmatmul.f32.gmra.mxu0 %v958
        %v1210 = vpop.f32.mrf.mxu0
        %v1211 = vadd.f32 %v950, %v1210
        %1212 = vmatmul.f32.gmra.mxu0 %v961
        %v1213 = vpop.f32.mrf.mxu0
        %v1214 = vadd.f32 %v955, %v1213
        %1215 = vdwg.mxu0
        %1216 = vmatpush.msra.mxu0 0.0
        %1217 = vmatpush.msra.mxu0 0.0
        %1218 = vmatpush.msra.mxu0 0.0
        %1219 = vmatpush.msra.mxu0 0.0
        %1220 = vmatpush.msra.mxu0 0.0
        %1221 = vmatpush.msra.mxu0 0.0
        %1222 = vmatpush.msra.mxu0 0.0
        %1223 = vmatpush.msra.mxu0 0.0
        %1224 = vmatpush.msra.mxu0 0.0
        %1225 = vmatpush.msra.mxu0 0.0
        %1226 = vmatpush.msra.mxu0 0.0
        %1227 = vmatpush.msra.mxu0 0.0
        %1228 = vmatpush.msra.mxu0 0.0
        %1229 = vmatpush.msra.mxu0 0.0
        %1230 = vmatpush.msra.mxu0 %v938
        %1231 = vmatpush.msra.mxu0 %v922
        %1232 = vmatmul.f32.gmra.mxu0 %v958
        %v1233 = vpop.f32.mrf.mxu0
        %v1234 = vadd.f32 %v950, %v1233
        %1235 = vmatmul.f32.gmra.mxu0 %v961
        %v1236 = vpop.f32.mrf.mxu0
        %v1237 = vadd.f32 %v955, %v1236
        %1238 = vdwg.mxu0
        %1239 = vmatpush.msra.mxu0 0.0
        %1240 = vmatpush.msra.mxu0 0.0
        %1241 = vmatpush.msra.mxu0 0.0
        %1242 = vmatpush.msra.mxu0 0.0
        %1243 = vmatpush.msra.mxu0 0.0
        %1244 = vmatpush.msra.mxu0 0.0
        %1245 = vmatpush.msra.mxu0 0.0
        %1246 = vmatpush.msra.mxu0 0.0
        %1247 = vmatpush.msra.mxu0 0.0
        %1248 = vmatpush.msra.mxu0 0.0
        %1249 = vmatpush.msra.mxu0 0.0
        %1250 = vmatpush.msra.mxu0 0.0
        %1251 = vmatpush.msra.mxu0 0.0
        %1252 = vmatpush.msra.mxu0 0.0
        %1253 = vmatpush.msra.mxu0 %v939
        %1254 = vmatpush.msra.mxu0 %v923
        %1255 = vmatmul.f32.gmra.mxu0 %v958
        %v1256 = vpop.f32.mrf.mxu0
        %v1257 = vadd.f32 %v950, %v1256
        %1258 = vmatmul.f32.gmra.mxu0 %v961
        %v1259 = vpop.f32.mrf.mxu0
        %v1260 = vadd.f32 %v955, %v1259
        %1261 = vdwg.mxu0
        %1262 = vmatpush.msra.mxu0 0.0
        %1263 = vmatpush.msra.mxu0 0.0
        %1264 = vmatpush.msra.mxu0 0.0
        %1265 = vmatpush.msra.mxu0 0.0
        %1266 = vmatpush.msra.mxu0 0.0
        %1267 = vmatpush.msra.mxu0 0.0
        %1268 = vmatpush.msra.mxu0 0.0
        %1269 = vmatpush.msra.mxu0 0.0
        %1270 = vmatpush.msra.mxu0 0.0
        %1271 = vmatpush.msra.mxu0 0.0
        %1272 = vmatpush.msra.mxu0 0.0
        %1273 = vmatpush.msra.mxu0 0.0
        %1274 = vmatpush.msra.mxu0 0.0
        %1275 = vmatpush.msra.mxu0 0.0
        %1276 = vmatpush.msra.mxu0 %v940
        %1277 = vmatpush.msra.mxu0 %v924
        %1278 = vmatmul.f32.gmra.mxu0 %v958
        %v1279 = vpop.f32.mrf.mxu0
        %v1280 = vadd.f32 %v950, %v1279
        %1281 = vmatmul.f32.gmra.mxu0 %v961
        %v1282 = vpop.f32.mrf.mxu0
        %v1283 = vadd.f32 %v955, %v1282
        %1284 = vdwg.mxu0
        %1285 = vmatpush.msra.mxu0 0.0
        %1286 = vmatpush.msra.mxu0 0.0
        %1287 = vmatpush.msra.mxu0 0.0
        %1288 = vmatpush.msra.mxu0 0.0
        %1289 = vmatpush.msra.mxu0 0.0
        %1290 = vmatpush.msra.mxu0 0.0
        %1291 = vmatpush.msra.mxu0 0.0
        %1292 = vmatpush.msra.mxu0 0.0
        %1293 = vmatpush.msra.mxu0 0.0
        %1294 = vmatpush.msra.mxu0 0.0
        %1295 = vmatpush.msra.mxu0 0.0
        %1296 = vmatpush.msra.mxu0 0.0
        %1297 = vmatpush.msra.mxu0 0.0
        %1298 = vmatpush.msra.mxu0 0.0
        %1299 = vmatpush.msra.mxu0 %v941
        %1300 = vmatpush.msra.mxu0 %v925
        %1301 = vmatmul.f32.gmra.mxu0 %v958
        %v1302 = vpop.f32.mrf.mxu0
        %v1303 = vadd.f32 %v950, %v1302
        %1304 = vmatmul.f32.gmra.mxu0 %v961
        %v1305 = vpop.f32.mrf.mxu0
        %v1306 = vadd.f32 %v955, %v1305
        %1307 = vdwg.mxu0
        %1308 = vmatpush.msra.mxu0 0.0
        %1309 = vmatpush.msra.mxu0 0.0
        %1310 = vmatpush.msra.mxu0 0.0
        %1311 = vmatpush.msra.mxu0 0.0
        %1312 = vmatpush.msra.mxu0 0.0
        %1313 = vmatpush.msra.mxu0 0.0
        %1314 = vmatpush.msra.mxu0 0.0
        %1315 = vmatpush.msra.mxu0 0.0
        %1316 = vmatpush.msra.mxu0 0.0
        %1317 = vmatpush.msra.mxu0 0.0
        %1318 = vmatpush.msra.mxu0 0.0
        %1319 = vmatpush.msra.mxu0 0.0
        %1320 = vmatpush.msra.mxu0 0.0
        %1321 = vmatpush.msra.mxu0 0.0
        %1322 = vmatpush.msra.mxu0 %v942
        %1323 = vmatpush.msra.mxu0 %v926
        %1324 = vmatmul.f32.gmra.mxu0 %v958
        %v1325 = vpop.f32.mrf.mxu0
        %v1326 = vadd.f32 %v950, %v1325
        %1327 = vmatmul.f32.gmra.mxu0 %v961
        %v1328 = vpop.f32.mrf.mxu0
        %v1329 = vadd.f32 %v955, %v1328
        %1330 = vdwg.mxu0
        %v1331 = vmax.f32 %v981, 0.0
        %v1332 = vmax.f32 %v1004, 0.0
        %v1333 = vmax.f32 %v1027, 0.0
        %v1334 = vmax.f32 %v1050, 0.0
        %v1335 = vmax.f32 %v1073, 0.0
        %v1336 = vmax.f32 %v1096, 0.0
        %v1337 = vmax.f32 %v1119, 0.0
        %v1338 = vmax.f32 %v1142, 0.0
        %v1339 = vmax.f32 %v1165, 0.0
        %v1340 = vmax.f32 %v1188, 0.0
        %v1341 = vmax.f32 %v1211, 0.0
        %v1342 = vmax.f32 %v1234, 0.0
        %v1343 = vmax.f32 %v1257, 0.0
        %v1344 = vmax.f32 %v1280, 0.0
        %v1345 = vmax.f32 %v1303, 0.0
        %v1346 = vmax.f32 %v1326, 0.0
        %v1347 = vmax.f32 %v984, 0.0
        %v1348 = vmax.f32 %v1007, 0.0
        %v1349 = vmax.f32 %v1030, 0.0
        %v1350 = vmax.f32 %v1053, 0.0
        %v1351 = vmax.f32 %v1076, 0.0
        %v1352 = vmax.f32 %v1099, 0.0
        %v1353 = vmax.f32 %v1122, 0.0
        %v1354 = vmax.f32 %v1145, 0.0
        %v1355 = vmax.f32 %v1168, 0.0
        %v1356 = vmax.f32 %v1191, 0.0
        %v1357 = vmax.f32 %v1214, 0.0
        %v1358 = vmax.f32 %v1237, 0.0
        %v1359 = vmax.f32 %v1260, 0.0
        %v1360 = vmax.f32 %v1283, 0.0
        %v1361 = vmax.f32 %v1306, 0.0
        %v1362 = vmax.f32 %v1329, 0.0
        %v1363 = vld [vmem:[%s5] sm:$0xff]
        %v1364 = vld [vmem:[%s5 + $0x8] sm:$0x1]
        %v1365 = vld [vmem:[%s6] sm:$0xff]
        %v1366 = vld [vmem:[%s6 + $0x8] sm:$0x1]
        %1368 = vset.pattern.permute.xlu0 0
        %1369 = vperm.xlu0 %1368, %v1365
        %v1370 = vpop.permute.xlu0 %1369
        %1373 = vset.pattern.permute.xlu0 0
        %1374 = vperm.xlu0 %1373, %v1366
        %v1375 = vpop.permute.xlu0 %1374
        %v1378 = vsel %vm536, %v1363, 0
        %v1381 = vsel %vm536, %v1364, 0
        %1383 = vmatpush.msra.mxu0 0.0
        %1384 = vmatpush.msra.mxu0 0.0
        %1385 = vmatpush.msra.mxu0 0.0
        %1386 = vmatpush.msra.mxu0 0.0
        %1387 = vmatpush.msra.mxu0 0.0
        %1388 = vmatpush.msra.mxu0 0.0
        %1389 = vmatpush.msra.mxu0 0.0
        %1390 = vmatpush.msra.mxu0 0.0
        %1391 = vmatpush.msra.mxu0 0.0
        %1392 = vmatpush.msra.mxu0 0.0
        %1393 = vmatpush.msra.mxu0 0.0
        %1394 = vmatpush.msra.mxu0 0.0
        %1395 = vmatpush.msra.mxu0 0.0
        %1396 = vmatpush.msra.mxu0 0.0
        %1397 = vmatpush.msra.mxu0 %v1347
        %1398 = vmatpush.msra.mxu0 %v1331
        %1399 = vmatmul.f32.gmra.mxu0 %v1378
        %v1400 = vpop.f32.mrf.mxu0
        %v1401 = vadd.f32 %v1370, %v1400
        %1402 = vmatmul.f32.gmra.mxu0 %v1381
        %v1403 = vpop.f32.mrf.mxu0
        %v1404 = vadd.f32 %v1375, %v1403
        %1405 = vdwg.mxu0
        %1406 = vmatpush.msra.mxu0 0.0
        %1407 = vmatpush.msra.mxu0 0.0
        %1408 = vmatpush.msra.mxu0 0.0
        %1409 = vmatpush.msra.mxu0 0.0
        %1410 = vmatpush.msra.mxu0 0.0
        %1411 = vmatpush.msra.mxu0 0.0
        %1412 = vmatpush.msra.mxu0 0.0
        %1413 = vmatpush.msra.mxu0 0.0
        %1414 = vmatpush.msra.mxu0 0.0
        %1415 = vmatpush.msra.mxu0 0.0
        %1416 = vmatpush.msra.mxu0 0.0
        %1417 = vmatpush.msra.mxu0 0.0
        %1418 = vmatpush.msra.mxu0 0.0
        %1419 = vmatpush.msra.mxu0 0.0
        %1420 = vmatpush.msra.mxu0 %v1348
        %1421 = vmatpush.msra.mxu0 %v1332
        %1422 = vmatmul.f32.gmra.mxu0 %v1378
        %v1423 = vpop.f32.mrf.mxu0
        %v1424 = vadd.f32 %v1370, %v1423
        %1425 = vmatmul.f32.gmra.mxu0 %v1381
        %v1426 = vpop.f32.mrf.mxu0
        %v1427 = vadd.f32 %v1375, %v1426
        %1428 = vdwg.mxu0
        %1429 = vmatpush.msra.mxu0 0.0
        %1430 = vmatpush.msra.mxu0 0.0
        %1431 = vmatpush.msra.mxu0 0.0
        %1432 = vmatpush.msra.mxu0 0.0
        %1433 = vmatpush.msra.mxu0 0.0
        %1434 = vmatpush.msra.mxu0 0.0
        %1435 = vmatpush.msra.mxu0 0.0
        %1436 = vmatpush.msra.mxu0 0.0
        %1437 = vmatpush.msra.mxu0 0.0
        %1438 = vmatpush.msra.mxu0 0.0
        %1439 = vmatpush.msra.mxu0 0.0
        %1440 = vmatpush.msra.mxu0 0.0
        %1441 = vmatpush.msra.mxu0 0.0
        %1442 = vmatpush.msra.mxu0 0.0
        %1443 = vmatpush.msra.mxu0 %v1349
        %1444 = vmatpush.msra.mxu0 %v1333
        %1445 = vmatmul.f32.gmra.mxu0 %v1378
        %v1446 = vpop.f32.mrf.mxu0
        %v1447 = vadd.f32 %v1370, %v1446
        %1448 = vmatmul.f32.gmra.mxu0 %v1381
        %v1449 = vpop.f32.mrf.mxu0
        %v1450 = vadd.f32 %v1375, %v1449
        %1451 = vdwg.mxu0
        %1452 = vmatpush.msra.mxu0 0.0
        %1453 = vmatpush.msra.mxu0 0.0
        %1454 = vmatpush.msra.mxu0 0.0
        %1455 = vmatpush.msra.mxu0 0.0
        %1456 = vmatpush.msra.mxu0 0.0
        %1457 = vmatpush.msra.mxu0 0.0
        %1458 = vmatpush.msra.mxu0 0.0
        %1459 = vmatpush.msra.mxu0 0.0
        %1460 = vmatpush.msra.mxu0 0.0
        %1461 = vmatpush.msra.mxu0 0.0
        %1462 = vmatpush.msra.mxu0 0.0
        %1463 = vmatpush.msra.mxu0 0.0
        %1464 = vmatpush.msra.mxu0 0.0
        %1465 = vmatpush.msra.mxu0 0.0
        %1466 = vmatpush.msra.mxu0 %v1350
        %1467 = vmatpush.msra.mxu0 %v1334
        %1468 = vmatmul.f32.gmra.mxu0 %v1378
        %v1469 = vpop.f32.mrf.mxu0
        %v1470 = vadd.f32 %v1370, %v1469
        %1471 = vmatmul.f32.gmra.mxu0 %v1381
        %v1472 = vpop.f32.mrf.mxu0
        %v1473 = vadd.f32 %v1375, %v1472
        %1474 = vdwg.mxu0
        %1475 = vmatpush.msra.mxu0 0.0
        %1476 = vmatpush.msra.mxu0 0.0
        %1477 = vmatpush.msra.mxu0 0.0
        %1478 = vmatpush.msra.mxu0 0.0
        %1479 = vmatpush.msra.mxu0 0.0
        %1480 = vmatpush.msra.mxu0 0.0
        %1481 = vmatpush.msra.mxu0 0.0
        %1482 = vmatpush.msra.mxu0 0.0
        %1483 = vmatpush.msra.mxu0 0.0
        %1484 = vmatpush.msra.mxu0 0.0
        %1485 = vmatpush.msra.mxu0 0.0
        %1486 = vmatpush.msra.mxu0 0.0
        %1487 = vmatpush.msra.mxu0 0.0
        %1488 = vmatpush.msra.mxu0 0.0
        %1489 = vmatpush.msra.mxu0 %v1351
        %1490 = vmatpush.msra.mxu0 %v1335
        %1491 = vmatmul.f32.gmra.mxu0 %v1378
        %v1492 = vpop.f32.mrf.mxu0
        %v1493 = vadd.f32 %v1370, %v1492
        %1494 = vmatmul.f32.gmra.mxu0 %v1381
        %v1495 = vpop.f32.mrf.mxu0
        %v1496 = vadd.f32 %v1375, %v1495
        %1497 = vdwg.mxu0
        %1498 = vmatpush.msra.mxu0 0.0
        %1499 = vmatpush.msra.mxu0 0.0
        %1500 = vmatpush.msra.mxu0 0.0
        %1501 = vmatpush.msra.mxu0 0.0
        %1502 = vmatpush.msra.mxu0 0.0
        %1503 = vmatpush.msra.mxu0 0.0
        %1504 = vmatpush.msra.mxu0 0.0
        %1505 = vmatpush.msra.mxu0 0.0
        %1506 = vmatpush.msra.mxu0 0.0
        %1507 = vmatpush.msra.mxu0 0.0
        %1508 = vmatpush.msra.mxu0 0.0
        %1509 = vmatpush.msra.mxu0 0.0
        %1510 = vmatpush.msra.mxu0 0.0
        %1511 = vmatpush.msra.mxu0 0.0
        %1512 = vmatpush.msra.mxu0 %v1352
        %1513 = vmatpush.msra.mxu0 %v1336
        %1514 = vmatmul.f32.gmra.mxu0 %v1378
        %v1515 = vpop.f32.mrf.mxu0
        %v1516 = vadd.f32 %v1370, %v1515
        %1517 = vmatmul.f32.gmra.mxu0 %v1381
        %v1518 = vpop.f32.mrf.mxu0
        %v1519 = vadd.f32 %v1375, %v1518
        %1520 = vdwg.mxu0
        %1521 = vmatpush.msra.mxu0 0.0
        %1522 = vmatpush.msra.mxu0 0.0
        %1523 = vmatpush.msra.mxu0 0.0
        %1524 = vmatpush.msra.mxu0 0.0
        %1525 = vmatpush.msra.mxu0 0.0
        %1526 = vmatpush.msra.mxu0 0.0
        %1527 = vmatpush.msra.mxu0 0.0
        %1528 = vmatpush.msra.mxu0 0.0
        %1529 = vmatpush.msra.mxu0 0.0
        %1530 = vmatpush.msra.mxu0 0.0
        %1531 = vmatpush.msra.mxu0 0.0
        %1532 = vmatpush.msra.mxu0 0.0
        %1533 = vmatpush.msra.mxu0 0.0
        %1534 = vmatpush.msra.mxu0 0.0
        %1535 = vmatpush.msra.mxu0 %v1353
        %1536 = vmatpush.msra.mxu0 %v1337
        %1537 = vmatmul.f32.gmra.mxu0 %v1378
        %v1538 = vpop.f32.mrf.mxu0
        %v1539 = vadd.f32 %v1370, %v1538
        %1540 = vmatmul.f32.gmra.mxu0 %v1381
        %v1541 = vpop.f32.mrf.mxu0
        %v1542 = vadd.f32 %v1375, %v1541
        %1543 = vdwg.mxu0
        %1544 = vmatpush.msra.mxu0 0.0
        %1545 = vmatpush.msra.mxu0 0.0
        %1546 = vmatpush.msra.mxu0 0.0
        %1547 = vmatpush.msra.mxu0 0.0
        %1548 = vmatpush.msra.mxu0 0.0
        %1549 = vmatpush.msra.mxu0 0.0
        %1550 = vmatpush.msra.mxu0 0.0
        %1551 = vmatpush.msra.mxu0 0.0
        %1552 = vmatpush.msra.mxu0 0.0
        %1553 = vmatpush.msra.mxu0 0.0
        %1554 = vmatpush.msra.mxu0 0.0
        %1555 = vmatpush.msra.mxu0 0.0
        %1556 = vmatpush.msra.mxu0 0.0
        %1557 = vmatpush.msra.mxu0 0.0
        %1558 = vmatpush.msra.mxu0 %v1354
        %1559 = vmatpush.msra.mxu0 %v1338
        %1560 = vmatmul.f32.gmra.mxu0 %v1378
        %v1561 = vpop.f32.mrf.mxu0
        %v1562 = vadd.f32 %v1370, %v1561
        %1563 = vmatmul.f32.gmra.mxu0 %v1381
        %v1564 = vpop.f32.mrf.mxu0
        %v1565 = vadd.f32 %v1375, %v1564
        %1566 = vdwg.mxu0
        %1567 = vmatpush.msra.mxu0 0.0
        %1568 = vmatpush.msra.mxu0 0.0
        %1569 = vmatpush.msra.mxu0 0.0
        %1570 = vmatpush.msra.mxu0 0.0
        %1571 = vmatpush.msra.mxu0 0.0
        %1572 = vmatpush.msra.mxu0 0.0
        %1573 = vmatpush.msra.mxu0 0.0
        %1574 = vmatpush.msra.mxu0 0.0
        %1575 = vmatpush.msra.mxu0 0.0
        %1576 = vmatpush.msra.mxu0 0.0
        %1577 = vmatpush.msra.mxu0 0.0
        %1578 = vmatpush.msra.mxu0 0.0
        %1579 = vmatpush.msra.mxu0 0.0
        %1580 = vmatpush.msra.mxu0 0.0
        %1581 = vmatpush.msra.mxu0 %v1355
        %1582 = vmatpush.msra.mxu0 %v1339
        %1583 = vmatmul.f32.gmra.mxu0 %v1378
        %v1584 = vpop.f32.mrf.mxu0
        %v1585 = vadd.f32 %v1370, %v1584
        %1586 = vmatmul.f32.gmra.mxu0 %v1381
        %v1587 = vpop.f32.mrf.mxu0
        %v1588 = vadd.f32 %v1375, %v1587
        %1589 = vdwg.mxu0
        %1590 = vmatpush.msra.mxu0 0.0
        %1591 = vmatpush.msra.mxu0 0.0
        %1592 = vmatpush.msra.mxu0 0.0
        %1593 = vmatpush.msra.mxu0 0.0
        %1594 = vmatpush.msra.mxu0 0.0
        %1595 = vmatpush.msra.mxu0 0.0
        %1596 = vmatpush.msra.mxu0 0.0
        %1597 = vmatpush.msra.mxu0 0.0
        %1598 = vmatpush.msra.mxu0 0.0
        %1599 = vmatpush.msra.mxu0 0.0
        %1600 = vmatpush.msra.mxu0 0.0
        %1601 = vmatpush.msra.mxu0 0.0
        %1602 = vmatpush.msra.mxu0 0.0
        %1603 = vmatpush.msra.mxu0 0.0
        %1604 = vmatpush.msra.mxu0 %v1356
        %1605 = vmatpush.msra.mxu0 %v1340
        %1606 = vmatmul.f32.gmra.mxu0 %v1378
        %v1607 = vpop.f32.mrf.mxu0
        %v1608 = vadd.f32 %v1370, %v1607
        %1609 = vmatmul.f32.gmra.mxu0 %v1381
        %v1610 = vpop.f32.mrf.mxu0
        %v1611 = vadd.f32 %v1375, %v1610
        %1612 = vdwg.mxu0
        %1613 = vmatpush.msra.mxu0 0.0
        %1614 = vmatpush.msra.mxu0 0.0
        %1615 = vmatpush.msra.mxu0 0.0
        %1616 = vmatpush.msra.mxu0 0.0
        %1617 = vmatpush.msra.mxu0 0.0
        %1618 = vmatpush.msra.mxu0 0.0
        %1619 = vmatpush.msra.mxu0 0.0
        %1620 = vmatpush.msra.mxu0 0.0
        %1621 = vmatpush.msra.mxu0 0.0
        %1622 = vmatpush.msra.mxu0 0.0
        %1623 = vmatpush.msra.mxu0 0.0
        %1624 = vmatpush.msra.mxu0 0.0
        %1625 = vmatpush.msra.mxu0 0.0
        %1626 = vmatpush.msra.mxu0 0.0
        %1627 = vmatpush.msra.mxu0 %v1357
        %1628 = vmatpush.msra.mxu0 %v1341
        %1629 = vmatmul.f32.gmra.mxu0 %v1378
        %v1630 = vpop.f32.mrf.mxu0
        %v1631 = vadd.f32 %v1370, %v1630
        %1632 = vmatmul.f32.gmra.mxu0 %v1381
        %v1633 = vpop.f32.mrf.mxu0
        %v1634 = vadd.f32 %v1375, %v1633
        %1635 = vdwg.mxu0
        %1636 = vmatpush.msra.mxu0 0.0
        %1637 = vmatpush.msra.mxu0 0.0
        %1638 = vmatpush.msra.mxu0 0.0
        %1639 = vmatpush.msra.mxu0 0.0
        %1640 = vmatpush.msra.mxu0 0.0
        %1641 = vmatpush.msra.mxu0 0.0
        %1642 = vmatpush.msra.mxu0 0.0
        %1643 = vmatpush.msra.mxu0 0.0
        %1644 = vmatpush.msra.mxu0 0.0
        %1645 = vmatpush.msra.mxu0 0.0
        %1646 = vmatpush.msra.mxu0 0.0
        %1647 = vmatpush.msra.mxu0 0.0
        %1648 = vmatpush.msra.mxu0 0.0
        %1649 = vmatpush.msra.mxu0 0.0
        %1650 = vmatpush.msra.mxu0 %v1358
        %1651 = vmatpush.msra.mxu0 %v1342
        %1652 = vmatmul.f32.gmra.mxu0 %v1378
        %v1653 = vpop.f32.mrf.mxu0
        %v1654 = vadd.f32 %v1370, %v1653
        %1655 = vmatmul.f32.gmra.mxu0 %v1381
        %v1656 = vpop.f32.mrf.mxu0
        %v1657 = vadd.f32 %v1375, %v1656
        %1658 = vdwg.mxu0
        %1659 = vmatpush.msra.mxu0 0.0
        %1660 = vmatpush.msra.mxu0 0.0
        %1661 = vmatpush.msra.mxu0 0.0
        %1662 = vmatpush.msra.mxu0 0.0
        %1663 = vmatpush.msra.mxu0 0.0
        %1664 = vmatpush.msra.mxu0 0.0
        %1665 = vmatpush.msra.mxu0 0.0
        %1666 = vmatpush.msra.mxu0 0.0
        %1667 = vmatpush.msra.mxu0 0.0
        %1668 = vmatpush.msra.mxu0 0.0
        %1669 = vmatpush.msra.mxu0 0.0
        %1670 = vmatpush.msra.mxu0 0.0
        %1671 = vmatpush.msra.mxu0 0.0
        %1672 = vmatpush.msra.mxu0 0.0
        %1673 = vmatpush.msra.mxu0 %v1359
        %1674 = vmatpush.msra.mxu0 %v1343
        %1675 = vmatmul.f32.gmra.mxu0 %v1378
        %v1676 = vpop.f32.mrf.mxu0
        %v1677 = vadd.f32 %v1370, %v1676
        %1678 = vmatmul.f32.gmra.mxu0 %v1381
        %v1679 = vpop.f32.mrf.mxu0
        %v1680 = vadd.f32 %v1375, %v1679
        %1681 = vdwg.mxu0
        %1682 = vmatpush.msra.mxu0 0.0
        %1683 = vmatpush.msra.mxu0 0.0
        %1684 = vmatpush.msra.mxu0 0.0
        %1685 = vmatpush.msra.mxu0 0.0
        %1686 = vmatpush.msra.mxu0 0.0
        %1687 = vmatpush.msra.mxu0 0.0
        %1688 = vmatpush.msra.mxu0 0.0
        %1689 = vmatpush.msra.mxu0 0.0
        %1690 = vmatpush.msra.mxu0 0.0
        %1691 = vmatpush.msra.mxu0 0.0
        %1692 = vmatpush.msra.mxu0 0.0
        %1693 = vmatpush.msra.mxu0 0.0
        %1694 = vmatpush.msra.mxu0 0.0
        %1695 = vmatpush.msra.mxu0 0.0
        %1696 = vmatpush.msra.mxu0 %v1360
        %1697 = vmatpush.msra.mxu0 %v1344
        %1698 = vmatmul.f32.gmra.mxu0 %v1378
        %v1699 = vpop.f32.mrf.mxu0
        %v1700 = vadd.f32 %v1370, %v1699
        %1701 = vmatmul.f32.gmra.mxu0 %v1381
        %v1702 = vpop.f32.mrf.mxu0
        %v1703 = vadd.f32 %v1375, %v1702
        %1704 = vdwg.mxu0
        %1705 = vmatpush.msra.mxu0 0.0
        %1706 = vmatpush.msra.mxu0 0.0
        %1707 = vmatpush.msra.mxu0 0.0
        %1708 = vmatpush.msra.mxu0 0.0
        %1709 = vmatpush.msra.mxu0 0.0
        %1710 = vmatpush.msra.mxu0 0.0
        %1711 = vmatpush.msra.mxu0 0.0
        %1712 = vmatpush.msra.mxu0 0.0
        %1713 = vmatpush.msra.mxu0 0.0
        %1714 = vmatpush.msra.mxu0 0.0
        %1715 = vmatpush.msra.mxu0 0.0
        %1716 = vmatpush.msra.mxu0 0.0
        %1717 = vmatpush.msra.mxu0 0.0
        %1718 = vmatpush.msra.mxu0 0.0
        %1719 = vmatpush.msra.mxu0 %v1361
        %1720 = vmatpush.msra.mxu0 %v1345
        %1721 = vmatmul.f32.gmra.mxu0 %v1378
        %v1722 = vpop.f32.mrf.mxu0
        %v1723 = vadd.f32 %v1370, %v1722
        %1724 = vmatmul.f32.gmra.mxu0 %v1381
        %v1725 = vpop.f32.mrf.mxu0
        %v1726 = vadd.f32 %v1375, %v1725
        %1727 = vdwg.mxu0
        %1728 = vmatpush.msra.mxu0 0.0
        %1729 = vmatpush.msra.mxu0 0.0
        %1730 = vmatpush.msra.mxu0 0.0
        %1731 = vmatpush.msra.mxu0 0.0
        %1732 = vmatpush.msra.mxu0 0.0
        %1733 = vmatpush.msra.mxu0 0.0
        %1734 = vmatpush.msra.mxu0 0.0
        %1735 = vmatpush.msra.mxu0 0.0
        %1736 = vmatpush.msra.mxu0 0.0
        %1737 = vmatpush.msra.mxu0 0.0
        %1738 = vmatpush.msra.mxu0 0.0
        %1739 = vmatpush.msra.mxu0 0.0
        %1740 = vmatpush.msra.mxu0 0.0
        %1741 = vmatpush.msra.mxu0 0.0
        %1742 = vmatpush.msra.mxu0 %v1362
        %1743 = vmatpush.msra.mxu0 %v1346
        %1744 = vmatmul.f32.gmra.mxu0 %v1378
        %v1745 = vpop.f32.mrf.mxu0
        %v1746 = vadd.f32 %v1370, %v1745
        %1747 = vmatmul.f32.gmra.mxu0 %v1381
        %v1748 = vpop.f32.mrf.mxu0
        %v1749 = vadd.f32 %v1375, %v1748
        %1750 = vdwg.mxu0
        %v1751 = vmax.f32 %v1401, 0.0
        %v1752 = vmax.f32 %v1424, 0.0
        %v1753 = vmax.f32 %v1447, 0.0
        %v1754 = vmax.f32 %v1470, 0.0
        %v1755 = vmax.f32 %v1493, 0.0
        %v1756 = vmax.f32 %v1516, 0.0
        %v1757 = vmax.f32 %v1539, 0.0
        %v1758 = vmax.f32 %v1562, 0.0
        %v1759 = vmax.f32 %v1585, 0.0
        %v1760 = vmax.f32 %v1608, 0.0
        %v1761 = vmax.f32 %v1631, 0.0
        %v1762 = vmax.f32 %v1654, 0.0
        %v1763 = vmax.f32 %v1677, 0.0
        %v1764 = vmax.f32 %v1700, 0.0
        %v1765 = vmax.f32 %v1723, 0.0
        %v1766 = vmax.f32 %v1746, 0.0
        %vm1767 = vcmp.gt.f32.partialorder %v1404, 0.0
        %vm1768 = vcmp.gt.f32.partialorder %v1427, 0.0
        %vm1769 = vcmp.gt.f32.partialorder %v1450, 0.0
        %vm1770 = vcmp.gt.f32.partialorder %v1473, 0.0
        %vm1771 = vcmp.gt.f32.partialorder %v1496, 0.0
        %vm1772 = vcmp.gt.f32.partialorder %v1519, 0.0
        %vm1773 = vcmp.gt.f32.partialorder %v1542, 0.0
        %vm1774 = vcmp.gt.f32.partialorder %v1565, 0.0
        %vm1775 = vcmp.gt.f32.partialorder %v1588, 0.0
        %vm1776 = vcmp.gt.f32.partialorder %v1611, 0.0
        %vm1777 = vcmp.gt.f32.partialorder %v1634, 0.0
        %vm1778 = vcmp.gt.f32.partialorder %v1657, 0.0
        %vm1779 = vcmp.gt.f32.partialorder %v1680, 0.0
        %vm1780 = vcmp.gt.f32.partialorder %v1703, 0.0
        %vm1781 = vcmp.gt.f32.partialorder %v1726, 0.0
        %vm1782 = vcmp.gt.f32.partialorder %v1749, 0.0
        %v1783 = vsel %vm1767, 1, 0
        %v1784 = vsel %vm1768, 1, 0
        %v1785 = vsel %vm1769, 1, 0
        %v1786 = vsel %vm1770, 1, 0
        %v1787 = vsel %vm1771, 1, 0
        %v1788 = vsel %vm1772, 1, 0
        %v1789 = vsel %vm1773, 1, 0
        %v1790 = vsel %vm1774, 1, 0
        %v1791 = vsel %vm1775, 1, 0
        %v1792 = vsel %vm1776, 1, 0
        %v1793 = vsel %vm1777, 1, 0
        %v1794 = vsel %vm1778, 1, 0
        %v1795 = vsel %vm1779, 1, 0
        %v1796 = vsel %vm1780, 1, 0
        %v1797 = vsel %vm1781, 1, 0
        %v1798 = vsel %vm1782, 1, 0
        %v1799 = vcvt.s32.f32 %v1783
        %v1800 = vcvt.s32.f32 %v1784
        %v1801 = vcvt.s32.f32 %v1785
        %v1802 = vcvt.s32.f32 %v1786
        %v1803 = vcvt.s32.f32 %v1787
        %v1804 = vcvt.s32.f32 %v1788
        %v1805 = vcvt.s32.f32 %v1789
        %v1806 = vcvt.s32.f32 %v1790
        %v1807 = vcvt.s32.f32 %v1791
        %v1808 = vcvt.s32.f32 %v1792
        %v1809 = vcvt.s32.f32 %v1793
        %v1810 = vcvt.s32.f32 %v1794
        %v1811 = vcvt.s32.f32 %v1795
        %v1812 = vcvt.s32.f32 %v1796
        %v1813 = vcvt.s32.f32 %v1797
        %v1814 = vcvt.s32.f32 %v1798
        %v1815 = vld [vmem:[%s7] sm:$0xff]
        %v1816 = vld [vmem:[%s7 + $0x8] sm:$0xff]
        %v1817 = vld [vmem:[%s7 + $0x10] sm:$0xff]
        %v1818 = vld [vmem:[%s7 + $0x18] sm:$0xff]
        %v1819 = vld [vmem:[%s8] sm:$0xff]
        %v1820 = vld [vmem:[%s8 + $0x8] sm:$0xff]
        %v1821 = vld [vmem:[%s8 + $0x10] sm:$0xff]
        %v1822 = vld [vmem:[%s8 + $0x18] sm:$0xff]
        %vm1823 = vcmask 64512
        %v1825 = vsel %vm1823, %v1819, 0
        %v1828 = vsel %vm1823, %v1820, 0
        %v1831 = vsel %vm1823, %v1821, 0
        %v1834 = vsel %vm1823, %v1822, 0
        %1836 = vmatpush.msra.mxu0 0.0
        %1837 = vmatpush.msra.mxu0 0.0
        %1838 = vmatpush.msra.mxu0 0.0
        %1839 = vmatpush.msra.mxu0 0.0
        %1840 = vmatpush.msra.mxu0 0.0
        %1841 = vmatpush.msra.mxu0 0.0
        %1842 = vmatpush.msra.mxu0 0.0
        %1843 = vmatpush.msra.mxu0 0.0
        %1844 = vmatpush.msra.mxu0 0.0
        %1845 = vmatpush.msra.mxu0 0.0
        %1846 = vmatpush.msra.mxu0 0.0
        %1847 = vmatpush.msra.mxu0 0.0
        %1848 = vmatpush.msra.mxu0 0.0
        %1849 = vmatpush.msra.mxu0 0.0
        %1850 = vmatpush.msra.mxu0 0.0
        %1851 = vmatpush.msra.mxu0 %v1751
        %1852 = vmatmul.f32.gmra.mxu0 %v1825
        %v1853 = vpop.f32.mrf.mxu0
        %v1854 = vadd.f32 0.0, %v1853
        %1855 = vmatmul.f32.gmra.mxu0 %v1828
        %v1856 = vpop.f32.mrf.mxu0
        %v1857 = vadd.f32 0.0, %v1856
        %1858 = vmatmul.f32.gmra.mxu0 %v1831
        %v1859 = vpop.f32.mrf.mxu0
        %v1860 = vadd.f32 0.0, %v1859
        %1861 = vmatmul.f32.gmra.mxu0 %v1834
        %v1862 = vpop.f32.mrf.mxu0
        %v1863 = vadd.f32 0.0, %v1862
        %1864 = vdwg.mxu0
        %1865 = vmatpush.msra.mxu0 0.0
        %1866 = vmatpush.msra.mxu0 0.0
        %1867 = vmatpush.msra.mxu0 0.0
        %1868 = vmatpush.msra.mxu0 0.0
        %1869 = vmatpush.msra.mxu0 0.0
        %1870 = vmatpush.msra.mxu0 0.0
        %1871 = vmatpush.msra.mxu0 0.0
        %1872 = vmatpush.msra.mxu0 0.0
        %1873 = vmatpush.msra.mxu0 0.0
        %1874 = vmatpush.msra.mxu0 0.0
        %1875 = vmatpush.msra.mxu0 0.0
        %1876 = vmatpush.msra.mxu0 0.0
        %1877 = vmatpush.msra.mxu0 0.0
        %1878 = vmatpush.msra.mxu0 0.0
        %1879 = vmatpush.msra.mxu0 0.0
        %1880 = vmatpush.msra.mxu0 %v1752
        %1881 = vmatmul.f32.gmra.mxu0 %v1825
        %v1882 = vpop.f32.mrf.mxu0
        %v1883 = vadd.f32 0.0, %v1882
        %1884 = vmatmul.f32.gmra.mxu0 %v1828
        %v1885 = vpop.f32.mrf.mxu0
        %v1886 = vadd.f32 0.0, %v1885
        %1887 = vmatmul.f32.gmra.mxu0 %v1831
        %v1888 = vpop.f32.mrf.mxu0
        %v1889 = vadd.f32 0.0, %v1888
        %1890 = vmatmul.f32.gmra.mxu0 %v1834
        %v1891 = vpop.f32.mrf.mxu0
        %v1892 = vadd.f32 0.0, %v1891
        %1893 = vdwg.mxu0
        %1894 = vmatpush.msra.mxu0 0.0
        %1895 = vmatpush.msra.mxu0 0.0
        %1896 = vmatpush.msra.mxu0 0.0
        %1897 = vmatpush.msra.mxu0 0.0
        %1898 = vmatpush.msra.mxu0 0.0
        %1899 = vmatpush.msra.mxu0 0.0
        %1900 = vmatpush.msra.mxu0 0.0
        %1901 = vmatpush.msra.mxu0 0.0
        %1902 = vmatpush.msra.mxu0 0.0
        %1903 = vmatpush.msra.mxu0 0.0
        %1904 = vmatpush.msra.mxu0 0.0
        %1905 = vmatpush.msra.mxu0 0.0
        %1906 = vmatpush.msra.mxu0 0.0
        %1907 = vmatpush.msra.mxu0 0.0
        %1908 = vmatpush.msra.mxu0 0.0
        %1909 = vmatpush.msra.mxu0 %v1753
        %1910 = vmatmul.f32.gmra.mxu0 %v1825
        %v1911 = vpop.f32.mrf.mxu0
        %v1912 = vadd.f32 0.0, %v1911
        %1913 = vmatmul.f32.gmra.mxu0 %v1828
        %v1914 = vpop.f32.mrf.mxu0
        %v1915 = vadd.f32 0.0, %v1914
        %1916 = vmatmul.f32.gmra.mxu0 %v1831
        %v1917 = vpop.f32.mrf.mxu0
        %v1918 = vadd.f32 0.0, %v1917
        %1919 = vmatmul.f32.gmra.mxu0 %v1834
        %v1920 = vpop.f32.mrf.mxu0
        %v1921 = vadd.f32 0.0, %v1920
        %1922 = vdwg.mxu0
        %1923 = vmatpush.msra.mxu0 0.0
        %1924 = vmatpush.msra.mxu0 0.0
        %1925 = vmatpush.msra.mxu0 0.0
        %1926 = vmatpush.msra.mxu0 0.0
        %1927 = vmatpush.msra.mxu0 0.0
        %1928 = vmatpush.msra.mxu0 0.0
        %1929 = vmatpush.msra.mxu0 0.0
        %1930 = vmatpush.msra.mxu0 0.0
        %1931 = vmatpush.msra.mxu0 0.0
        %1932 = vmatpush.msra.mxu0 0.0
        %1933 = vmatpush.msra.mxu0 0.0
        %1934 = vmatpush.msra.mxu0 0.0
        %1935 = vmatpush.msra.mxu0 0.0
        %1936 = vmatpush.msra.mxu0 0.0
        %1937 = vmatpush.msra.mxu0 0.0
        %1938 = vmatpush.msra.mxu0 %v1754
        %1939 = vmatmul.f32.gmra.mxu0 %v1825
        %v1940 = vpop.f32.mrf.mxu0
        %v1941 = vadd.f32 0.0, %v1940
        %1942 = vmatmul.f32.gmra.mxu0 %v1828
        %v1943 = vpop.f32.mrf.mxu0
        %v1944 = vadd.f32 0.0, %v1943
        %1945 = vmatmul.f32.gmra.mxu0 %v1831
        %v1946 = vpop.f32.mrf.mxu0
        %v1947 = vadd.f32 0.0, %v1946
        %1948 = vmatmul.f32.gmra.mxu0 %v1834
        %v1949 = vpop.f32.mrf.mxu0
        %v1950 = vadd.f32 0.0, %v1949
        %1951 = vdwg.mxu0
        %1952 = vmatpush.msra.mxu0 0.0
        %1953 = vmatpush.msra.mxu0 0.0
        %1954 = vmatpush.msra.mxu0 0.0
        %1955 = vmatpush.msra.mxu0 0.0
        %1956 = vmatpush.msra.mxu0 0.0
        %1957 = vmatpush.msra.mxu0 0.0
        %1958 = vmatpush.msra.mxu0 0.0
        %1959 = vmatpush.msra.mxu0 0.0
        %1960 = vmatpush.msra.mxu0 0.0
        %1961 = vmatpush.msra.mxu0 0.0
        %1962 = vmatpush.msra.mxu0 0.0
        %1963 = vmatpush.msra.mxu0 0.0
        %1964 = vmatpush.msra.mxu0 0.0
        %1965 = vmatpush.msra.mxu0 0.0
        %1966 = vmatpush.msra.mxu0 0.0
        %1967 = vmatpush.msra.mxu0 %v1755
        %1968 = vmatmul.f32.gmra.mxu0 %v1825
        %v1969 = vpop.f32.mrf.mxu0
        %v1970 = vadd.f32 0.0, %v1969
        %1971 = vmatmul.f32.gmra.mxu0 %v1828
        %v1972 = vpop.f32.mrf.mxu0
        %v1973 = vadd.f32 0.0, %v1972
        %1974 = vmatmul.f32.gmra.mxu0 %v1831
        %v1975 = vpop.f32.mrf.mxu0
        %v1976 = vadd.f32 0.0, %v1975
        %1977 = vmatmul.f32.gmra.mxu0 %v1834
        %v1978 = vpop.f32.mrf.mxu0
        %v1979 = vadd.f32 0.0, %v1978
        %1980 = vdwg.mxu0
        %1981 = vmatpush.msra.mxu0 0.0
        %1982 = vmatpush.msra.mxu0 0.0
        %1983 = vmatpush.msra.mxu0 0.0
        %1984 = vmatpush.msra.mxu0 0.0
        %1985 = vmatpush.msra.mxu0 0.0
        %1986 = vmatpush.msra.mxu0 0.0
        %1987 = vmatpush.msra.mxu0 0.0
        %1988 = vmatpush.msra.mxu0 0.0
        %1989 = vmatpush.msra.mxu0 0.0
        %1990 = vmatpush.msra.mxu0 0.0
        %1991 = vmatpush.msra.mxu0 0.0
        %1992 = vmatpush.msra.mxu0 0.0
        %1993 = vmatpush.msra.mxu0 0.0
        %1994 = vmatpush.msra.mxu0 0.0
        %1995 = vmatpush.msra.mxu0 0.0
        %1996 = vmatpush.msra.mxu0 %v1756
        %1997 = vmatmul.f32.gmra.mxu0 %v1825
        %v1998 = vpop.f32.mrf.mxu0
        %v1999 = vadd.f32 0.0, %v1998
        %2000 = vmatmul.f32.gmra.mxu0 %v1828
        %v2001 = vpop.f32.mrf.mxu0
        %v2002 = vadd.f32 0.0, %v2001
        %2003 = vmatmul.f32.gmra.mxu0 %v1831
        %v2004 = vpop.f32.mrf.mxu0
        %v2005 = vadd.f32 0.0, %v2004
        %2006 = vmatmul.f32.gmra.mxu0 %v1834
        %v2007 = vpop.f32.mrf.mxu0
        %v2008 = vadd.f32 0.0, %v2007
        %2009 = vdwg.mxu0
        %2010 = vmatpush.msra.mxu0 0.0
        %2011 = vmatpush.msra.mxu0 0.0
        %2012 = vmatpush.msra.mxu0 0.0
        %2013 = vmatpush.msra.mxu0 0.0
        %2014 = vmatpush.msra.mxu0 0.0
        %2015 = vmatpush.msra.mxu0 0.0
        %2016 = vmatpush.msra.mxu0 0.0
        %2017 = vmatpush.msra.mxu0 0.0
        %2018 = vmatpush.msra.mxu0 0.0
        %2019 = vmatpush.msra.mxu0 0.0
        %2020 = vmatpush.msra.mxu0 0.0
        %2021 = vmatpush.msra.mxu0 0.0
        %2022 = vmatpush.msra.mxu0 0.0
        %2023 = vmatpush.msra.mxu0 0.0
        %2024 = vmatpush.msra.mxu0 0.0
        %2025 = vmatpush.msra.mxu0 %v1757
        %2026 = vmatmul.f32.gmra.mxu0 %v1825
        %v2027 = vpop.f32.mrf.mxu0
        %v2028 = vadd.f32 0.0, %v2027
        %2029 = vmatmul.f32.gmra.mxu0 %v1828
        %v2030 = vpop.f32.mrf.mxu0
        %v2031 = vadd.f32 0.0, %v2030
        %2032 = vmatmul.f32.gmra.mxu0 %v1831
        %v2033 = vpop.f32.mrf.mxu0
        %v2034 = vadd.f32 0.0, %v2033
        %2035 = vmatmul.f32.gmra.mxu0 %v1834
        %v2036 = vpop.f32.mrf.mxu0
        %v2037 = vadd.f32 0.0, %v2036
        %2038 = vdwg.mxu0
        %2039 = vmatpush.msra.mxu0 0.0
        %2040 = vmatpush.msra.mxu0 0.0
        %2041 = vmatpush.msra.mxu0 0.0
        %2042 = vmatpush.msra.mxu0 0.0
        %2043 = vmatpush.msra.mxu0 0.0
        %2044 = vmatpush.msra.mxu0 0.0
        %2045 = vmatpush.msra.mxu0 0.0
        %2046 = vmatpush.msra.mxu0 0.0
        %2047 = vmatpush.msra.mxu0 0.0
        %2048 = vmatpush.msra.mxu0 0.0
        %2049 = vmatpush.msra.mxu0 0.0
        %2050 = vmatpush.msra.mxu0 0.0
        %2051 = vmatpush.msra.mxu0 0.0
        %2052 = vmatpush.msra.mxu0 0.0
        %2053 = vmatpush.msra.mxu0 0.0
        %2054 = vmatpush.msra.mxu0 %v1758
        %2055 = vmatmul.f32.gmra.mxu0 %v1825
        %v2056 = vpop.f32.mrf.mxu0
        %v2057 = vadd.f32 0.0, %v2056
        %2058 = vmatmul.f32.gmra.mxu0 %v1828
        %v2059 = vpop.f32.mrf.mxu0
        %v2060 = vadd.f32 0.0, %v2059
        %2061 = vmatmul.f32.gmra.mxu0 %v1831
        %v2062 = vpop.f32.mrf.mxu0
        %v2063 = vadd.f32 0.0, %v2062
        %2064 = vmatmul.f32.gmra.mxu0 %v1834
        %v2065 = vpop.f32.mrf.mxu0
        %v2066 = vadd.f32 0.0, %v2065
        %2067 = vdwg.mxu0
        %2068 = vmatpush.msra.mxu0 0.0
        %2069 = vmatpush.msra.mxu0 0.0
        %2070 = vmatpush.msra.mxu0 0.0
        %2071 = vmatpush.msra.mxu0 0.0
        %2072 = vmatpush.msra.mxu0 0.0
        %2073 = vmatpush.msra.mxu0 0.0
        %2074 = vmatpush.msra.mxu0 0.0
        %2075 = vmatpush.msra.mxu0 0.0
        %2076 = vmatpush.msra.mxu0 0.0
        %2077 = vmatpush.msra.mxu0 0.0
        %2078 = vmatpush.msra.mxu0 0.0
        %2079 = vmatpush.msra.mxu0 0.0
        %2080 = vmatpush.msra.mxu0 0.0
        %2081 = vmatpush.msra.mxu0 0.0
        %2082 = vmatpush.msra.mxu0 0.0
        %2083 = vmatpush.msra.mxu0 %v1759
        %2084 = vmatmul.f32.gmra.mxu0 %v1825
        %v2085 = vpop.f32.mrf.mxu0
        %v2086 = vadd.f32 0.0, %v2085
        %2087 = vmatmul.f32.gmra.mxu0 %v1828
        %v2088 = vpop.f32.mrf.mxu0
        %v2089 = vadd.f32 0.0, %v2088
        %2090 = vmatmul.f32.gmra.mxu0 %v1831
        %v2091 = vpop.f32.mrf.mxu0
        %v2092 = vadd.f32 0.0, %v2091
        %2093 = vmatmul.f32.gmra.mxu0 %v1834
        %v2094 = vpop.f32.mrf.mxu0
        %v2095 = vadd.f32 0.0, %v2094
        %2096 = vdwg.mxu0
        %2097 = vmatpush.msra.mxu0 0.0
        %2098 = vmatpush.msra.mxu0 0.0
        %2099 = vmatpush.msra.mxu0 0.0
        %2100 = vmatpush.msra.mxu0 0.0
        %2101 = vmatpush.msra.mxu0 0.0
        %2102 = vmatpush.msra.mxu0 0.0
        %2103 = vmatpush.msra.mxu0 0.0
        %2104 = vmatpush.msra.mxu0 0.0
        %2105 = vmatpush.msra.mxu0 0.0
        %2106 = vmatpush.msra.mxu0 0.0
        %2107 = vmatpush.msra.mxu0 0.0
        %2108 = vmatpush.msra.mxu0 0.0
        %2109 = vmatpush.msra.mxu0 0.0
        %2110 = vmatpush.msra.mxu0 0.0
        %2111 = vmatpush.msra.mxu0 0.0
        %2112 = vmatpush.msra.mxu0 %v1760
        %2113 = vmatmul.f32.gmra.mxu0 %v1825
        %v2114 = vpop.f32.mrf.mxu0
        %v2115 = vadd.f32 0.0, %v2114
        %2116 = vmatmul.f32.gmra.mxu0 %v1828
        %v2117 = vpop.f32.mrf.mxu0
        %v2118 = vadd.f32 0.0, %v2117
        %2119 = vmatmul.f32.gmra.mxu0 %v1831
        %v2120 = vpop.f32.mrf.mxu0
        %v2121 = vadd.f32 0.0, %v2120
        %2122 = vmatmul.f32.gmra.mxu0 %v1834
        %v2123 = vpop.f32.mrf.mxu0
        %v2124 = vadd.f32 0.0, %v2123
        %2125 = vdwg.mxu0
        %2126 = vmatpush.msra.mxu0 0.0
        %2127 = vmatpush.msra.mxu0 0.0
        %2128 = vmatpush.msra.mxu0 0.0
        %2129 = vmatpush.msra.mxu0 0.0
        %2130 = vmatpush.msra.mxu0 0.0
        %2131 = vmatpush.msra.mxu0 0.0
        %2132 = vmatpush.msra.mxu0 0.0
        %2133 = vmatpush.msra.mxu0 0.0
        %2134 = vmatpush.msra.mxu0 0.0
        %2135 = vmatpush.msra.mxu0 0.0
        %2136 = vmatpush.msra.mxu0 0.0
        %2137 = vmatpush.msra.mxu0 0.0
        %2138 = vmatpush.msra.mxu0 0.0
        %2139 = vmatpush.msra.mxu0 0.0
        %2140 = vmatpush.msra.mxu0 0.0
        %2141 = vmatpush.msra.mxu0 %v1761
        %2142 = vmatmul.f32.gmra.mxu0 %v1825
        %v2143 = vpop.f32.mrf.mxu0
        %v2144 = vadd.f32 0.0, %v2143
        %2145 = vmatmul.f32.gmra.mxu0 %v1828
        %v2146 = vpop.f32.mrf.mxu0
        %v2147 = vadd.f32 0.0, %v2146
        %2148 = vmatmul.f32.gmra.mxu0 %v1831
        %v2149 = vpop.f32.mrf.mxu0
        %v2150 = vadd.f32 0.0, %v2149
        %2151 = vmatmul.f32.gmra.mxu0 %v1834
        %v2152 = vpop.f32.mrf.mxu0
        %v2153 = vadd.f32 0.0, %v2152
        %2154 = vdwg.mxu0
        %2155 = vmatpush.msra.mxu0 0.0
        %2156 = vmatpush.msra.mxu0 0.0
        %2157 = vmatpush.msra.mxu0 0.0
        %2158 = vmatpush.msra.mxu0 0.0
        %2159 = vmatpush.msra.mxu0 0.0
        %2160 = vmatpush.msra.mxu0 0.0
        %2161 = vmatpush.msra.mxu0 0.0
        %2162 = vmatpush.msra.mxu0 0.0
        %2163 = vmatpush.msra.mxu0 0.0
        %2164 = vmatpush.msra.mxu0 0.0
        %2165 = vmatpush.msra.mxu0 0.0
        %2166 = vmatpush.msra.mxu0 0.0
        %2167 = vmatpush.msra.mxu0 0.0
        %2168 = vmatpush.msra.mxu0 0.0
        %2169 = vmatpush.msra.mxu0 0.0
        %2170 = vmatpush.msra.mxu0 %v1762
        %2171 = vmatmul.f32.gmra.mxu0 %v1825
        %v2172 = vpop.f32.mrf.mxu0
        %v2173 = vadd.f32 0.0, %v2172
        %2174 = vmatmul.f32.gmra.mxu0 %v1828
        %v2175 = vpop.f32.mrf.mxu0
        %v2176 = vadd.f32 0.0, %v2175
        %2177 = vmatmul.f32.gmra.mxu0 %v1831
        %v2178 = vpop.f32.mrf.mxu0
        %v2179 = vadd.f32 0.0, %v2178
        %2180 = vmatmul.f32.gmra.mxu0 %v1834
        %v2181 = vpop.f32.mrf.mxu0
        %v2182 = vadd.f32 0.0, %v2181
        %2183 = vdwg.mxu0
        %2184 = vmatpush.msra.mxu0 0.0
        %2185 = vmatpush.msra.mxu0 0.0
        %2186 = vmatpush.msra.mxu0 0.0
        %2187 = vmatpush.msra.mxu0 0.0
        %2188 = vmatpush.msra.mxu0 0.0
        %2189 = vmatpush.msra.mxu0 0.0
        %2190 = vmatpush.msra.mxu0 0.0
        %2191 = vmatpush.msra.mxu0 0.0
        %2192 = vmatpush.msra.mxu0 0.0
        %2193 = vmatpush.msra.mxu0 0.0
        %2194 = vmatpush.msra.mxu0 0.0
        %2195 = vmatpush.msra.mxu0 0.0
        %2196 = vmatpush.msra.mxu0 0.0
        %2197 = vmatpush.msra.mxu0 0.0
        %2198 = vmatpush.msra.mxu0 0.0
        %2199 = vmatpush.msra.mxu0 %v1763
        %2200 = vmatmul.f32.gmra.mxu0 %v1825
        %v2201 = vpop.f32.mrf.mxu0
        %v2202 = vadd.f32 0.0, %v2201
        %2203 = vmatmul.f32.gmra.mxu0 %v1828
        %v2204 = vpop.f32.mrf.mxu0
        %v2205 = vadd.f32 0.0, %v2204
        %2206 = vmatmul.f32.gmra.mxu0 %v1831
        %v2207 = vpop.f32.mrf.mxu0
        %v2208 = vadd.f32 0.0, %v2207
        %2209 = vmatmul.f32.gmra.mxu0 %v1834
        %v2210 = vpop.f32.mrf.mxu0
        %v2211 = vadd.f32 0.0, %v2210
        %2212 = vdwg.mxu0
        %2213 = vmatpush.msra.mxu0 0.0
        %2214 = vmatpush.msra.mxu0 0.0
        %2215 = vmatpush.msra.mxu0 0.0
        %2216 = vmatpush.msra.mxu0 0.0
        %2217 = vmatpush.msra.mxu0 0.0
        %2218 = vmatpush.msra.mxu0 0.0
        %2219 = vmatpush.msra.mxu0 0.0
        %2220 = vmatpush.msra.mxu0 0.0
        %2221 = vmatpush.msra.mxu0 0.0
        %2222 = vmatpush.msra.mxu0 0.0
        %2223 = vmatpush.msra.mxu0 0.0
        %2224 = vmatpush.msra.mxu0 0.0
        %2225 = vmatpush.msra.mxu0 0.0
        %2226 = vmatpush.msra.mxu0 0.0
        %2227 = vmatpush.msra.mxu0 0.0
        %2228 = vmatpush.msra.mxu0 %v1764
        %2229 = vmatmul.f32.gmra.mxu0 %v1825
        %v2230 = vpop.f32.mrf.mxu0
        %v2231 = vadd.f32 0.0, %v2230
        %2232 = vmatmul.f32.gmra.mxu0 %v1828
        %v2233 = vpop.f32.mrf.mxu0
        %v2234 = vadd.f32 0.0, %v2233
        %2235 = vmatmul.f32.gmra.mxu0 %v1831
        %v2236 = vpop.f32.mrf.mxu0
        %v2237 = vadd.f32 0.0, %v2236
        %2238 = vmatmul.f32.gmra.mxu0 %v1834
        %v2239 = vpop.f32.mrf.mxu0
        %v2240 = vadd.f32 0.0, %v2239
        %2241 = vdwg.mxu0
        %2242 = vmatpush.msra.mxu0 0.0
        %2243 = vmatpush.msra.mxu0 0.0
        %2244 = vmatpush.msra.mxu0 0.0
        %2245 = vmatpush.msra.mxu0 0.0
        %2246 = vmatpush.msra.mxu0 0.0
        %2247 = vmatpush.msra.mxu0 0.0
        %2248 = vmatpush.msra.mxu0 0.0
        %2249 = vmatpush.msra.mxu0 0.0
        %2250 = vmatpush.msra.mxu0 0.0
        %2251 = vmatpush.msra.mxu0 0.0
        %2252 = vmatpush.msra.mxu0 0.0
        %2253 = vmatpush.msra.mxu0 0.0
        %2254 = vmatpush.msra.mxu0 0.0
        %2255 = vmatpush.msra.mxu0 0.0
        %2256 = vmatpush.msra.mxu0 0.0
        %2257 = vmatpush.msra.mxu0 %v1765
        %2258 = vmatmul.f32.gmra.mxu0 %v1825
        %v2259 = vpop.f32.mrf.mxu0
        %v2260 = vadd.f32 0.0, %v2259
        %2261 = vmatmul.f32.gmra.mxu0 %v1828
        %v2262 = vpop.f32.mrf.mxu0
        %v2263 = vadd.f32 0.0, %v2262
        %2264 = vmatmul.f32.gmra.mxu0 %v1831
        %v2265 = vpop.f32.mrf.mxu0
        %v2266 = vadd.f32 0.0, %v2265
        %2267 = vmatmul.f32.gmra.mxu0 %v1834
        %v2268 = vpop.f32.mrf.mxu0
        %v2269 = vadd.f32 0.0, %v2268
        %2270 = vdwg.mxu0
        %2271 = vmatpush.msra.mxu0 0.0
        %2272 = vmatpush.msra.mxu0 0.0
        %2273 = vmatpush.msra.mxu0 0.0
        %2274 = vmatpush.msra.mxu0 0.0
        %2275 = vmatpush.msra.mxu0 0.0
        %2276 = vmatpush.msra.mxu0 0.0
        %2277 = vmatpush.msra.mxu0 0.0
        %2278 = vmatpush.msra.mxu0 0.0
        %2279 = vmatpush.msra.mxu0 0.0
        %2280 = vmatpush.msra.mxu0 0.0
        %2281 = vmatpush.msra.mxu0 0.0
        %2282 = vmatpush.msra.mxu0 0.0
        %2283 = vmatpush.msra.mxu0 0.0
        %2284 = vmatpush.msra.mxu0 0.0
        %2285 = vmatpush.msra.mxu0 0.0
        %2286 = vmatpush.msra.mxu0 %v1766
        %2287 = vmatmul.f32.gmra.mxu0 %v1825
        %v2288 = vpop.f32.mrf.mxu0
        %v2289 = vadd.f32 0.0, %v2288
        %2290 = vmatmul.f32.gmra.mxu0 %v1828
        %v2291 = vpop.f32.mrf.mxu0
        %v2292 = vadd.f32 0.0, %v2291
        %2293 = vmatmul.f32.gmra.mxu0 %v1831
        %v2294 = vpop.f32.mrf.mxu0
        %v2295 = vadd.f32 0.0, %v2294
        %2296 = vmatmul.f32.gmra.mxu0 %v1834
        %v2297 = vpop.f32.mrf.mxu0
        %v2298 = vadd.f32 0.0, %v2297
        %2299 = vdwg.mxu0
        %v2301 = vsel %vm536, %v1815, 0
        %v2304 = vsel %vm536, %v1816, 0
        %v2307 = vsel %vm536, %v1817, 0
        %v2310 = vsel %vm536, %v1818, 0
        %2312 = vmatpush.msra.mxu0 0.0
        %2313 = vmatpush.msra.mxu0 0.0
        %2314 = vmatpush.msra.mxu0 0.0
        %2315 = vmatpush.msra.mxu0 0.0
        %2316 = vmatpush.msra.mxu0 0.0
        %2317 = vmatpush.msra.mxu0 0.0
        %2318 = vmatpush.msra.mxu0 0.0
        %2319 = vmatpush.msra.mxu0 0.0
        %2320 = vmatpush.msra.mxu0 0.0
        %2321 = vmatpush.msra.mxu0 0.0
        %2322 = vmatpush.msra.mxu0 0.0
        %2323 = vmatpush.msra.mxu0 0.0
        %2324 = vmatpush.msra.mxu0 0.0
        %2325 = vmatpush.msra.mxu0 0.0
        %2326 = vmatpush.msra.mxu0 %v506
        %2327 = vmatpush.msra.mxu0 %v490
        %2328 = vmatmul.f32.gmra.mxu0 %v2301
        %v2329 = vpop.f32.mrf.mxu0
        %v2330 = vadd.f32 %v1854, %v2329
        %2331 = vmatmul.f32.gmra.mxu0 %v2304
        %v2332 = vpop.f32.mrf.mxu0
        %v2333 = vadd.f32 %v1857, %v2332
        %2334 = vmatmul.f32.gmra.mxu0 %v2307
        %v2335 = vpop.f32.mrf.mxu0
        %v2336 = vadd.f32 %v1860, %v2335
        %2337 = vmatmul.f32.gmra.mxu0 %v2310
        %v2338 = vpop.f32.mrf.mxu0
        %v2339 = vadd.f32 %v1863, %v2338
        %2340 = vdwg.mxu0
        %2341 = vmatpush.msra.mxu0 0.0
        %2342 = vmatpush.msra.mxu0 0.0
        %2343 = vmatpush.msra.mxu0 0.0
        %2344 = vmatpush.msra.mxu0 0.0
        %2345 = vmatpush.msra.mxu0 0.0
        %2346 = vmatpush.msra.mxu0 0.0
        %2347 = vmatpush.msra.mxu0 0.0
        %2348 = vmatpush.msra.mxu0 0.0
        %2349 = vmatpush.msra.mxu0 0.0
        %2350 = vmatpush.msra.mxu0 0.0
        %2351 = vmatpush.msra.mxu0 0.0
        %2352 = vmatpush.msra.mxu0 0.0
        %2353 = vmatpush.msra.mxu0 0.0
        %2354 = vmatpush.msra.mxu0 0.0
        %2355 = vmatpush.msra.mxu0 %v507
        %2356 = vmatpush.msra.mxu0 %v491
        %2357 = vmatmul.f32.gmra.mxu0 %v2301
        %v2358 = vpop.f32.mrf.mxu0
        %v2359 = vadd.f32 %v1883, %v2358
        %2360 = vmatmul.f32.gmra.mxu0 %v2304
        %v2361 = vpop.f32.mrf.mxu0
        %v2362 = vadd.f32 %v1886, %v2361
        %2363 = vmatmul.f32.gmra.mxu0 %v2307
        %v2364 = vpop.f32.mrf.mxu0
        %v2365 = vadd.f32 %v1889, %v2364
        %2366 = vmatmul.f32.gmra.mxu0 %v2310
        %v2367 = vpop.f32.mrf.mxu0
        %v2368 = vadd.f32 %v1892, %v2367
        %2369 = vdwg.mxu0
        %2370 = vmatpush.msra.mxu0 0.0
        %2371 = vmatpush.msra.mxu0 0.0
        %2372 = vmatpush.msra.mxu0 0.0
        %2373 = vmatpush.msra.mxu0 0.0
        %2374 = vmatpush.msra.mxu0 0.0
        %2375 = vmatpush.msra.mxu0 0.0
        %2376 = vmatpush.msra.mxu0 0.0
        %2377 = vmatpush.msra.mxu0 0.0
        %2378 = vmatpush.msra.mxu0 0.0
        %2379 = vmatpush.msra.mxu0 0.0
        %2380 = vmatpush.msra.mxu0 0.0
        %2381 = vmatpush.msra.mxu0 0.0
        %2382 = vmatpush.msra.mxu0 0.0
        %2383 = vmatpush.msra.mxu0 0.0
        %2384 = vmatpush.msra.mxu0 %v508
        %2385 = vmatpush.msra.mxu0 %v492
        %2386 = vmatmul.f32.gmra.mxu0 %v2301
        %v2387 = vpop.f32.mrf.mxu0
        %v2388 = vadd.f32 %v1912, %v2387
        %2389 = vmatmul.f32.gmra.mxu0 %v2304
        %v2390 = vpop.f32.mrf.mxu0
        %v2391 = vadd.f32 %v1915, %v2390
        %2392 = vmatmul.f32.gmra.mxu0 %v2307
        %v2393 = vpop.f32.mrf.mxu0
        %v2394 = vadd.f32 %v1918, %v2393
        %2395 = vmatmul.f32.gmra.mxu0 %v2310
        %v2396 = vpop.f32.mrf.mxu0
        %v2397 = vadd.f32 %v1921, %v2396
        %2398 = vdwg.mxu0
        %2399 = vmatpush.msra.mxu0 0.0
        %2400 = vmatpush.msra.mxu0 0.0
        %2401 = vmatpush.msra.mxu0 0.0
        %2402 = vmatpush.msra.mxu0 0.0
        %2403 = vmatpush.msra.mxu0 0.0
        %2404 = vmatpush.msra.mxu0 0.0
        %2405 = vmatpush.msra.mxu0 0.0
        %2406 = vmatpush.msra.mxu0 0.0
        %2407 = vmatpush.msra.mxu0 0.0
        %2408 = vmatpush.msra.mxu0 0.0
        %2409 = vmatpush.msra.mxu0 0.0
        %2410 = vmatpush.msra.mxu0 0.0
        %2411 = vmatpush.msra.mxu0 0.0
        %2412 = vmatpush.msra.mxu0 0.0
        %2413 = vmatpush.msra.mxu0 %v509
        %2414 = vmatpush.msra.mxu0 %v493
        %2415 = vmatmul.f32.gmra.mxu0 %v2301
        %v2416 = vpop.f32.mrf.mxu0
        %v2417 = vadd.f32 %v1941, %v2416
        %2418 = vmatmul.f32.gmra.mxu0 %v2304
        %v2419 = vpop.f32.mrf.mxu0
        %v2420 = vadd.f32 %v1944, %v2419
        %2421 = vmatmul.f32.gmra.mxu0 %v2307
        %v2422 = vpop.f32.mrf.mxu0
        %v2423 = vadd.f32 %v1947, %v2422
        %2424 = vmatmul.f32.gmra.mxu0 %v2310
        %v2425 = vpop.f32.mrf.mxu0
        %v2426 = vadd.f32 %v1950, %v2425
        %2427 = vdwg.mxu0
        %2428 = vmatpush.msra.mxu0 0.0
        %2429 = vmatpush.msra.mxu0 0.0
        %2430 = vmatpush.msra.mxu0 0.0
        %2431 = vmatpush.msra.mxu0 0.0
        %2432 = vmatpush.msra.mxu0 0.0
        %2433 = vmatpush.msra.mxu0 0.0
        %2434 = vmatpush.msra.mxu0 0.0
        %2435 = vmatpush.msra.mxu0 0.0
        %2436 = vmatpush.msra.mxu0 0.0
        %2437 = vmatpush.msra.mxu0 0.0
        %2438 = vmatpush.msra.mxu0 0.0
        %2439 = vmatpush.msra.mxu0 0.0
        %2440 = vmatpush.msra.mxu0 0.0
        %2441 = vmatpush.msra.mxu0 0.0
        %2442 = vmatpush.msra.mxu0 %v510
        %2443 = vmatpush.msra.mxu0 %v494
        %2444 = vmatmul.f32.gmra.mxu0 %v2301
        %v2445 = vpop.f32.mrf.mxu0
        %v2446 = vadd.f32 %v1970, %v2445
        %2447 = vmatmul.f32.gmra.mxu0 %v2304
        %v2448 = vpop.f32.mrf.mxu0
        %v2449 = vadd.f32 %v1973, %v2448
        %2450 = vmatmul.f32.gmra.mxu0 %v2307
        %v2451 = vpop.f32.mrf.mxu0
        %v2452 = vadd.f32 %v1976, %v2451
        %2453 = vmatmul.f32.gmra.mxu0 %v2310
        %v2454 = vpop.f32.mrf.mxu0
        %v2455 = vadd.f32 %v1979, %v2454
        %2456 = vdwg.mxu0
        %2457 = vmatpush.msra.mxu0 0.0
        %2458 = vmatpush.msra.mxu0 0.0
        %2459 = vmatpush.msra.mxu0 0.0
        %2460 = vmatpush.msra.mxu0 0.0
        %2461 = vmatpush.msra.mxu0 0.0
        %2462 = vmatpush.msra.mxu0 0.0
        %2463 = vmatpush.msra.mxu0 0.0
        %2464 = vmatpush.msra.mxu0 0.0
        %2465 = vmatpush.msra.mxu0 0.0
        %2466 = vmatpush.msra.mxu0 0.0
        %2467 = vmatpush.msra.mxu0 0.0
        %2468 = vmatpush.msra.mxu0 0.0
        %2469 = vmatpush.msra.mxu0 0.0
        %2470 = vmatpush.msra.mxu0 0.0
        %2471 = vmatpush.msra.mxu0 %v511
        %2472 = vmatpush.msra.mxu0 %v495
        %2473 = vmatmul.f32.gmra.mxu0 %v2301
        %v2474 = vpop.f32.mrf.mxu0
        %v2475 = vadd.f32 %v1999, %v2474
        %2476 = vmatmul.f32.gmra.mxu0 %v2304
        %v2477 = vpop.f32.mrf.mxu0
        %v2478 = vadd.f32 %v2002, %v2477
        %2479 = vmatmul.f32.gmra.mxu0 %v2307
        %v2480 = vpop.f32.mrf.mxu0
        %v2481 = vadd.f32 %v2005, %v2480
        %2482 = vmatmul.f32.gmra.mxu0 %v2310
        %v2483 = vpop.f32.mrf.mxu0
        %v2484 = vadd.f32 %v2008, %v2483
        %2485 = vdwg.mxu0
        %2486 = vmatpush.msra.mxu0 0.0
        %2487 = vmatpush.msra.mxu0 0.0
        %2488 = vmatpush.msra.mxu0 0.0
        %2489 = vmatpush.msra.mxu0 0.0
        %2490 = vmatpush.msra.mxu0 0.0
        %2491 = vmatpush.msra.mxu0 0.0
        %2492 = vmatpush.msra.mxu0 0.0
        %2493 = vmatpush.msra.mxu0 0.0
        %2494 = vmatpush.msra.mxu0 0.0
        %2495 = vmatpush.msra.mxu0 0.0
        %2496 = vmatpush.msra.mxu0 0.0
        %2497 = vmatpush.msra.mxu0 0.0
        %2498 = vmatpush.msra.mxu0 0.0
        %2499 = vmatpush.msra.mxu0 0.0
        %2500 = vmatpush.msra.mxu0 %v512
        %2501 = vmatpush.msra.mxu0 %v496
        %2502 = vmatmul.f32.gmra.mxu0 %v2301
        %v2503 = vpop.f32.mrf.mxu0
        %v2504 = vadd.f32 %v2028, %v2503
        %2505 = vmatmul.f32.gmra.mxu0 %v2304
        %v2506 = vpop.f32.mrf.mxu0
        %v2507 = vadd.f32 %v2031, %v2506
        %2508 = vmatmul.f32.gmra.mxu0 %v2307
        %v2509 = vpop.f32.mrf.mxu0
        %v2510 = vadd.f32 %v2034, %v2509
        %2511 = vmatmul.f32.gmra.mxu0 %v2310
        %v2512 = vpop.f32.mrf.mxu0
        %v2513 = vadd.f32 %v2037, %v2512
        %2514 = vdwg.mxu0
        %2515 = vmatpush.msra.mxu0 0.0
        %2516 = vmatpush.msra.mxu0 0.0
        %2517 = vmatpush.msra.mxu0 0.0
        %2518 = vmatpush.msra.mxu0 0.0
        %2519 = vmatpush.msra.mxu0 0.0
        %2520 = vmatpush.msra.mxu0 0.0
        %2521 = vmatpush.msra.mxu0 0.0
        %2522 = vmatpush.msra.mxu0 0.0
        %2523 = vmatpush.msra.mxu0 0.0
        %2524 = vmatpush.msra.mxu0 0.0
        %2525 = vmatpush.msra.mxu0 0.0
        %2526 = vmatpush.msra.mxu0 0.0
        %2527 = vmatpush.msra.mxu0 0.0
        %2528 = vmatpush.msra.mxu0 0.0
        %2529 = vmatpush.msra.mxu0 %v513
        %2530 = vmatpush.msra.mxu0 %v497
        %2531 = vmatmul.f32.gmra.mxu0 %v2301
        %v2532 = vpop.f32.mrf.mxu0
        %v2533 = vadd.f32 %v2057, %v2532
        %2534 = vmatmul.f32.gmra.mxu0 %v2304
        %v2535 = vpop.f32.mrf.mxu0
        %v2536 = vadd.f32 %v2060, %v2535
        %2537 = vmatmul.f32.gmra.mxu0 %v2307
        %v2538 = vpop.f32.mrf.mxu0
        %v2539 = vadd.f32 %v2063, %v2538
        %2540 = vmatmul.f32.gmra.mxu0 %v2310
        %v2541 = vpop.f32.mrf.mxu0
        %v2542 = vadd.f32 %v2066, %v2541
        %2543 = vdwg.mxu0
        %2544 = vmatpush.msra.mxu0 0.0
        %2545 = vmatpush.msra.mxu0 0.0
        %2546 = vmatpush.msra.mxu0 0.0
        %2547 = vmatpush.msra.mxu0 0.0
        %2548 = vmatpush.msra.mxu0 0.0
        %2549 = vmatpush.msra.mxu0 0.0
        %2550 = vmatpush.msra.mxu0 0.0
        %2551 = vmatpush.msra.mxu0 0.0
        %2552 = vmatpush.msra.mxu0 0.0
        %2553 = vmatpush.msra.mxu0 0.0
        %2554 = vmatpush.msra.mxu0 0.0
        %2555 = vmatpush.msra.mxu0 0.0
        %2556 = vmatpush.msra.mxu0 0.0
        %2557 = vmatpush.msra.mxu0 0.0
        %2558 = vmatpush.msra.mxu0 %v514
        %2559 = vmatpush.msra.mxu0 %v498
        %2560 = vmatmul.f32.gmra.mxu0 %v2301
        %v2561 = vpop.f32.mrf.mxu0
        %v2562 = vadd.f32 %v2086, %v2561
        %2563 = vmatmul.f32.gmra.mxu0 %v2304
        %v2564 = vpop.f32.mrf.mxu0
        %v2565 = vadd.f32 %v2089, %v2564
        %2566 = vmatmul.f32.gmra.mxu0 %v2307
        %v2567 = vpop.f32.mrf.mxu0
        %v2568 = vadd.f32 %v2092, %v2567
        %2569 = vmatmul.f32.gmra.mxu0 %v2310
        %v2570 = vpop.f32.mrf.mxu0
        %v2571 = vadd.f32 %v2095, %v2570
        %2572 = vdwg.mxu0
        %2573 = vmatpush.msra.mxu0 0.0
        %2574 = vmatpush.msra.mxu0 0.0
        %2575 = vmatpush.msra.mxu0 0.0
        %2576 = vmatpush.msra.mxu0 0.0
        %2577 = vmatpush.msra.mxu0 0.0
        %2578 = vmatpush.msra.mxu0 0.0
        %2579 = vmatpush.msra.mxu0 0.0
        %2580 = vmatpush.msra.mxu0 0.0
        %2581 = vmatpush.msra.mxu0 0.0
        %2582 = vmatpush.msra.mxu0 0.0
        %2583 = vmatpush.msra.mxu0 0.0
        %2584 = vmatpush.msra.mxu0 0.0
        %2585 = vmatpush.msra.mxu0 0.0
        %2586 = vmatpush.msra.mxu0 0.0
        %2587 = vmatpush.msra.mxu0 %v515
        %2588 = vmatpush.msra.mxu0 %v499
        %2589 = vmatmul.f32.gmra.mxu0 %v2301
        %v2590 = vpop.f32.mrf.mxu0
        %v2591 = vadd.f32 %v2115, %v2590
        %2592 = vmatmul.f32.gmra.mxu0 %v2304
        %v2593 = vpop.f32.mrf.mxu0
        %v2594 = vadd.f32 %v2118, %v2593
        %2595 = vmatmul.f32.gmra.mxu0 %v2307
        %v2596 = vpop.f32.mrf.mxu0
        %v2597 = vadd.f32 %v2121, %v2596
        %2598 = vmatmul.f32.gmra.mxu0 %v2310
        %v2599 = vpop.f32.mrf.mxu0
        %v2600 = vadd.f32 %v2124, %v2599
        %2601 = vdwg.mxu0
        %2602 = vmatpush.msra.mxu0 0.0
        %2603 = vmatpush.msra.mxu0 0.0
        %2604 = vmatpush.msra.mxu0 0.0
        %2605 = vmatpush.msra.mxu0 0.0
        %2606 = vmatpush.msra.mxu0 0.0
        %2607 = vmatpush.msra.mxu0 0.0
        %2608 = vmatpush.msra.mxu0 0.0
        %2609 = vmatpush.msra.mxu0 0.0
        %2610 = vmatpush.msra.mxu0 0.0
        %2611 = vmatpush.msra.mxu0 0.0
        %2612 = vmatpush.msra.mxu0 0.0
        %2613 = vmatpush.msra.mxu0 0.0
        %2614 = vmatpush.msra.mxu0 0.0
        %2615 = vmatpush.msra.mxu0 0.0
        %2616 = vmatpush.msra.mxu0 %v516
        %2617 = vmatpush.msra.mxu0 %v500
        %2618 = vmatmul.f32.gmra.mxu0 %v2301
        %v2619 = vpop.f32.mrf.mxu0
        %v2620 = vadd.f32 %v2144, %v2619
        %2621 = vmatmul.f32.gmra.mxu0 %v2304
        %v2622 = vpop.f32.mrf.mxu0
        %v2623 = vadd.f32 %v2147, %v2622
        %2624 = vmatmul.f32.gmra.mxu0 %v2307
        %v2625 = vpop.f32.mrf.mxu0
        %v2626 = vadd.f32 %v2150, %v2625
        %2627 = vmatmul.f32.gmra.mxu0 %v2310
        %v2628 = vpop.f32.mrf.mxu0
        %v2629 = vadd.f32 %v2153, %v2628
        %2630 = vdwg.mxu0
        %2631 = vmatpush.msra.mxu0 0.0
        %2632 = vmatpush.msra.mxu0 0.0
        %2633 = vmatpush.msra.mxu0 0.0
        %2634 = vmatpush.msra.mxu0 0.0
        %2635 = vmatpush.msra.mxu0 0.0
        %2636 = vmatpush.msra.mxu0 0.0
        %2637 = vmatpush.msra.mxu0 0.0
        %2638 = vmatpush.msra.mxu0 0.0
        %2639 = vmatpush.msra.mxu0 0.0
        %2640 = vmatpush.msra.mxu0 0.0
        %2641 = vmatpush.msra.mxu0 0.0
        %2642 = vmatpush.msra.mxu0 0.0
        %2643 = vmatpush.msra.mxu0 0.0
        %2644 = vmatpush.msra.mxu0 0.0
        %2645 = vmatpush.msra.mxu0 %v517
        %2646 = vmatpush.msra.mxu0 %v501
        %2647 = vmatmul.f32.gmra.mxu0 %v2301
        %v2648 = vpop.f32.mrf.mxu0
        %v2649 = vadd.f32 %v2173, %v2648
        %2650 = vmatmul.f32.gmra.mxu0 %v2304
        %v2651 = vpop.f32.mrf.mxu0
        %v2652 = vadd.f32 %v2176, %v2651
        %2653 = vmatmul.f32.gmra.mxu0 %v2307
        %v2654 = vpop.f32.mrf.mxu0
        %v2655 = vadd.f32 %v2179, %v2654
        %2656 = vmatmul.f32.gmra.mxu0 %v2310
        %v2657 = vpop.f32.mrf.mxu0
        %v2658 = vadd.f32 %v2182, %v2657
        %2659 = vdwg.mxu0
        %2660 = vmatpush.msra.mxu0 0.0
        %2661 = vmatpush.msra.mxu0 0.0
        %2662 = vmatpush.msra.mxu0 0.0
        %2663 = vmatpush.msra.mxu0 0.0
        %2664 = vmatpush.msra.mxu0 0.0
        %2665 = vmatpush.msra.mxu0 0.0
        %2666 = vmatpush.msra.mxu0 0.0
        %2667 = vmatpush.msra.mxu0 0.0
        %2668 = vmatpush.msra.mxu0 0.0
        %2669 = vmatpush.msra.mxu0 0.0
        %2670 = vmatpush.msra.mxu0 0.0
        %2671 = vmatpush.msra.mxu0 0.0
        %2672 = vmatpush.msra.mxu0 0.0
        %2673 = vmatpush.msra.mxu0 0.0
        %2674 = vmatpush.msra.mxu0 %v518
        %2675 = vmatpush.msra.mxu0 %v502
        %2676 = vmatmul.f32.gmra.mxu0 %v2301
        %v2677 = vpop.f32.mrf.mxu0
        %v2678 = vadd.f32 %v2202, %v2677
        %2679 = vmatmul.f32.gmra.mxu0 %v2304
        %v2680 = vpop.f32.mrf.mxu0
        %v2681 = vadd.f32 %v2205, %v2680
        %2682 = vmatmul.f32.gmra.mxu0 %v2307
        %v2683 = vpop.f32.mrf.mxu0
        %v2684 = vadd.f32 %v2208, %v2683
        %2685 = vmatmul.f32.gmra.mxu0 %v2310
        %v2686 = vpop.f32.mrf.mxu0
        %v2687 = vadd.f32 %v2211, %v2686
        %2688 = vdwg.mxu0
        %2689 = vmatpush.msra.mxu0 0.0
        %2690 = vmatpush.msra.mxu0 0.0
        %2691 = vmatpush.msra.mxu0 0.0
        %2692 = vmatpush.msra.mxu0 0.0
        %2693 = vmatpush.msra.mxu0 0.0
        %2694 = vmatpush.msra.mxu0 0.0
        %2695 = vmatpush.msra.mxu0 0.0
        %2696 = vmatpush.msra.mxu0 0.0
        %2697 = vmatpush.msra.mxu0 0.0
        %2698 = vmatpush.msra.mxu0 0.0
        %2699 = vmatpush.msra.mxu0 0.0
        %2700 = vmatpush.msra.mxu0 0.0
        %2701 = vmatpush.msra.mxu0 0.0
        %2702 = vmatpush.msra.mxu0 0.0
        %2703 = vmatpush.msra.mxu0 %v519
        %2704 = vmatpush.msra.mxu0 %v503
        %2705 = vmatmul.f32.gmra.mxu0 %v2301
        %v2706 = vpop.f32.mrf.mxu0
        %v2707 = vadd.f32 %v2231, %v2706
        %2708 = vmatmul.f32.gmra.mxu0 %v2304
        %v2709 = vpop.f32.mrf.mxu0
        %v2710 = vadd.f32 %v2234, %v2709
        %2711 = vmatmul.f32.gmra.mxu0 %v2307
        %v2712 = vpop.f32.mrf.mxu0
        %v2713 = vadd.f32 %v2237, %v2712
        %2714 = vmatmul.f32.gmra.mxu0 %v2310
        %v2715 = vpop.f32.mrf.mxu0
        %v2716 = vadd.f32 %v2240, %v2715
        %2717 = vdwg.mxu0
        %2718 = vmatpush.msra.mxu0 0.0
        %2719 = vmatpush.msra.mxu0 0.0
        %2720 = vmatpush.msra.mxu0 0.0
        %2721 = vmatpush.msra.mxu0 0.0
        %2722 = vmatpush.msra.mxu0 0.0
        %2723 = vmatpush.msra.mxu0 0.0
        %2724 = vmatpush.msra.mxu0 0.0
        %2725 = vmatpush.msra.mxu0 0.0
        %2726 = vmatpush.msra.mxu0 0.0
        %2727 = vmatpush.msra.mxu0 0.0
        %2728 = vmatpush.msra.mxu0 0.0
        %2729 = vmatpush.msra.mxu0 0.0
        %2730 = vmatpush.msra.mxu0 0.0
        %2731 = vmatpush.msra.mxu0 0.0
        %2732 = vmatpush.msra.mxu0 %v520
        %2733 = vmatpush.msra.mxu0 %v504
        %2734 = vmatmul.f32.gmra.mxu0 %v2301
        %v2735 = vpop.f32.mrf.mxu0
        %v2736 = vadd.f32 %v2260, %v2735
        %2737 = vmatmul.f32.gmra.mxu0 %v2304
        %v2738 = vpop.f32.mrf.mxu0
        %v2739 = vadd.f32 %v2263, %v2738
        %2740 = vmatmul.f32.gmra.mxu0 %v2307
        %v2741 = vpop.f32.mrf.mxu0
        %v2742 = vadd.f32 %v2266, %v2741
        %2743 = vmatmul.f32.gmra.mxu0 %v2310
        %v2744 = vpop.f32.mrf.mxu0
        %v2745 = vadd.f32 %v2269, %v2744
        %2746 = vdwg.mxu0
        %2747 = vmatpush.msra.mxu0 0.0
        %2748 = vmatpush.msra.mxu0 0.0
        %2749 = vmatpush.msra.mxu0 0.0
        %2750 = vmatpush.msra.mxu0 0.0
        %2751 = vmatpush.msra.mxu0 0.0
        %2752 = vmatpush.msra.mxu0 0.0
        %2753 = vmatpush.msra.mxu0 0.0
        %2754 = vmatpush.msra.mxu0 0.0
        %2755 = vmatpush.msra.mxu0 0.0
        %2756 = vmatpush.msra.mxu0 0.0
        %2757 = vmatpush.msra.mxu0 0.0
        %2758 = vmatpush.msra.mxu0 0.0
        %2759 = vmatpush.msra.mxu0 0.0
        %2760 = vmatpush.msra.mxu0 0.0
        %2761 = vmatpush.msra.mxu0 %v521
        %2762 = vmatpush.msra.mxu0 %v505
        %2763 = vmatmul.f32.gmra.mxu0 %v2301
        %v2764 = vpop.f32.mrf.mxu0
        %v2765 = vadd.f32 %v2289, %v2764
        %2766 = vmatmul.f32.gmra.mxu0 %v2304
        %v2767 = vpop.f32.mrf.mxu0
        %v2768 = vadd.f32 %v2292, %v2767
        %2769 = vmatmul.f32.gmra.mxu0 %v2307
        %v2770 = vpop.f32.mrf.mxu0
        %v2771 = vadd.f32 %v2295, %v2770
        %2772 = vmatmul.f32.gmra.mxu0 %v2310
        %v2773 = vpop.f32.mrf.mxu0
        %v2774 = vadd.f32 %v2298, %v2773
        %2775 = vdwg.mxu0
        %v2776 = vld [vmem:[%s9] sm:$0xff]
        %v2777 = vld [vmem:[%s9 + $0x8] sm:$0xff]
        %v2778 = vld [vmem:[%s9 + $0x10] sm:$0xff]
        %v2779 = vld [vmem:[%s9 + $0x18] sm:$0xff]
        %2781 = vset.pattern.permute.xlu0 0
        %2782 = vperm.xlu0 %2781, %v2776
        %v2783 = vpop.permute.xlu0 %2782
        %2786 = vset.pattern.permute.xlu0 0
        %2787 = vperm.xlu0 %2786, %v2777
        %v2788 = vpop.permute.xlu0 %2787
        %2791 = vset.pattern.permute.xlu0 0
        %2792 = vperm.xlu0 %2791, %v2778
        %v2793 = vpop.permute.xlu0 %2792
        %2796 = vset.pattern.permute.xlu0 0
        %2797 = vperm.xlu0 %2796, %v2779
        %v2798 = vpop.permute.xlu0 %2797
        %v2800 = vadd.f32 %v2330, %v2783
        %v2801 = vadd.f32 %v2359, %v2783
        %v2802 = vadd.f32 %v2388, %v2783
        %v2803 = vadd.f32 %v2417, %v2783
        %v2804 = vadd.f32 %v2446, %v2783
        %v2805 = vadd.f32 %v2475, %v2783
        %v2806 = vadd.f32 %v2504, %v2783
        %v2807 = vadd.f32 %v2533, %v2783
        %v2808 = vadd.f32 %v2562, %v2783
        %v2809 = vadd.f32 %v2591, %v2783
        %v2810 = vadd.f32 %v2620, %v2783
        %v2811 = vadd.f32 %v2649, %v2783
        %v2812 = vadd.f32 %v2678, %v2783
        %v2813 = vadd.f32 %v2707, %v2783
        %v2814 = vadd.f32 %v2736, %v2783
        %v2815 = vadd.f32 %v2765, %v2783
        %v2816 = vadd.f32 %v2333, %v2788
        %v2817 = vadd.f32 %v2362, %v2788
        %v2818 = vadd.f32 %v2391, %v2788
        %v2819 = vadd.f32 %v2420, %v2788
        %v2820 = vadd.f32 %v2449, %v2788
        %v2821 = vadd.f32 %v2478, %v2788
        %v2822 = vadd.f32 %v2507, %v2788
        %v2823 = vadd.f32 %v2536, %v2788
        %v2824 = vadd.f32 %v2565, %v2788
        %v2825 = vadd.f32 %v2594, %v2788
        %v2826 = vadd.f32 %v2623, %v2788
        %v2827 = vadd.f32 %v2652, %v2788
        %v2828 = vadd.f32 %v2681, %v2788
        %v2829 = vadd.f32 %v2710, %v2788
        %v2830 = vadd.f32 %v2739, %v2788
        %v2831 = vadd.f32 %v2768, %v2788
        %v2832 = vadd.f32 %v2336, %v2793
        %v2833 = vadd.f32 %v2365, %v2793
        %v2834 = vadd.f32 %v2394, %v2793
        %v2835 = vadd.f32 %v2423, %v2793
        %v2836 = vadd.f32 %v2452, %v2793
        %v2837 = vadd.f32 %v2481, %v2793
        %v2838 = vadd.f32 %v2510, %v2793
        %v2839 = vadd.f32 %v2539, %v2793
        %v2840 = vadd.f32 %v2568, %v2793
        %v2841 = vadd.f32 %v2597, %v2793
        %v2842 = vadd.f32 %v2626, %v2793
        %v2843 = vadd.f32 %v2655, %v2793
        %v2844 = vadd.f32 %v2684, %v2793
        %v2845 = vadd.f32 %v2713, %v2793
        %v2846 = vadd.f32 %v2742, %v2793
        %v2847 = vadd.f32 %v2771, %v2793
        %v2848 = vadd.f32 %v2339, %v2798
        %v2849 = vadd.f32 %v2368, %v2798
        %v2850 = vadd.f32 %v2397, %v2798
        %v2851 = vadd.f32 %v2426, %v2798
        %v2852 = vadd.f32 %v2455, %v2798
        %v2853 = vadd.f32 %v2484, %v2798
        %v2854 = vadd.f32 %v2513, %v2798
        %v2855 = vadd.f32 %v2542, %v2798
        %v2856 = vadd.f32 %v2571, %v2798
        %v2857 = vadd.f32 %v2600, %v2798
        %v2858 = vadd.f32 %v2629, %v2798
        %v2859 = vadd.f32 %v2658, %v2798
        %v2860 = vadd.f32 %v2687, %v2798
        %v2861 = vadd.f32 %v2716, %v2798
        %v2862 = vadd.f32 %v2745, %v2798
        %v2863 = vadd.f32 %v2774, %v2798
        %v2864 = vmax.f32 %v2800, 0.0
        %v2865 = vmax.f32 %v2801, 0.0
        %v2866 = vmax.f32 %v2802, 0.0
        %v2867 = vmax.f32 %v2803, 0.0
        %v2868 = vmax.f32 %v2804, 0.0
        %v2869 = vmax.f32 %v2805, 0.0
        %v2870 = vmax.f32 %v2806, 0.0
        %v2871 = vmax.f32 %v2807, 0.0
        %v2872 = vmax.f32 %v2808, 0.0
        %v2873 = vmax.f32 %v2809, 0.0
        %v2874 = vmax.f32 %v2810, 0.0
        %v2875 = vmax.f32 %v2811, 0.0
        %v2876 = vmax.f32 %v2812, 0.0
        %v2877 = vmax.f32 %v2813, 0.0
        %v2878 = vmax.f32 %v2814, 0.0
        %v2879 = vmax.f32 %v2815, 0.0
        %v2880 = vmax.f32 %v2816, 0.0
        %v2881 = vmax.f32 %v2817, 0.0
        %v2882 = vmax.f32 %v2818, 0.0
        %v2883 = vmax.f32 %v2819, 0.0
        %v2884 = vmax.f32 %v2820, 0.0
        %v2885 = vmax.f32 %v2821, 0.0
        %v2886 = vmax.f32 %v2822, 0.0
        %v2887 = vmax.f32 %v2823, 0.0
        %v2888 = vmax.f32 %v2824, 0.0
        %v2889 = vmax.f32 %v2825, 0.0
        %v2890 = vmax.f32 %v2826, 0.0
        %v2891 = vmax.f32 %v2827, 0.0
        %v2892 = vmax.f32 %v2828, 0.0
        %v2893 = vmax.f32 %v2829, 0.0
        %v2894 = vmax.f32 %v2830, 0.0
        %v2895 = vmax.f32 %v2831, 0.0
        %v2896 = vmax.f32 %v2832, 0.0
        %v2897 = vmax.f32 %v2833, 0.0
        %v2898 = vmax.f32 %v2834, 0.0
        %v2899 = vmax.f32 %v2835, 0.0
        %v2900 = vmax.f32 %v2836, 0.0
        %v2901 = vmax.f32 %v2837, 0.0
        %v2902 = vmax.f32 %v2838, 0.0
        %v2903 = vmax.f32 %v2839, 0.0
        %v2904 = vmax.f32 %v2840, 0.0
        %v2905 = vmax.f32 %v2841, 0.0
        %v2906 = vmax.f32 %v2842, 0.0
        %v2907 = vmax.f32 %v2843, 0.0
        %v2908 = vmax.f32 %v2844, 0.0
        %v2909 = vmax.f32 %v2845, 0.0
        %v2910 = vmax.f32 %v2846, 0.0
        %v2911 = vmax.f32 %v2847, 0.0
        %v2912 = vmax.f32 %v2848, 0.0
        %v2913 = vmax.f32 %v2849, 0.0
        %v2914 = vmax.f32 %v2850, 0.0
        %v2915 = vmax.f32 %v2851, 0.0
        %v2916 = vmax.f32 %v2852, 0.0
        %v2917 = vmax.f32 %v2853, 0.0
        %v2918 = vmax.f32 %v2854, 0.0
        %v2919 = vmax.f32 %v2855, 0.0
        %v2920 = vmax.f32 %v2856, 0.0
        %v2921 = vmax.f32 %v2857, 0.0
        %v2922 = vmax.f32 %v2858, 0.0
        %v2923 = vmax.f32 %v2859, 0.0
        %v2924 = vmax.f32 %v2860, 0.0
        %v2925 = vmax.f32 %v2861, 0.0
        %v2926 = vmax.f32 %v2862, 0.0
        %v2927 = vmax.f32 %v2863, 0.0
        %v2928 = vld [vmem:[%s10] sm:$0xff]
        %v2929 = vld [vmem:[%s10 + $0x8] sm:$0xff]
        %v2930 = vld [vmem:[%s10 + $0x10] sm:$0xff]
        %v2931 = vld [vmem:[%s10 + $0x18] sm:$0xff]
        %v2932 = vld [vmem:[%s11] sm:$0xff]
        %v2933 = vld [vmem:[%s11 + $0x8] sm:$0xff]
        %v2934 = vld [vmem:[%s11 + $0x10] sm:$0xff]
        %v2935 = vld [vmem:[%s11 + $0x18] sm:$0xff]
        %2937 = vset.pattern.permute.xlu0 0
        %2938 = vperm.xlu0 %2937, %v2932
        %v2939 = vpop.permute.xlu0 %2938
        %2942 = vset.pattern.permute.xlu0 0
        %2943 = vperm.xlu0 %2942, %v2933
        %v2944 = vpop.permute.xlu0 %2943
        %2947 = vset.pattern.permute.xlu0 0
        %2948 = vperm.xlu0 %2947, %v2934
        %v2949 = vpop.permute.xlu0 %2948
        %2952 = vset.pattern.permute.xlu0 0
        %2953 = vperm.xlu0 %2952, %v2935
        %v2954 = vpop.permute.xlu0 %2953
        %vm2956 = vcmask 261120
        %v2958 = vsel %vm2956, %v2928, 0
        %v2961 = vsel %vm2956, %v2929, 0
        %v2964 = vsel %vm2956, %v2930, 0
        %v2967 = vsel %vm2956, %v2931, 0
        %2969 = vmatpush.msra.mxu0 0.0
        %2970 = vmatpush.msra.mxu0 0.0
        %2971 = vmatpush.msra.mxu0 0.0
        %2972 = vmatpush.msra.mxu0 0.0
        %2973 = vmatpush.msra.mxu0 0.0
        %2974 = vmatpush.msra.mxu0 0.0
        %2975 = vmatpush.msra.mxu0 0.0
        %2976 = vmatpush.msra.mxu0 0.0
        %2977 = vmatpush.msra.mxu0 0.0
        %2978 = vmatpush.msra.mxu0 0.0
        %2979 = vmatpush.msra.mxu0 0.0
        %2980 = vmatpush.msra.mxu0 0.0
        %2981 = vmatpush.msra.mxu0 %v2912
        %2982 = vmatpush.msra.mxu0 %v2896
        %2983 = vmatpush.msra.mxu0 %v2880
        %2984 = vmatpush.msra.mxu0 %v2864
        %2985 = vmatmul.f32.gmra.mxu0 %v2958
        %v2986 = vpop.f32.mrf.mxu0
        %v2987 = vadd.f32 %v2939, %v2986
        %2988 = vmatmul.f32.gmra.mxu0 %v2961
        %v2989 = vpop.f32.mrf.mxu0
        %v2990 = vadd.f32 %v2944, %v2989
        %2991 = vmatmul.f32.gmra.mxu0 %v2964
        %v2992 = vpop.f32.mrf.mxu0
        %v2993 = vadd.f32 %v2949, %v2992
        %2994 = vmatmul.f32.gmra.mxu0 %v2967
        %v2995 = vpop.f32.mrf.mxu0
        %v2996 = vadd.f32 %v2954, %v2995
        %2997 = vdwg.mxu0
        %2998 = vmatpush.msra.mxu0 0.0
        %2999 = vmatpush.msra.mxu0 0.0
        %3000 = vmatpush.msra.mxu0 0.0
        %3001 = vmatpush.msra.mxu0 0.0
        %3002 = vmatpush.msra.mxu0 0.0
        %3003 = vmatpush.msra.mxu0 0.0
        %3004 = vmatpush.msra.mxu0 0.0
        %3005 = vmatpush.msra.mxu0 0.0
        %3006 = vmatpush.msra.mxu0 0.0
        %3007 = vmatpush.msra.mxu0 0.0
        %3008 = vmatpush.msra.mxu0 0.0
        %3009 = vmatpush.msra.mxu0 0.0
        %3010 = vmatpush.msra.mxu0 %v2913
        %3011 = vmatpush.msra.mxu0 %v2897
        %3012 = vmatpush.msra.mxu0 %v2881
        %3013 = vmatpush.msra.mxu0 %v2865
        %3014 = vmatmul.f32.gmra.mxu0 %v2958
        %v3015 = vpop.f32.mrf.mxu0
        %v3016 = vadd.f32 %v2939, %v3015
        %3017 = vmatmul.f32.gmra.mxu0 %v2961
        %v3018 = vpop.f32.mrf.mxu0
        %v3019 = vadd.f32 %v2944, %v3018
        %3020 = vmatmul.f32.gmra.mxu0 %v2964
        %v3021 = vpop.f32.mrf.mxu0
        %v3022 = vadd.f32 %v2949, %v3021
        %3023 = vmatmul.f32.gmra.mxu0 %v2967
        %v3024 = vpop.f32.mrf.mxu0
        %v3025 = vadd.f32 %v2954, %v3024
        %3026 = vdwg.mxu0
        %3027 = vmatpush.msra.mxu0 0.0
        %3028 = vmatpush.msra.mxu0 0.0
        %3029 = vmatpush.msra.mxu0 0.0
        %3030 = vmatpush.msra.mxu0 0.0
        %3031 = vmatpush.msra.mxu0 0.0
        %3032 = vmatpush.msra.mxu0 0.0
        %3033 = vmatpush.msra.mxu0 0.0
        %3034 = vmatpush.msra.mxu0 0.0
        %3035 = vmatpush.msra.mxu0 0.0
        %3036 = vmatpush.msra.mxu0 0.0
        %3037 = vmatpush.msra.mxu0 0.0
        %3038 = vmatpush.msra.mxu0 0.0
        %3039 = vmatpush.msra.mxu0 %v2914
        %3040 = vmatpush.msra.mxu0 %v2898
        %3041 = vmatpush.msra.mxu0 %v2882
        %3042 = vmatpush.msra.mxu0 %v2866
        %3043 = vmatmul.f32.gmra.mxu0 %v2958
        %v3044 = vpop.f32.mrf.mxu0
        %v3045 = vadd.f32 %v2939, %v3044
        %3046 = vmatmul.f32.gmra.mxu0 %v2961
        %v3047 = vpop.f32.mrf.mxu0
        %v3048 = vadd.f32 %v2944, %v3047
        %3049 = vmatmul.f32.gmra.mxu0 %v2964
        %v3050 = vpop.f32.mrf.mxu0
        %v3051 = vadd.f32 %v2949, %v3050
        %3052 = vmatmul.f32.gmra.mxu0 %v2967
        %v3053 = vpop.f32.mrf.mxu0
        %v3054 = vadd.f32 %v2954, %v3053
        %3055 = vdwg.mxu0
        %3056 = vmatpush.msra.mxu0 0.0
        %3057 = vmatpush.msra.mxu0 0.0
        %3058 = vmatpush.msra.mxu0 0.0
        %3059 = vmatpush.msra.mxu0 0.0
        %3060 = vmatpush.msra.mxu0 0.0
        %3061 = vmatpush.msra.mxu0 0.0
        %3062 = vmatpush.msra.mxu0 0.0
        %3063 = vmatpush.msra.mxu0 0.0
        %3064 = vmatpush.msra.mxu0 0.0
        %3065 = vmatpush.msra.mxu0 0.0
        %3066 = vmatpush.msra.mxu0 0.0
        %3067 = vmatpush.msra.mxu0 0.0
        %3068 = vmatpush.msra.mxu0 %v2915
        %3069 = vmatpush.msra.mxu0 %v2899
        %3070 = vmatpush.msra.mxu0 %v2883
        %3071 = vmatpush.msra.mxu0 %v2867
        %3072 = vmatmul.f32.gmra.mxu0 %v2958
        %v3073 = vpop.f32.mrf.mxu0
        %v3074 = vadd.f32 %v2939, %v3073
        %3075 = vmatmul.f32.gmra.mxu0 %v2961
        %v3076 = vpop.f32.mrf.mxu0
        %v3077 = vadd.f32 %v2944, %v3076
        %3078 = vmatmul.f32.gmra.mxu0 %v2964
        %v3079 = vpop.f32.mrf.mxu0
        %v3080 = vadd.f32 %v2949, %v3079
        %3081 = vmatmul.f32.gmra.mxu0 %v2967
        %v3082 = vpop.f32.mrf.mxu0
        %v3083 = vadd.f32 %v2954, %v3082
        %3084 = vdwg.mxu0
        %3085 = vmatpush.msra.mxu0 0.0
        %3086 = vmatpush.msra.mxu0 0.0
        %3087 = vmatpush.msra.mxu0 0.0
        %3088 = vmatpush.msra.mxu0 0.0
        %3089 = vmatpush.msra.mxu0 0.0
        %3090 = vmatpush.msra.mxu0 0.0
        %3091 = vmatpush.msra.mxu0 0.0
        %3092 = vmatpush.msra.mxu0 0.0
        %3093 = vmatpush.msra.mxu0 0.0
        %3094 = vmatpush.msra.mxu0 0.0
        %3095 = vmatpush.msra.mxu0 0.0
        %3096 = vmatpush.msra.mxu0 0.0
        %3097 = vmatpush.msra.mxu0 %v2916
        %3098 = vmatpush.msra.mxu0 %v2900
        %3099 = vmatpush.msra.mxu0 %v2884
        %3100 = vmatpush.msra.mxu0 %v2868
        %3101 = vmatmul.f32.gmra.mxu0 %v2958
        %v3102 = vpop.f32.mrf.mxu0
        %v3103 = vadd.f32 %v2939, %v3102
        %3104 = vmatmul.f32.gmra.mxu0 %v2961
        %v3105 = vpop.f32.mrf.mxu0
        %v3106 = vadd.f32 %v2944, %v3105
        %3107 = vmatmul.f32.gmra.mxu0 %v2964
        %v3108 = vpop.f32.mrf.mxu0
        %v3109 = vadd.f32 %v2949, %v3108
        %3110 = vmatmul.f32.gmra.mxu0 %v2967
        %v3111 = vpop.f32.mrf.mxu0
        %v3112 = vadd.f32 %v2954, %v3111
        %3113 = vdwg.mxu0
        %3114 = vmatpush.msra.mxu0 0.0
        %3115 = vmatpush.msra.mxu0 0.0
        %3116 = vmatpush.msra.mxu0 0.0
        %3117 = vmatpush.msra.mxu0 0.0
        %3118 = vmatpush.msra.mxu0 0.0
        %3119 = vmatpush.msra.mxu0 0.0
        %3120 = vmatpush.msra.mxu0 0.0
        %3121 = vmatpush.msra.mxu0 0.0
        %3122 = vmatpush.msra.mxu0 0.0
        %3123 = vmatpush.msra.mxu0 0.0
        %3124 = vmatpush.msra.mxu0 0.0
        %3125 = vmatpush.msra.mxu0 0.0
        %3126 = vmatpush.msra.mxu0 %v2917
        %3127 = vmatpush.msra.mxu0 %v2901
        %3128 = vmatpush.msra.mxu0 %v2885
        %3129 = vmatpush.msra.mxu0 %v2869
        %3130 = vmatmul.f32.gmra.mxu0 %v2958
        %v3131 = vpop.f32.mrf.mxu0
        %v3132 = vadd.f32 %v2939, %v3131
        %3133 = vmatmul.f32.gmra.mxu0 %v2961
        %v3134 = vpop.f32.mrf.mxu0
        %v3135 = vadd.f32 %v2944, %v3134
        %3136 = vmatmul.f32.gmra.mxu0 %v2964
        %v3137 = vpop.f32.mrf.mxu0
        %v3138 = vadd.f32 %v2949, %v3137
        %3139 = vmatmul.f32.gmra.mxu0 %v2967
        %v3140 = vpop.f32.mrf.mxu0
        %v3141 = vadd.f32 %v2954, %v3140
        %3142 = vdwg.mxu0
        %3143 = vmatpush.msra.mxu0 0.0
        %3144 = vmatpush.msra.mxu0 0.0
        %3145 = vmatpush.msra.mxu0 0.0
        %3146 = vmatpush.msra.mxu0 0.0
        %3147 = vmatpush.msra.mxu0 0.0
        %3148 = vmatpush.msra.mxu0 0.0
        %3149 = vmatpush.msra.mxu0 0.0
        %3150 = vmatpush.msra.mxu0 0.0
        %3151 = vmatpush.msra.mxu0 0.0
        %3152 = vmatpush.msra.mxu0 0.0
        %3153 = vmatpush.msra.mxu0 0.0
        %3154 = vmatpush.msra.mxu0 0.0
        %3155 = vmatpush.msra.mxu0 %v2918
        %3156 = vmatpush.msra.mxu0 %v2902
        %3157 = vmatpush.msra.mxu0 %v2886
        %3158 = vmatpush.msra.mxu0 %v2870
        %3159 = vmatmul.f32.gmra.mxu0 %v2958
        %v3160 = vpop.f32.mrf.mxu0
        %v3161 = vadd.f32 %v2939, %v3160
        %3162 = vmatmul.f32.gmra.mxu0 %v2961
        %v3163 = vpop.f32.mrf.mxu0
        %v3164 = vadd.f32 %v2944, %v3163
        %3165 = vmatmul.f32.gmra.mxu0 %v2964
        %v3166 = vpop.f32.mrf.mxu0
        %v3167 = vadd.f32 %v2949, %v3166
        %3168 = vmatmul.f32.gmra.mxu0 %v2967
        %v3169 = vpop.f32.mrf.mxu0
        %v3170 = vadd.f32 %v2954, %v3169
        %3171 = vdwg.mxu0
        %3172 = vmatpush.msra.mxu0 0.0
        %3173 = vmatpush.msra.mxu0 0.0
        %3174 = vmatpush.msra.mxu0 0.0
        %3175 = vmatpush.msra.mxu0 0.0
        %3176 = vmatpush.msra.mxu0 0.0
        %3177 = vmatpush.msra.mxu0 0.0
        %3178 = vmatpush.msra.mxu0 0.0
        %3179 = vmatpush.msra.mxu0 0.0
        %3180 = vmatpush.msra.mxu0 0.0
        %3181 = vmatpush.msra.mxu0 0.0
        %3182 = vmatpush.msra.mxu0 0.0
        %3183 = vmatpush.msra.mxu0 0.0
        %3184 = vmatpush.msra.mxu0 %v2919
        %3185 = vmatpush.msra.mxu0 %v2903
        %3186 = vmatpush.msra.mxu0 %v2887
        %3187 = vmatpush.msra.mxu0 %v2871
        %3188 = vmatmul.f32.gmra.mxu0 %v2958
        %v3189 = vpop.f32.mrf.mxu0
        %v3190 = vadd.f32 %v2939, %v3189
        %3191 = vmatmul.f32.gmra.mxu0 %v2961
        %v3192 = vpop.f32.mrf.mxu0
        %v3193 = vadd.f32 %v2944, %v3192
        %3194 = vmatmul.f32.gmra.mxu0 %v2964
        %v3195 = vpop.f32.mrf.mxu0
        %v3196 = vadd.f32 %v2949, %v3195
        %3197 = vmatmul.f32.gmra.mxu0 %v2967
        %v3198 = vpop.f32.mrf.mxu0
        %v3199 = vadd.f32 %v2954, %v3198
        %3200 = vdwg.mxu0
        %3201 = vmatpush.msra.mxu0 0.0
        %3202 = vmatpush.msra.mxu0 0.0
        %3203 = vmatpush.msra.mxu0 0.0
        %3204 = vmatpush.msra.mxu0 0.0
        %3205 = vmatpush.msra.mxu0 0.0
        %3206 = vmatpush.msra.mxu0 0.0
        %3207 = vmatpush.msra.mxu0 0.0
        %3208 = vmatpush.msra.mxu0 0.0
        %3209 = vmatpush.msra.mxu0 0.0
        %3210 = vmatpush.msra.mxu0 0.0
        %3211 = vmatpush.msra.mxu0 0.0
        %3212 = vmatpush.msra.mxu0 0.0
        %3213 = vmatpush.msra.mxu0 %v2920
        %3214 = vmatpush.msra.mxu0 %v2904
        %3215 = vmatpush.msra.mxu0 %v2888
        %3216 = vmatpush.msra.mxu0 %v2872
        %3217 = vmatmul.f32.gmra.mxu0 %v2958
        %v3218 = vpop.f32.mrf.mxu0
        %v3219 = vadd.f32 %v2939, %v3218
        %3220 = vmatmul.f32.gmra.mxu0 %v2961
        %v3221 = vpop.f32.mrf.mxu0
        %v3222 = vadd.f32 %v2944, %v3221
        %3223 = vmatmul.f32.gmra.mxu0 %v2964
        %v3224 = vpop.f32.mrf.mxu0
        %v3225 = vadd.f32 %v2949, %v3224
        %3226 = vmatmul.f32.gmra.mxu0 %v2967
        %v3227 = vpop.f32.mrf.mxu0
        %v3228 = vadd.f32 %v2954, %v3227
        %3229 = vdwg.mxu0
        %3230 = vmatpush.msra.mxu0 0.0
        %3231 = vmatpush.msra.mxu0 0.0
        %3232 = vmatpush.msra.mxu0 0.0
        %3233 = vmatpush.msra.mxu0 0.0
        %3234 = vmatpush.msra.mxu0 0.0
        %3235 = vmatpush.msra.mxu0 0.0
        %3236 = vmatpush.msra.mxu0 0.0
        %3237 = vmatpush.msra.mxu0 0.0
        %3238 = vmatpush.msra.mxu0 0.0
        %3239 = vmatpush.msra.mxu0 0.0
        %3240 = vmatpush.msra.mxu0 0.0
        %3241 = vmatpush.msra.mxu0 0.0
        %3242 = vmatpush.msra.mxu0 %v2921
        %3243 = vmatpush.msra.mxu0 %v2905
        %3244 = vmatpush.msra.mxu0 %v2889
        %3245 = vmatpush.msra.mxu0 %v2873
        %3246 = vmatmul.f32.gmra.mxu0 %v2958
        %v3247 = vpop.f32.mrf.mxu0
        %v3248 = vadd.f32 %v2939, %v3247
        %3249 = vmatmul.f32.gmra.mxu0 %v2961
        %v3250 = vpop.f32.mrf.mxu0
        %v3251 = vadd.f32 %v2944, %v3250
        %3252 = vmatmul.f32.gmra.mxu0 %v2964
        %v3253 = vpop.f32.mrf.mxu0
        %v3254 = vadd.f32 %v2949, %v3253
        %3255 = vmatmul.f32.gmra.mxu0 %v2967
        %v3256 = vpop.f32.mrf.mxu0
        %v3257 = vadd.f32 %v2954, %v3256
        %3258 = vdwg.mxu0
        %3259 = vmatpush.msra.mxu0 0.0
        %3260 = vmatpush.msra.mxu0 0.0
        %3261 = vmatpush.msra.mxu0 0.0
        %3262 = vmatpush.msra.mxu0 0.0
        %3263 = vmatpush.msra.mxu0 0.0
        %3264 = vmatpush.msra.mxu0 0.0
        %3265 = vmatpush.msra.mxu0 0.0
        %3266 = vmatpush.msra.mxu0 0.0
        %3267 = vmatpush.msra.mxu0 0.0
        %3268 = vmatpush.msra.mxu0 0.0
        %3269 = vmatpush.msra.mxu0 0.0
        %3270 = vmatpush.msra.mxu0 0.0
        %3271 = vmatpush.msra.mxu0 %v2922
        %3272 = vmatpush.msra.mxu0 %v2906
        %3273 = vmatpush.msra.mxu0 %v2890
        %3274 = vmatpush.msra.mxu0 %v2874
        %3275 = vmatmul.f32.gmra.mxu0 %v2958
        %v3276 = vpop.f32.mrf.mxu0
        %v3277 = vadd.f32 %v2939, %v3276
        %3278 = vmatmul.f32.gmra.mxu0 %v2961
        %v3279 = vpop.f32.mrf.mxu0
        %v3280 = vadd.f32 %v2944, %v3279
        %3281 = vmatmul.f32.gmra.mxu0 %v2964
        %v3282 = vpop.f32.mrf.mxu0
        %v3283 = vadd.f32 %v2949, %v3282
        %3284 = vmatmul.f32.gmra.mxu0 %v2967
        %v3285 = vpop.f32.mrf.mxu0
        %v3286 = vadd.f32 %v2954, %v3285
        %3287 = vdwg.mxu0
        %3288 = vmatpush.msra.mxu0 0.0
        %3289 = vmatpush.msra.mxu0 0.0
        %3290 = vmatpush.msra.mxu0 0.0
        %3291 = vmatpush.msra.mxu0 0.0
        %3292 = vmatpush.msra.mxu0 0.0
        %3293 = vmatpush.msra.mxu0 0.0
        %3294 = vmatpush.msra.mxu0 0.0
        %3295 = vmatpush.msra.mxu0 0.0
        %3296 = vmatpush.msra.mxu0 0.0
        %3297 = vmatpush.msra.mxu0 0.0
        %3298 = vmatpush.msra.mxu0 0.0
        %3299 = vmatpush.msra.mxu0 0.0
        %3300 = vmatpush.msra.mxu0 %v2923
        %3301 = vmatpush.msra.mxu0 %v2907
        %3302 = vmatpush.msra.mxu0 %v2891
        %3303 = vmatpush.msra.mxu0 %v2875
        %3304 = vmatmul.f32.gmra.mxu0 %v2958
        %v3305 = vpop.f32.mrf.mxu0
        %v3306 = vadd.f32 %v2939, %v3305
        %3307 = vmatmul.f32.gmra.mxu0 %v2961
        %v3308 = vpop.f32.mrf.mxu0
        %v3309 = vadd.f32 %v2944, %v3308
        %3310 = vmatmul.f32.gmra.mxu0 %v2964
        %v3311 = vpop.f32.mrf.mxu0
        %v3312 = vadd.f32 %v2949, %v3311
        %3313 = vmatmul.f32.gmra.mxu0 %v2967
        %v3314 = vpop.f32.mrf.mxu0
        %v3315 = vadd.f32 %v2954, %v3314
        %3316 = vdwg.mxu0
        %3317 = vmatpush.msra.mxu0 0.0
        %3318 = vmatpush.msra.mxu0 0.0
        %3319 = vmatpush.msra.mxu0 0.0
        %3320 = vmatpush.msra.mxu0 0.0
        %3321 = vmatpush.msra.mxu0 0.0
        %3322 = vmatpush.msra.mxu0 0.0
        %3323 = vmatpush.msra.mxu0 0.0
        %3324 = vmatpush.msra.mxu0 0.0
        %3325 = vmatpush.msra.mxu0 0.0
        %3326 = vmatpush.msra.mxu0 0.0
        %3327 = vmatpush.msra.mxu0 0.0
        %3328 = vmatpush.msra.mxu0 0.0
        %3329 = vmatpush.msra.mxu0 %v2924
        %3330 = vmatpush.msra.mxu0 %v2908
        %3331 = vmatpush.msra.mxu0 %v2892
        %3332 = vmatpush.msra.mxu0 %v2876
        %3333 = vmatmul.f32.gmra.mxu0 %v2958
        %v3334 = vpop.f32.mrf.mxu0
        %v3335 = vadd.f32 %v2939, %v3334
        %3336 = vmatmul.f32.gmra.mxu0 %v2961
        %v3337 = vpop.f32.mrf.mxu0
        %v3338 = vadd.f32 %v2944, %v3337
        %3339 = vmatmul.f32.gmra.mxu0 %v2964
        %v3340 = vpop.f32.mrf.mxu0
        %v3341 = vadd.f32 %v2949, %v3340
        %3342 = vmatmul.f32.gmra.mxu0 %v2967
        %v3343 = vpop.f32.mrf.mxu0
        %v3344 = vadd.f32 %v2954, %v3343
        %3345 = vdwg.mxu0
        %3346 = vmatpush.msra.mxu0 0.0
        %3347 = vmatpush.msra.mxu0 0.0
        %3348 = vmatpush.msra.mxu0 0.0
        %3349 = vmatpush.msra.mxu0 0.0
        %3350 = vmatpush.msra.mxu0 0.0
        %3351 = vmatpush.msra.mxu0 0.0
        %3352 = vmatpush.msra.mxu0 0.0
        %3353 = vmatpush.msra.mxu0 0.0
        %3354 = vmatpush.msra.mxu0 0.0
        %3355 = vmatpush.msra.mxu0 0.0
        %3356 = vmatpush.msra.mxu0 0.0
        %3357 = vmatpush.msra.mxu0 0.0
        %3358 = vmatpush.msra.mxu0 %v2925
        %3359 = vmatpush.msra.mxu0 %v2909
        %3360 = vmatpush.msra.mxu0 %v2893
        %3361 = vmatpush.msra.mxu0 %v2877
        %3362 = vmatmul.f32.gmra.mxu0 %v2958
        %v3363 = vpop.f32.mrf.mxu0
        %v3364 = vadd.f32 %v2939, %v3363
        %3365 = vmatmul.f32.gmra.mxu0 %v2961
        %v3366 = vpop.f32.mrf.mxu0
        %v3367 = vadd.f32 %v2944, %v3366
        %3368 = vmatmul.f32.gmra.mxu0 %v2964
        %v3369 = vpop.f32.mrf.mxu0
        %v3370 = vadd.f32 %v2949, %v3369
        %3371 = vmatmul.f32.gmra.mxu0 %v2967
        %v3372 = vpop.f32.mrf.mxu0
        %v3373 = vadd.f32 %v2954, %v3372
        %3374 = vdwg.mxu0
        %3375 = vmatpush.msra.mxu0 0.0
        %3376 = vmatpush.msra.mxu0 0.0
        %3377 = vmatpush.msra.mxu0 0.0
        %3378 = vmatpush.msra.mxu0 0.0
        %3379 = vmatpush.msra.mxu0 0.0
        %3380 = vmatpush.msra.mxu0 0.0
        %3381 = vmatpush.msra.mxu0 0.0
        %3382 = vmatpush.msra.mxu0 0.0
        %3383 = vmatpush.msra.mxu0 0.0
        %3384 = vmatpush.msra.mxu0 0.0
        %3385 = vmatpush.msra.mxu0 0.0
        %3386 = vmatpush.msra.mxu0 0.0
        %3387 = vmatpush.msra.mxu0 %v2926
        %3388 = vmatpush.msra.mxu0 %v2910
        %3389 = vmatpush.msra.mxu0 %v2894
        %3390 = vmatpush.msra.mxu0 %v2878
        %3391 = vmatmul.f32.gmra.mxu0 %v2958
        %v3392 = vpop.f32.mrf.mxu0
        %v3393 = vadd.f32 %v2939, %v3392
        %3394 = vmatmul.f32.gmra.mxu0 %v2961
        %v3395 = vpop.f32.mrf.mxu0
        %v3396 = vadd.f32 %v2944, %v3395
        %3397 = vmatmul.f32.gmra.mxu0 %v2964
        %v3398 = vpop.f32.mrf.mxu0
        %v3399 = vadd.f32 %v2949, %v3398
        %3400 = vmatmul.f32.gmra.mxu0 %v2967
        %v3401 = vpop.f32.mrf.mxu0
        %v3402 = vadd.f32 %v2954, %v3401
        %3403 = vdwg.mxu0
        %3404 = vmatpush.msra.mxu0 0.0
        %3405 = vmatpush.msra.mxu0 0.0
        %3406 = vmatpush.msra.mxu0 0.0
        %3407 = vmatpush.msra.mxu0 0.0
        %3408 = vmatpush.msra.mxu0 0.0
        %3409 = vmatpush.msra.mxu0 0.0
        %3410 = vmatpush.msra.mxu0 0.0
        %3411 = vmatpush.msra.mxu0 0.0
        %3412 = vmatpush.msra.mxu0 0.0
        %3413 = vmatpush.msra.mxu0 0.0
        %3414 = vmatpush.msra.mxu0 0.0
        %3415 = vmatpush.msra.mxu0 0.0
        %3416 = vmatpush.msra.mxu0 %v2927
        %3417 = vmatpush.msra.mxu0 %v2911
        %3418 = vmatpush.msra.mxu0 %v2895
        %3419 = vmatpush.msra.mxu0 %v2879
        %3420 = vmatmul.f32.gmra.mxu0 %v2958
        %v3421 = vpop.f32.mrf.mxu0
        %v3422 = vadd.f32 %v2939, %v3421
        %3423 = vmatmul.f32.gmra.mxu0 %v2961
        %v3424 = vpop.f32.mrf.mxu0
        %v3425 = vadd.f32 %v2944, %v3424
        %3426 = vmatmul.f32.gmra.mxu0 %v2964
        %v3427 = vpop.f32.mrf.mxu0
        %v3428 = vadd.f32 %v2949, %v3427
        %3429 = vmatmul.f32.gmra.mxu0 %v2967
        %v3430 = vpop.f32.mrf.mxu0
        %v3431 = vadd.f32 %v2954, %v3430
        %3432 = vdwg.mxu0
        %v3433 = vmax.f32 %v2987, 0.0
        %v3434 = vmax.f32 %v3016, 0.0
        %v3435 = vmax.f32 %v3045, 0.0
        %v3436 = vmax.f32 %v3074, 0.0
        %v3437 = vmax.f32 %v3103, 0.0
        %v3438 = vmax.f32 %v3132, 0.0
        %v3439 = vmax.f32 %v3161, 0.0
        %v3440 = vmax.f32 %v3190, 0.0
        %v3441 = vmax.f32 %v3219, 0.0
        %v3442 = vmax.f32 %v3248, 0.0
        %v3443 = vmax.f32 %v3277, 0.0
        %v3444 = vmax.f32 %v3306, 0.0
        %v3445 = vmax.f32 %v3335, 0.0
        %v3446 = vmax.f32 %v3364, 0.0
        %v3447 = vmax.f32 %v3393, 0.0
        %v3448 = vmax.f32 %v3422, 0.0
        %v3449 = vmax.f32 %v2990, 0.0
        %v3450 = vmax.f32 %v3019, 0.0
        %v3451 = vmax.f32 %v3048, 0.0
        %v3452 = vmax.f32 %v3077, 0.0
        %v3453 = vmax.f32 %v3106, 0.0
        %v3454 = vmax.f32 %v3135, 0.0
        %v3455 = vmax.f32 %v3164, 0.0
        %v3456 = vmax.f32 %v3193, 0.0
        %v3457 = vmax.f32 %v3222, 0.0
        %v3458 = vmax.f32 %v3251, 0.0
        %v3459 = vmax.f32 %v3280, 0.0
        %v3460 = vmax.f32 %v3309, 0.0
        %v3461 = vmax.f32 %v3338, 0.0
        %v3462 = vmax.f32 %v3367, 0.0
        %v3463 = vmax.f32 %v3396, 0.0
        %v3464 = vmax.f32 %v3425, 0.0
        %v3465 = vmax.f32 %v2993, 0.0
        %v3466 = vmax.f32 %v3022, 0.0
        %v3467 = vmax.f32 %v3051, 0.0
        %v3468 = vmax.f32 %v3080, 0.0
        %v3469 = vmax.f32 %v3109, 0.0
        %v3470 = vmax.f32 %v3138, 0.0
        %v3471 = vmax.f32 %v3167, 0.0
        %v3472 = vmax.f32 %v3196, 0.0
        %v3473 = vmax.f32 %v3225, 0.0
        %v3474 = vmax.f32 %v3254, 0.0
        %v3475 = vmax.f32 %v3283, 0.0
        %v3476 = vmax.f32 %v3312, 0.0
        %v3477 = vmax.f32 %v3341, 0.0
        %v3478 = vmax.f32 %v3370, 0.0
        %v3479 = vmax.f32 %v3399, 0.0
        %v3480 = vmax.f32 %v3428, 0.0
        %v3481 = vmax.f32 %v2996, 0.0
        %v3482 = vmax.f32 %v3025, 0.0
        %v3483 = vmax.f32 %v3054, 0.0
        %v3484 = vmax.f32 %v3083, 0.0
        %v3485 = vmax.f32 %v3112, 0.0
        %v3486 = vmax.f32 %v3141, 0.0
        %v3487 = vmax.f32 %v3170, 0.0
        %v3488 = vmax.f32 %v3199, 0.0
        %v3489 = vmax.f32 %v3228, 0.0
        %v3490 = vmax.f32 %v3257, 0.0
        %v3491 = vmax.f32 %v3286, 0.0
        %v3492 = vmax.f32 %v3315, 0.0
        %v3493 = vmax.f32 %v3344, 0.0
        %v3494 = vmax.f32 %v3373, 0.0
        %v3495 = vmax.f32 %v3402, 0.0
        %v3496 = vmax.f32 %v3431, 0.0
        %v3497 = vld [vmem:[%s12] sm:$0xff]
        %v3498 = vld [vmem:[%s12 + $0x8] sm:$0xff]
        %v3499 = vld [vmem:[%s13] sm:$0xff]
        %v3500 = vld [vmem:[%s13 + $0x8] sm:$0xff]
        %3502 = vset.pattern.permute.xlu0 0
        %3503 = vperm.xlu0 %3502, %v3499
        %v3504 = vpop.permute.xlu0 %3503
        %3507 = vset.pattern.permute.xlu0 0
        %3508 = vperm.xlu0 %3507, %v3500
        %v3509 = vpop.permute.xlu0 %3508
        %v3512 = vsel %vm2956, %v3497, 0
        %v3515 = vsel %vm2956, %v3498, 0
        %3517 = vmatpush.msra.mxu0 0.0
        %3518 = vmatpush.msra.mxu0 0.0
        %3519 = vmatpush.msra.mxu0 0.0
        %3520 = vmatpush.msra.mxu0 0.0
        %3521 = vmatpush.msra.mxu0 0.0
        %3522 = vmatpush.msra.mxu0 0.0
        %3523 = vmatpush.msra.mxu0 0.0
        %3524 = vmatpush.msra.mxu0 0.0
        %3525 = vmatpush.msra.mxu0 0.0
        %3526 = vmatpush.msra.mxu0 0.0
        %3527 = vmatpush.msra.mxu0 0.0
        %3528 = vmatpush.msra.mxu0 0.0
        %3529 = vmatpush.msra.mxu0 %v3481
        %3530 = vmatpush.msra.mxu0 %v3465
        %3531 = vmatpush.msra.mxu0 %v3449
        %3532 = vmatpush.msra.mxu0 %v3433
        %3533 = vmatmul.f32.gmra.mxu0 %v3512
        %v3534 = vpop.f32.mrf.mxu0
        %v3535 = vadd.f32 %v3504, %v3534
        %3536 = vmatmul.f32.gmra.mxu0 %v3515
        %v3537 = vpop.f32.mrf.mxu0
        %v3538 = vadd.f32 %v3509, %v3537
        %3539 = vdwg.mxu0
        %3540 = vmatpush.msra.mxu0 0.0
        %3541 = vmatpush.msra.mxu0 0.0
        %3542 = vmatpush.msra.mxu0 0.0
        %3543 = vmatpush.msra.mxu0 0.0
        %3544 = vmatpush.msra.mxu0 0.0
        %3545 = vmatpush.msra.mxu0 0.0
        %3546 = vmatpush.msra.mxu0 0.0
        %3547 = vmatpush.msra.mxu0 0.0
        %3548 = vmatpush.msra.mxu0 0.0
        %3549 = vmatpush.msra.mxu0 0.0
        %3550 = vmatpush.msra.mxu0 0.0
        %3551 = vmatpush.msra.mxu0 0.0
        %3552 = vmatpush.msra.mxu0 %v3482
        %3553 = vmatpush.msra.mxu0 %v3466
        %3554 = vmatpush.msra.mxu0 %v3450
        %3555 = vmatpush.msra.mxu0 %v3434
        %3556 = vmatmul.f32.gmra.mxu0 %v3512
        %v3557 = vpop.f32.mrf.mxu0
        %v3558 = vadd.f32 %v3504, %v3557
        %3559 = vmatmul.f32.gmra.mxu0 %v3515
        %v3560 = vpop.f32.mrf.mxu0
        %v3561 = vadd.f32 %v3509, %v3560
        %3562 = vdwg.mxu0
        %3563 = vmatpush.msra.mxu0 0.0
        %3564 = vmatpush.msra.mxu0 0.0
        %3565 = vmatpush.msra.mxu0 0.0
        %3566 = vmatpush.msra.mxu0 0.0
        %3567 = vmatpush.msra.mxu0 0.0
        %3568 = vmatpush.msra.mxu0 0.0
        %3569 = vmatpush.msra.mxu0 0.0
        %3570 = vmatpush.msra.mxu0 0.0
        %3571 = vmatpush.msra.mxu0 0.0
        %3572 = vmatpush.msra.mxu0 0.0
        %3573 = vmatpush.msra.mxu0 0.0
        %3574 = vmatpush.msra.mxu0 0.0
        %3575 = vmatpush.msra.mxu0 %v3483
        %3576 = vmatpush.msra.mxu0 %v3467
        %3577 = vmatpush.msra.mxu0 %v3451
        %3578 = vmatpush.msra.mxu0 %v3435
        %3579 = vmatmul.f32.gmra.mxu0 %v3512
        %v3580 = vpop.f32.mrf.mxu0
        %v3581 = vadd.f32 %v3504, %v3580
        %3582 = vmatmul.f32.gmra.mxu0 %v3515
        %v3583 = vpop.f32.mrf.mxu0
        %v3584 = vadd.f32 %v3509, %v3583
        %3585 = vdwg.mxu0
        %3586 = vmatpush.msra.mxu0 0.0
        %3587 = vmatpush.msra.mxu0 0.0
        %3588 = vmatpush.msra.mxu0 0.0
        %3589 = vmatpush.msra.mxu0 0.0
        %3590 = vmatpush.msra.mxu0 0.0
        %3591 = vmatpush.msra.mxu0 0.0
        %3592 = vmatpush.msra.mxu0 0.0
        %3593 = vmatpush.msra.mxu0 0.0
        %3594 = vmatpush.msra.mxu0 0.0
        %3595 = vmatpush.msra.mxu0 0.0
        %3596 = vmatpush.msra.mxu0 0.0
        %3597 = vmatpush.msra.mxu0 0.0
        %3598 = vmatpush.msra.mxu0 %v3484
        %3599 = vmatpush.msra.mxu0 %v3468
        %3600 = vmatpush.msra.mxu0 %v3452
        %3601 = vmatpush.msra.mxu0 %v3436
        %3602 = vmatmul.f32.gmra.mxu0 %v3512
        %v3603 = vpop.f32.mrf.mxu0
        %v3604 = vadd.f32 %v3504, %v3603
        %3605 = vmatmul.f32.gmra.mxu0 %v3515
        %v3606 = vpop.f32.mrf.mxu0
        %v3607 = vadd.f32 %v3509, %v3606
        %3608 = vdwg.mxu0
        %3609 = vmatpush.msra.mxu0 0.0
        %3610 = vmatpush.msra.mxu0 0.0
        %3611 = vmatpush.msra.mxu0 0.0
        %3612 = vmatpush.msra.mxu0 0.0
        %3613 = vmatpush.msra.mxu0 0.0
        %3614 = vmatpush.msra.mxu0 0.0
        %3615 = vmatpush.msra.mxu0 0.0
        %3616 = vmatpush.msra.mxu0 0.0
        %3617 = vmatpush.msra.mxu0 0.0
        %3618 = vmatpush.msra.mxu0 0.0
        %3619 = vmatpush.msra.mxu0 0.0
        %3620 = vmatpush.msra.mxu0 0.0
        %3621 = vmatpush.msra.mxu0 %v3485
        %3622 = vmatpush.msra.mxu0 %v3469
        %3623 = vmatpush.msra.mxu0 %v3453
        %3624 = vmatpush.msra.mxu0 %v3437
        %3625 = vmatmul.f32.gmra.mxu0 %v3512
        %v3626 = vpop.f32.mrf.mxu0
        %v3627 = vadd.f32 %v3504, %v3626
        %3628 = vmatmul.f32.gmra.mxu0 %v3515
        %v3629 = vpop.f32.mrf.mxu0
        %v3630 = vadd.f32 %v3509, %v3629
        %3631 = vdwg.mxu0
        %3632 = vmatpush.msra.mxu0 0.0
        %3633 = vmatpush.msra.mxu0 0.0
        %3634 = vmatpush.msra.mxu0 0.0
        %3635 = vmatpush.msra.mxu0 0.0
        %3636 = vmatpush.msra.mxu0 0.0
        %3637 = vmatpush.msra.mxu0 0.0
        %3638 = vmatpush.msra.mxu0 0.0
        %3639 = vmatpush.msra.mxu0 0.0
        %3640 = vmatpush.msra.mxu0 0.0
        %3641 = vmatpush.msra.mxu0 0.0
        %3642 = vmatpush.msra.mxu0 0.0
        %3643 = vmatpush.msra.mxu0 0.0
        %3644 = vmatpush.msra.mxu0 %v3486
        %3645 = vmatpush.msra.mxu0 %v3470
        %3646 = vmatpush.msra.mxu0 %v3454
        %3647 = vmatpush.msra.mxu0 %v3438
        %3648 = vmatmul.f32.gmra.mxu0 %v3512
        %v3649 = vpop.f32.mrf.mxu0
        %v3650 = vadd.f32 %v3504, %v3649
        %3651 = vmatmul.f32.gmra.mxu0 %v3515
        %v3652 = vpop.f32.mrf.mxu0
        %v3653 = vadd.f32 %v3509, %v3652
        %3654 = vdwg.mxu0
        %3655 = vmatpush.msra.mxu0 0.0
        %3656 = vmatpush.msra.mxu0 0.0
        %3657 = vmatpush.msra.mxu0 0.0
        %3658 = vmatpush.msra.mxu0 0.0
        %3659 = vmatpush.msra.mxu0 0.0
        %3660 = vmatpush.msra.mxu0 0.0
        %3661 = vmatpush.msra.mxu0 0.0
        %3662 = vmatpush.msra.mxu0 0.0
        %3663 = vmatpush.msra.mxu0 0.0
        %3664 = vmatpush.msra.mxu0 0.0
        %3665 = vmatpush.msra.mxu0 0.0
        %3666 = vmatpush.msra.mxu0 0.0
        %3667 = vmatpush.msra.mxu0 %v3487
        %3668 = vmatpush.msra.mxu0 %v3471
        %3669 = vmatpush.msra.mxu0 %v3455
        %3670 = vmatpush.msra.mxu0 %v3439
        %3671 = vmatmul.f32.gmra.mxu0 %v3512
        %v3672 = vpop.f32.mrf.mxu0
        %v3673 = vadd.f32 %v3504, %v3672
        %3674 = vmatmul.f32.gmra.mxu0 %v3515
        %v3675 = vpop.f32.mrf.mxu0
        %v3676 = vadd.f32 %v3509, %v3675
        %3677 = vdwg.mxu0
        %3678 = vmatpush.msra.mxu0 0.0
        %3679 = vmatpush.msra.mxu0 0.0
        %3680 = vmatpush.msra.mxu0 0.0
        %3681 = vmatpush.msra.mxu0 0.0
        %3682 = vmatpush.msra.mxu0 0.0
        %3683 = vmatpush.msra.mxu0 0.0
        %3684 = vmatpush.msra.mxu0 0.0
        %3685 = vmatpush.msra.mxu0 0.0
        %3686 = vmatpush.msra.mxu0 0.0
        %3687 = vmatpush.msra.mxu0 0.0
        %3688 = vmatpush.msra.mxu0 0.0
        %3689 = vmatpush.msra.mxu0 0.0
        %3690 = vmatpush.msra.mxu0 %v3488
        %3691 = vmatpush.msra.mxu0 %v3472
        %3692 = vmatpush.msra.mxu0 %v3456
        %3693 = vmatpush.msra.mxu0 %v3440
        %3694 = vmatmul.f32.gmra.mxu0 %v3512
        %v3695 = vpop.f32.mrf.mxu0
        %v3696 = vadd.f32 %v3504, %v3695
        %3697 = vmatmul.f32.gmra.mxu0 %v3515
        %v3698 = vpop.f32.mrf.mxu0
        %v3699 = vadd.f32 %v3509, %v3698
        %3700 = vdwg.mxu0
        %3701 = vmatpush.msra.mxu0 0.0
        %3702 = vmatpush.msra.mxu0 0.0
        %3703 = vmatpush.msra.mxu0 0.0
        %3704 = vmatpush.msra.mxu0 0.0
        %3705 = vmatpush.msra.mxu0 0.0
        %3706 = vmatpush.msra.mxu0 0.0
        %3707 = vmatpush.msra.mxu0 0.0
        %3708 = vmatpush.msra.mxu0 0.0
        %3709 = vmatpush.msra.mxu0 0.0
        %3710 = vmatpush.msra.mxu0 0.0
        %3711 = vmatpush.msra.mxu0 0.0
        %3712 = vmatpush.msra.mxu0 0.0
        %3713 = vmatpush.msra.mxu0 %v3489
        %3714 = vmatpush.msra.mxu0 %v3473
        %3715 = vmatpush.msra.mxu0 %v3457
        %3716 = vmatpush.msra.mxu0 %v3441
        %3717 = vmatmul.f32.gmra.mxu0 %v3512
        %v3718 = vpop.f32.mrf.mxu0
        %v3719 = vadd.f32 %v3504, %v3718
        %3720 = vmatmul.f32.gmra.mxu0 %v3515
        %v3721 = vpop.f32.mrf.mxu0
        %v3722 = vadd.f32 %v3509, %v3721
        %3723 = vdwg.mxu0
        %3724 = vmatpush.msra.mxu0 0.0
        %3725 = vmatpush.msra.mxu0 0.0
        %3726 = vmatpush.msra.mxu0 0.0
        %3727 = vmatpush.msra.mxu0 0.0
        %3728 = vmatpush.msra.mxu0 0.0
        %3729 = vmatpush.msra.mxu0 0.0
        %3730 = vmatpush.msra.mxu0 0.0
        %3731 = vmatpush.msra.mxu0 0.0
        %3732 = vmatpush.msra.mxu0 0.0
        %3733 = vmatpush.msra.mxu0 0.0
        %3734 = vmatpush.msra.mxu0 0.0
        %3735 = vmatpush.msra.mxu0 0.0
        %3736 = vmatpush.msra.mxu0 %v3490
        %3737 = vmatpush.msra.mxu0 %v3474
        %3738 = vmatpush.msra.mxu0 %v3458
        %3739 = vmatpush.msra.mxu0 %v3442
        %3740 = vmatmul.f32.gmra.mxu0 %v3512
        %v3741 = vpop.f32.mrf.mxu0
        %v3742 = vadd.f32 %v3504, %v3741
        %3743 = vmatmul.f32.gmra.mxu0 %v3515
        %v3744 = vpop.f32.mrf.mxu0
        %v3745 = vadd.f32 %v3509, %v3744
        %3746 = vdwg.mxu0
        %3747 = vmatpush.msra.mxu0 0.0
        %3748 = vmatpush.msra.mxu0 0.0
        %3749 = vmatpush.msra.mxu0 0.0
        %3750 = vmatpush.msra.mxu0 0.0
        %3751 = vmatpush.msra.mxu0 0.0
        %3752 = vmatpush.msra.mxu0 0.0
        %3753 = vmatpush.msra.mxu0 0.0
        %3754 = vmatpush.msra.mxu0 0.0
        %3755 = vmatpush.msra.mxu0 0.0
        %3756 = vmatpush.msra.mxu0 0.0
        %3757 = vmatpush.msra.mxu0 0.0
        %3758 = vmatpush.msra.mxu0 0.0
        %3759 = vmatpush.msra.mxu0 %v3491
        %3760 = vmatpush.msra.mxu0 %v3475
        %3761 = vmatpush.msra.mxu0 %v3459
        %3762 = vmatpush.msra.mxu0 %v3443
        %3763 = vmatmul.f32.gmra.mxu0 %v3512
        %v3764 = vpop.f32.mrf.mxu0
        %v3765 = vadd.f32 %v3504, %v3764
        %3766 = vmatmul.f32.gmra.mxu0 %v3515
        %v3767 = vpop.f32.mrf.mxu0
        %v3768 = vadd.f32 %v3509, %v3767
        %3769 = vdwg.mxu0
        %3770 = vmatpush.msra.mxu0 0.0
        %3771 = vmatpush.msra.mxu0 0.0
        %3772 = vmatpush.msra.mxu0 0.0
        %3773 = vmatpush.msra.mxu0 0.0
        %3774 = vmatpush.msra.mxu0 0.0
        %3775 = vmatpush.msra.mxu0 0.0
        %3776 = vmatpush.msra.mxu0 0.0
        %3777 = vmatpush.msra.mxu0 0.0
        %3778 = vmatpush.msra.mxu0 0.0
        %3779 = vmatpush.msra.mxu0 0.0
        %3780 = vmatpush.msra.mxu0 0.0
        %3781 = vmatpush.msra.mxu0 0.0
        %3782 = vmatpush.msra.mxu0 %v3492
        %3783 = vmatpush.msra.mxu0 %v3476
        %3784 = vmatpush.msra.mxu0 %v3460
        %3785 = vmatpush.msra.mxu0 %v3444
        %3786 = vmatmul.f32.gmra.mxu0 %v3512
        %v3787 = vpop.f32.mrf.mxu0
        %v3788 = vadd.f32 %v3504, %v3787
        %3789 = vmatmul.f32.gmra.mxu0 %v3515
        %v3790 = vpop.f32.mrf.mxu0
        %v3791 = vadd.f32 %v3509, %v3790
        %3792 = vdwg.mxu0
        %3793 = vmatpush.msra.mxu0 0.0
        %3794 = vmatpush.msra.mxu0 0.0
        %3795 = vmatpush.msra.mxu0 0.0
        %3796 = vmatpush.msra.mxu0 0.0
        %3797 = vmatpush.msra.mxu0 0.0
        %3798 = vmatpush.msra.mxu0 0.0
        %3799 = vmatpush.msra.mxu0 0.0
        %3800 = vmatpush.msra.mxu0 0.0
        %3801 = vmatpush.msra.mxu0 0.0
        %3802 = vmatpush.msra.mxu0 0.0
        %3803 = vmatpush.msra.mxu0 0.0
        %3804 = vmatpush.msra.mxu0 0.0
        %3805 = vmatpush.msra.mxu0 %v3493
        %3806 = vmatpush.msra.mxu0 %v3477
        %3807 = vmatpush.msra.mxu0 %v3461
        %3808 = vmatpush.msra.mxu0 %v3445
        %3809 = vmatmul.f32.gmra.mxu0 %v3512
        %v3810 = vpop.f32.mrf.mxu0
        %v3811 = vadd.f32 %v3504, %v3810
        %3812 = vmatmul.f32.gmra.mxu0 %v3515
        %v3813 = vpop.f32.mrf.mxu0
        %v3814 = vadd.f32 %v3509, %v3813
        %3815 = vdwg.mxu0
        %3816 = vmatpush.msra.mxu0 0.0
        %3817 = vmatpush.msra.mxu0 0.0
        %3818 = vmatpush.msra.mxu0 0.0
        %3819 = vmatpush.msra.mxu0 0.0
        %3820 = vmatpush.msra.mxu0 0.0
        %3821 = vmatpush.msra.mxu0 0.0
        %3822 = vmatpush.msra.mxu0 0.0
        %3823 = vmatpush.msra.mxu0 0.0
        %3824 = vmatpush.msra.mxu0 0.0
        %3825 = vmatpush.msra.mxu0 0.0
        %3826 = vmatpush.msra.mxu0 0.0
        %3827 = vmatpush.msra.mxu0 0.0
        %3828 = vmatpush.msra.mxu0 %v3494
        %3829 = vmatpush.msra.mxu0 %v3478
        %3830 = vmatpush.msra.mxu0 %v3462
        %3831 = vmatpush.msra.mxu0 %v3446
        %3832 = vmatmul.f32.gmra.mxu0 %v3512
        %v3833 = vpop.f32.mrf.mxu0
        %v3834 = vadd.f32 %v3504, %v3833
        %3835 = vmatmul.f32.gmra.mxu0 %v3515
        %v3836 = vpop.f32.mrf.mxu0
        %v3837 = vadd.f32 %v3509, %v3836
        %3838 = vdwg.mxu0
        %3839 = vmatpush.msra.mxu0 0.0
        %3840 = vmatpush.msra.mxu0 0.0
        %3841 = vmatpush.msra.mxu0 0.0
        %3842 = vmatpush.msra.mxu0 0.0
        %3843 = vmatpush.msra.mxu0 0.0
        %3844 = vmatpush.msra.mxu0 0.0
        %3845 = vmatpush.msra.mxu0 0.0
        %3846 = vmatpush.msra.mxu0 0.0
        %3847 = vmatpush.msra.mxu0 0.0
        %3848 = vmatpush.msra.mxu0 0.0
        %3849 = vmatpush.msra.mxu0 0.0
        %3850 = vmatpush.msra.mxu0 0.0
        %3851 = vmatpush.msra.mxu0 %v3495
        %3852 = vmatpush.msra.mxu0 %v3479
        %3853 = vmatpush.msra.mxu0 %v3463
        %3854 = vmatpush.msra.mxu0 %v3447
        %3855 = vmatmul.f32.gmra.mxu0 %v3512
        %v3856 = vpop.f32.mrf.mxu0
        %v3857 = vadd.f32 %v3504, %v3856
        %3858 = vmatmul.f32.gmra.mxu0 %v3515
        %v3859 = vpop.f32.mrf.mxu0
        %v3860 = vadd.f32 %v3509, %v3859
        %3861 = vdwg.mxu0
        %3862 = vmatpush.msra.mxu0 0.0
        %3863 = vmatpush.msra.mxu0 0.0
        %3864 = vmatpush.msra.mxu0 0.0
        %3865 = vmatpush.msra.mxu0 0.0
        %3866 = vmatpush.msra.mxu0 0.0
        %3867 = vmatpush.msra.mxu0 0.0
        %3868 = vmatpush.msra.mxu0 0.0
        %3869 = vmatpush.msra.mxu0 0.0
        %3870 = vmatpush.msra.mxu0 0.0
        %3871 = vmatpush.msra.mxu0 0.0
        %3872 = vmatpush.msra.mxu0 0.0
        %3873 = vmatpush.msra.mxu0 0.0
        %3874 = vmatpush.msra.mxu0 %v3496
        %3875 = vmatpush.msra.mxu0 %v3480
        %3876 = vmatpush.msra.mxu0 %v3464
        %3877 = vmatpush.msra.mxu0 %v3448
        %3878 = vmatmul.f32.gmra.mxu0 %v3512
        %v3879 = vpop.f32.mrf.mxu0
        %v3880 = vadd.f32 %v3504, %v3879
        %3881 = vmatmul.f32.gmra.mxu0 %v3515
        %v3882 = vpop.f32.mrf.mxu0
        %v3883 = vadd.f32 %v3509, %v3882
        %3884 = vdwg.mxu0
        %v3885 = vperm.slane %v1799, 0
        %v3886 = vperm.slane %v1800, 0
        %v3887 = vperm.slane %v1801, 0
        %v3888 = vperm.slane %v1802, 0
        %v3889 = vperm.slane %v1803, 0
        %v3890 = vperm.slane %v1804, 0
        %v3891 = vperm.slane %v1805, 0
        %v3892 = vperm.slane %v1806, 0
        %v3893 = vperm.slane %v1807, 0
        %v3894 = vperm.slane %v1808, 0
        %v3895 = vperm.slane %v1809, 0
        %v3896 = vperm.slane %v1810, 0
        %v3897 = vperm.slane %v1811, 0
        %v3898 = vperm.slane %v1812, 0
        %v3899 = vperm.slane %v1813, 0
        %v3900 = vperm.slane %v1814, 0
        %v3901 = vmul.f32 %v3535, %v3885
        %v3902 = vmul.f32 %v3558, %v3886
        %v3903 = vmul.f32 %v3581, %v3887
        %v3904 = vmul.f32 %v3604, %v3888
        %v3905 = vmul.f32 %v3627, %v3889
        %v3906 = vmul.f32 %v3650, %v3890
        %v3907 = vmul.f32 %v3673, %v3891
        %v3908 = vmul.f32 %v3696, %v3892
        %v3909 = vmul.f32 %v3719, %v3893
        %v3910 = vmul.f32 %v3742, %v3894
        %v3911 = vmul.f32 %v3765, %v3895
        %v3912 = vmul.f32 %v3788, %v3896
        %v3913 = vmul.f32 %v3811, %v3897
        %v3914 = vmul.f32 %v3834, %v3898
        %v3915 = vmul.f32 %v3857, %v3899
        %v3916 = vmul.f32 %v3880, %v3900
        %v3917 = vmul.f32 %v3538, %v3885
        %v3918 = vmul.f32 %v3561, %v3886
        %v3919 = vmul.f32 %v3584, %v3887
        %v3920 = vmul.f32 %v3607, %v3888
        %v3921 = vmul.f32 %v3630, %v3889
        %v3922 = vmul.f32 %v3653, %v3890
        %v3923 = vmul.f32 %v3676, %v3891
        %v3924 = vmul.f32 %v3699, %v3892
        %v3925 = vmul.f32 %v3722, %v3893
        %v3926 = vmul.f32 %v3745, %v3894
        %v3927 = vmul.f32 %v3768, %v3895
        %v3928 = vmul.f32 %v3791, %v3896
        %v3929 = vmul.f32 %v3814, %v3897
        %v3930 = vmul.f32 %v3837, %v3898
        %v3931 = vmul.f32 %v3860, %v3899
        %v3932 = vmul.f32 %v3883, %v3900
        %3933 = vst [vmem:[%s487] sm:$0xff] %v3901
        %3934 = vst [vmem:[%s487 + $0x8] sm:$0xff] %v3902
        %3935 = vst [vmem:[%s487 + $0x10] sm:$0xff] %v3903
        %3936 = vst [vmem:[%s487 + $0x18] sm:$0xff] %v3904
        %3937 = vst [vmem:[%s487 + $0x20] sm:$0xff] %v3905
        %3938 = vst [vmem:[%s487 + $0x28] sm:$0xff] %v3906
        %3939 = vst [vmem:[%s487 + $0x30] sm:$0xff] %v3907
        %3940 = vst [vmem:[%s487 + $0x38] sm:$0xff] %v3908
        %3941 = vst [vmem:[%s487 + $0x40] sm:$0xff] %v3909
        %3942 = vst [vmem:[%s487 + $0x48] sm:$0xff] %v3910
        %3943 = vst [vmem:[%s487 + $0x50] sm:$0xff] %v3911
        %3944 = vst [vmem:[%s487 + $0x58] sm:$0xff] %v3912
        %3945 = vst [vmem:[%s487 + $0x60] sm:$0xff] %v3913
        %3946 = vst [vmem:[%s487 + $0x68] sm:$0xff] %v3914
        %3947 = vst [vmem:[%s487 + $0x70] sm:$0xff] %v3915
        %3948 = vst [vmem:[%s487 + $0x78] sm:$0xff] %v3916
        %3949 = vst [vmem:[%s487 + $0x80] sm:$0xff] %v3917
        %3950 = vst [vmem:[%s487 + $0x88] sm:$0xff] %v3918
        %3951 = vst [vmem:[%s487 + $0x90] sm:$0xff] %v3919
        %3952 = vst [vmem:[%s487 + $0x98] sm:$0xff] %v3920
        %3953 = vst [vmem:[%s487 + $0xa0] sm:$0xff] %v3921
        %3954 = vst [vmem:[%s487 + $0xa8] sm:$0xff] %v3922
        %3955 = vst [vmem:[%s487 + $0xb0] sm:$0xff] %v3923
        %3956 = vst [vmem:[%s487 + $0xb8] sm:$0xff] %v3924
        %3957 = vst [vmem:[%s487 + $0xc0] sm:$0xff] %v3925
        %3958 = vst [vmem:[%s487 + $0xc8] sm:$0xff] %v3926
        %3959 = vst [vmem:[%s487 + $0xd0] sm:$0xff] %v3927
        %3960 = vst [vmem:[%s487 + $0xd8] sm:$0xff] %v3928
        %3961 = vst [vmem:[%s487 + $0xe0] sm:$0xff] %v3929
        %3962 = vst [vmem:[%s487 + $0xe8] sm:$0xff] %v3930
        %3963 = vst [vmem:[%s487 + $0xf0] sm:$0xff] %v3931
        %3964 = vst [vmem:[%s487 + $0xf8] sm:$0xff] %v3932
        %v3981 = vrot.slane %v1800, 7
        %v3982 = vrot.slane %v1801, 6
        %v3983 = vrot.slane %v1802, 5
        %v3984 = vrot.slane %v1803, 4
        %v3985 = vrot.slane %v1804, 3
        %v3986 = vrot.slane %v1805, 2
        %v3987 = vrot.slane %v1806, 1
        %v3988 = vrot.slane %v1808, 7
        %v3989 = vrot.slane %v1809, 6
        %v3990 = vrot.slane %v1810, 5
        %v3991 = vrot.slane %v1811, 4
        %v3992 = vrot.slane %v1812, 3
        %v3993 = vrot.slane %v1813, 2
        %v3994 = vrot.slane %v1814, 1
        %vm3995 = vcmask 1040384
        %v3996 = vsel %vm3995, %v1799, %v3981
        %vm3997 = vcmask 1042434
        %v3998 = vsel %vm3997, %v3982, %v3983
        %vm3999 = vcmask 1041408
        %v4000 = vsel %vm3999, %v3996, %v3998
        %vm4001 = vcmask 1044484
        %v4002 = vsel %vm4001, %v3984, %v3985
        %vm4003 = vcmask 1046534
        %v4004 = vsel %vm4003, %v3986, %v3987
        %vm4005 = vcmask 1045508
        %v4006 = vsel %vm4005, %v4002, %v4004
        %vm4007 = vcmask 1043456
        %v4008 = vsel %vm4007, %v4000, %v4006
        %v4009 = vsel %vm3995, %v1807, %v3988
        %v4010 = vsel %vm3997, %v3989, %v3990
        %v4011 = vsel %vm3999, %v4009, %v4010
        %v4012 = vsel %vm4001, %v3991, %v3992
        %v4013 = vsel %vm4003, %v3993, %v3994
        %v4014 = vsel %vm4005, %v4012, %v4013
        %v4015 = vsel %vm4007, %v4011, %v4014
        %s4018 = scalar_lea.vmem %s487, 256 [#allocation5]
        %4019 = vst [vmem:[%s4018] ss:$8 sm:$0xf] %v4008
        %4020 = vst [vmem:[%s4018] ss:$8 sm:$0xf0] %v4008
        %s4021 = scalar_lea.vmem %s487, 320 [#allocation5]
        %4022 = vst [vmem:[%s4021] ss:$8 sm:$0xf] %v4015
        %4023 = vst [vmem:[%s4021] ss:$8 sm:$0xf0] %v4015
        %v4040 = vrot.slane %v1427, 7
        %v4041 = vrot.slane %v1450, 6
        %v4042 = vrot.slane %v1473, 5
        %v4043 = vrot.slane %v1496, 4
        %v4044 = vrot.slane %v1519, 3
        %v4045 = vrot.slane %v1542, 2
        %v4046 = vrot.slane %v1565, 1
        %v4047 = vrot.slane %v1611, 7
        %v4048 = vrot.slane %v1634, 6
        %v4049 = vrot.slane %v1657, 5
        %v4050 = vrot.slane %v1680, 4
        %v4051 = vrot.slane %v1703, 3
        %v4052 = vrot.slane %v1726, 2
        %v4053 = vrot.slane %v1749, 1
        %v4054 = vsel %vm3995, %v1404, %v4040
        %v4055 = vsel %vm3997, %v4041, %v4042
        %v4056 = vsel %vm3999, %v4054, %v4055
        %v4057 = vsel %vm4001, %v4043, %v4044
        %v4058 = vsel %vm4003, %v4045, %v4046
        %v4059 = vsel %vm4005, %v4057, %v4058
        %v4060 = vsel %vm4007, %v4056, %v4059
        %v4061 = vsel %vm3995, %v1588, %v4047
        %v4062 = vsel %vm3997, %v4048, %v4049
        %v4063 = vsel %vm3999, %v4061, %v4062
        %v4064 = vsel %vm4001, %v4050, %v4051
        %v4065 = vsel %vm4003, %v4052, %v4053
        %v4066 = vsel %vm4005, %v4064, %v4065
        %v4067 = vsel %vm4007, %v4063, %v4066
        %s4070 = scalar_lea.vmem %s487, 257 [#allocation5]
        %4071 = vst [vmem:[%s4070] ss:$8 sm:$0xf] %v4060
        %4072 = vst [vmem:[%s4070] ss:$8 sm:$0xf0] %v4060
        %s4073 = scalar_lea.vmem %s487, 321 [#allocation5]
        %4074 = vst [vmem:[%s4073] ss:$8 sm:$0xf] %v4067
        %4075 = vst [vmem:[%s4073] ss:$8 sm:$0xf0] %v4067
        %s4076 = sand.u32 %s338, 1
        %s4077 = scalar_lea.sflag [#allocation4], %s4076
        %s4078 = sand.u32 %s338, 1
        %s4079 = smul.addr %s4078, 384
        %s4080 = scalar_lea.vmem [#allocation5], %s4079
        // Predicated region
        $region81: #{tpu_custom_call.1} parent=75 // pred_check
          %p4081 = pneg %p348
        $region82: #{tpu_custom_call.1} parent=75 // pred_check_branch
          %4083 = sbr.rel (%p4081) target = $region84
        $region83: #{tpu_custom_call.1} parent=75 // pred_region
          %s4084 = smul.u32 16, %s31
          %4086 = vsyncadd %s4077, 0
          %s4087 = smul.addr %s4084, 8
          %s4088 = scalar_lea.hbm %s14, %s4087
          %s4089 = sshll.u32 %s4080, 4
          %s4090 = int_to_ptr.vmem [resolvable:$true] %s4089
          %s4091 = sshll.u32 %s4088, 4
          %s4092 = int_to_ptr.hbm [resolvable:$true] %s4091
          %4097 = dma.vmem_to_hbm [thread:$0]  %s4090, 6144, %s4092, %s4077, 2048, 4096, 128
        $region84: #{tpu_custom_call.1} parent=75 // pred_fallthru
          _
      $region76: #{tpu_custom_call.1} parent=5 // pred_fallthru
        _
      %p4098 = scmp.le.s32.totalorder 2, %s26
      // Predicated region
      $region85: #{tpu_custom_call.1} parent=5 // pred_check
        %p4099 = pneg %p4098
      $region86: #{tpu_custom_call.1} parent=5 // pred_check_branch
        %4101 = sbr.rel (%p4099) target = $region88
      $region87: #{tpu_custom_call.1} parent=5 // pred_region
        %s4102 = ssub.s32 %s26, 2
        // Predicated region
        $region89: #{tpu_custom_call.1} parent=87 // pred_check
          %p4103 = pneg %p354
        $region90: #{tpu_custom_call.1} parent=87 // pred_check_branch
          %4105 = sbr.rel (%p4103) target = $region92
        $region91: #{tpu_custom_call.1} parent=87 // pred_region
          %s4106 = sand.u32 %s339, 1
          %s4107 = scalar_lea.sflag [#allocation4], %s4106
          %s4108 = sand.u32 %s339, 1
          %s4109 = smul.addr %s4108, 384
          %s4110 = scalar_lea.vmem [#allocation5], %s4109
          %4112 = dma.done %s4107, 6144
        $region92: #{tpu_custom_call.1} parent=87 // pred_fallthru
          _
      $region88: #{tpu_custom_call.1} parent=5 // pred_fallthru
        _
    $region6: #{tpu_custom_call.1} parent=1 // loop_footer
      %s30 = sadd.s32 1, %s26
    $region7: #{tpu_custom_call.1} parent=1 // loop_footer_branch
      %25 = sbr.rel target = $region3
    $region8: #{tpu_custom_call.1} parent=1 // loop_exit
      _
    %4113 = vsyncpa [#allocation3], 1
    %s4114 = scalar_lea.sflag [#allocation3], 1
    %4115 = vsyncpa %s4114, 1
    %4116 = vsyncpa [#allocation4], 1
    %s4117 = scalar_lea.sflag [#allocation4], 1
    %4118 = vsyncpa %s4117, 1

</llo_original>
